<compile_context>
chip_gen: v5e
topology: v5e:2x2
jax: 0.10.0
libtpu: 0.0.40
codegen_flags: <defaults>
</compile_context>

<pallas_src>
import functools

import jax
import jax.numpy as jnp
import numpy as np
from jax.experimental import pallas as pl
from jax.experimental.pallas import tpu as pltpu

# ----------------------------- problem sizes ------------------------------
SEQ = 8          # sequence length of embedded_tree
BATCH = 8        # batch dimension of embedded_tree
EMB = 16         # embedder.embd_size
HIDDEN = 128     # hidden_size (Linear(256, ...) policy nets imply 2*H == 256)
NUM_LAYERS = 2
NUM_MEMS = 2
NUM_ACTIONS = 8  # Mem.get_num_actions() is unknown; pick a small value
MEM_BATCH = 32   # global `batch_size` used by Mem.empty in the module
POLICY_HID = 32  # per-mem policy hidden width (Linear(256,32), Linear(32,32))
POLICY_PAD = 128 # lane-dense padding for the packed policy head / output


def _detect_split_dirs():
    """Separate per-direction (128,128) W_hh dots on v5e-class chips
    (128x128 MXUs); keep the block-diag (256,256) packing on v6e/v7x."""
    try:
        kind = jax.devices()[0].device_kind.lower()
    except Exception:
        return False
    return ("v5" in kind) and ("lite" in kind or "v5e" in kind or "5e" in kind)


# ------------------------- fused forward kernel ----------------------------
def _fused_forward_kernel(split_dirs,
                          x_ref, wih0_ref, whh0_ref, b0_ref,
                          wih1_ref, whh1_ref, b1_ref,
                          pw1_ref, pb1_ref, pw2_ref, pb2_ref, pw3_ref, pb3_ref,
                          c_out_ref, c_hid_ref, pol_ref,
                          pre_ref, out0_ref):
    """Whole forward pass in one invocation (grid=(), everything in VMEM)."""
    T, B, E = x_ref.shape
    H = c_hid_ref.shape[-1]
    H2 = 2 * H
    bf16 = jnp.bfloat16

    def run_layer(x_flat_bf, wih_ref, b_ref, whh_ref, out_ref, hid_off):
        # Hoisted input projection, both directions at once: (T*B, in)@(in,2H)
        pre = (jnp.dot(x_flat_bf, wih_ref[...],
                       preferred_element_type=jnp.float32)
               + b_ref[...]).reshape(T, B, H2)
        # Direction-time packing into VMEM scratch, off the serial chain:
        # pre_ref[t] = [pre_fwd[t] | pre_bwd[T-1-t]]  -> no per-step concat.
        pre_ref[:, :, 0:H] = pre[:, :, 0:H]
        for t in range(T):
            pre_ref[t, :, H:H2] = pre[T - 1 - t, :, H:H2]

        if split_dirs:
            # v5e path: two independent (B,H)@(H,H) dots, separate states.
            h_f = jnp.tanh(pre_ref[0, :, 0:H])        # t = 0 peeled (h == 0)
            h_b = jnp.tanh(pre_ref[0, :, H:H2])
            out_ref[0, :, 0:H] = h_f
            out_ref[T - 1, :, H:H2] = h_b
            for t in range(1, T):
                h_f = jnp.tanh(
                    pre_ref[t, :, 0:H]
                    + jnp.dot(h_f.astype(bf16), whh_ref[0],
                              preferred_element_type=jnp.float32))
                h_b = jnp.tanh(
                    pre_ref[t, :, H:H2]
                    + jnp.dot(h_b.astype(bf16), whh_ref[1],
                              preferred_element_type=jnp.float32))
                out_ref[t, :, 0:H] = h_f
                out_ref[T - 1 - t, :, H:H2] = h_b
            c_hid_ref[hid_off] = h_f
            c_hid_ref[hid_off + 1] = h_b
        else:
            # v6e/v7x path: one packed (B,2H)@(2H,2H) block-diag dot per step.
            h = jnp.tanh(pre_ref[0])                  # t = 0 peeled (h == 0)
            out_ref[0, :, 0:H] = h[:, 0:H]
            out_ref[T - 1, :, H:H2] = h[:, H:H2]
            for t in range(1, T):
                h = jnp.tanh(
                    pre_ref[t]
                    + jnp.dot(h.astype(bf16), whh_ref[...],
                              preferred_element_type=jnp.float32))
                out_ref[t, :, 0:H] = h[:, 0:H]
                out_ref[T - 1 - t, :, H:H2] = h[:, H:H2]
            c_hid_ref[hid_off] = h[:, 0:H]
            c_hid_ref[hid_off + 1] = h[:, H:H2]

    # ---------------- controller: layer 0, then layer 1 ----------------
    x0 = x_ref[...].reshape(T * B, E).astype(bf16)
    run_layer(x0, wih0_ref, b0_ref, whh0_ref, out0_ref, 0)

    x1 = out0_ref[...].reshape(T * B, H2).astype(bf16)
    run_layer(x1, wih1_ref, b1_ref, whh1_ref, c_out_ref, 2)

    # ----- fused policy heads (both mems packed, 128-lane zero-padded) -----
    rows = c_out_ref[...].reshape(T * B, H2).astype(bf16)
    h1 = jnp.maximum(
        jnp.dot(rows, pw1_ref[...], preferred_element_type=jnp.float32)
        + pb1_ref[...], 0.0)
    h2 = jnp.maximum(
        jnp.dot(h1.astype(bf16), pw2_ref[...],
                preferred_element_type=jnp.float32) + pb2_ref[...], 0.0)
    pol = (jnp.dot(h2.astype(bf16), pw3_ref[...],
                   preferred_element_type=jnp.float32) + pb3_ref[...])
    pol_ref[...] = pol.reshape(T, B, pol_ref.shape[-1])


# ---------------------------- weight packing --------------------------------
def _block_diag(a, b):
    za = jnp.zeros((a.shape[0], b.shape[1]), a.dtype)
    zb = jnp.zeros((b.shape[0], a.shape[1]), b.dtype)
    top = jnp.concatenate([a, za], axis=1)
    bot = jnp.concatenate([zb, b], axis=1)
    return jnp.concatenate([top, bot], axis=0)


def _pack_params(params, split_dirs):
    bf16 = jnp.bfloat16

    def pack_rnn_layer(p):
        wih = jnp.concatenate([p["wih_f"], p["wih_b"]], axis=1).astype(bf16)
        if split_dirs:
            whh = jnp.stack([p["whh_f"], p["whh_b"]], axis=0).astype(bf16)
        else:
            whh = _block_diag(p["whh_f"], p["whh_b"]).astype(bf16)
        b = jnp.concatenate([p["b_f"], p["b_b"]], axis=1)   # bias stays f32
        return wih, whh, b

    wih0, whh0, b0 = pack_rnn_layer(params["rnn"][0])
    wih1, whh1, b1 = pack_rnn_layer(params["rnn"][1])

    p0, p1 = params["policy"]
    PH, A, PAD = POLICY_HID, NUM_ACTIONS, POLICY_PAD
    pw1 = (jnp.zeros((2 * HIDDEN, PAD), jnp.float32)
           .at[:, 0:PH].set(p0["w1"])
           .at[:, PH:2 * PH].set(p1["w1"])).astype(bf16)
    pb1 = (jnp.zeros((1, PAD), jnp.float32)
           .at[:, 0:PH].set(p0["b1"]).at[:, PH:2 * PH].set(p1["b1"]))
    pw2 = (jnp.zeros((PAD, PAD), jnp.float32)
           .at[0:PH, 0:PH].set(p0["w2"])
           .at[PH:2 * PH, PH:2 * PH].set(p1["w2"])).astype(bf16)
    pb2 = (jnp.zeros((1, PAD), jnp.float32)
           .at[:, 0:PH].set(p0["b2"]).at[:, PH:2 * PH].set(p1["b2"]))
    pw3 = (jnp.zeros((PAD, PAD), jnp.float32)
           .at[0:PH, 0:A].set(p0["w3"])
           .at[PH:2 * PH, A:2 * A].set(p1["w3"])).astype(bf16)
    pb3 = (jnp.zeros((1, PAD), jnp.float32)
           .at[:, 0:A].set(p0["b3"]).at[:, A:2 * A].set(p1["b3"]))
    return (wih0, whh0, b0, wih1, whh1, b1, pw1, pb1, pw2, pb2, pw3, pb3)


# ------------------------------ forward pass -------------------------------
@functools.partial(jax.jit, static_argnames=("query", "split_dirs"))
def rnn_with_finish_and_mem_forward(params, embedded_tree, query=True,
                                    split_dirs=False):
    """Mirrors RNNWithFinishAndMem.forward.

    Returns (c_out, c_hid, tapes, 0) plus the per-mem policies (extra, since
    the Mem consumer is not available)."""
    assert NUM_LAYERS == 2 and NUM_MEMS == 2  # kernel is specialized to these
    T, B, _ = embedded_tree.shape
    H = HIDDEN

    inputs = (embedded_tree,) + _pack_params(params, split_dirs)

    out_shapes = (
        jax.ShapeDtypeStruct((T, B, 2 * H), jnp.float32),               # c_out
        jax.ShapeDtypeStruct((2 * NUM_LAYERS, B, H), jnp.float32),      # c_hid
        jax.ShapeDtypeStruct((T, B, POLICY_PAD), jnp.float32),  # pols (padded)
    )

    def vmem():
        return pl.BlockSpec(memory_space=pltpu.MemorySpace.VMEM)

    c_out, c_hid, pol = pl.pallas_call(
        functools.partial(_fused_forward_kernel, split_dirs),
        out_shape=out_shapes,
        in_specs=[vmem() for _ in inputs],
        out_specs=tuple(vmem() for _ in out_shapes),
        scratch_shapes=[pltpu.VMEM((T, B, 2 * H), jnp.float32),   # pre_ref
                        pltpu.VMEM((T, B, 2 * H), jnp.float32)],  # out0_ref
    )(*inputs)

    policies = []
    if query:
        # query=False path: c_out.repeat(0,16,0) is empty, so the PyTorch
        # mem-update loop body never executes -> no policies consumed.
        policies = [pol[..., m * NUM_ACTIONS:(m + 1) * NUM_ACTIONS]
                    for m in range(NUM_MEMS)]

    # TODO(synk): Mem semantics unknown; zero placeholders for mem tapes.
    tapes = [jnp.zeros((MEM_BATCH, EMB, 2), jnp.float32)
             for _ in range(NUM_MEMS)]
    return c_out, c_hid, tapes, 0, policies


# ----------------------------- parameter init ------------------------------
def _uniform(key, shape, scale):
    return jax.random.uniform(key, shape, jnp.float32, -scale, scale)


def init_params(key):
    params = {"rnn": [], "policy": []}
    k_rnn = 1.0 / np.sqrt(HIDDEN)
    for layer in range(NUM_LAYERS):
        in_size = EMB if layer == 0 else 2 * HIDDEN
        layer_p = {}
        for d in ("f", "b"):
            key, k1, k2, k3, k4 = jax.random.split(key, 5)
            layer_p["wih_" + d] = _uniform(k1, (in_size, HIDDEN), k_rnn)
            layer_p["whh_" + d] = _uniform(k2, (HIDDEN, HIDDEN), k_rnn)
            # combined bias b_ih + b_hh, kept as (1, H)
            layer_p["b_" + d] = (_uniform(k3, (1, HIDDEN), k_rnn)
                                 + _uniform(k4, (1, HIDDEN), k_rnn))
        params["rnn"].append(layer_p)

    for _ in range(NUM_MEMS):
        key, k1, k2, k3, k4, k5, k6 = jax.random.split(key, 7)
        params["policy"].append({
            "w1": _uniform(k1, (2 * HIDDEN, POLICY_HID),
                           1.0 / np.sqrt(2 * HIDDEN)),
            "b1": _uniform(k2, (1, POLICY_HID), 1.0 / np.sqrt(2 * HIDDEN)),
            "w2": _uniform(k3, (POLICY_HID, POLICY_HID),
                           1.0 / np.sqrt(POLICY_HID)),
            "b2": _uniform(k4, (1, POLICY_HID), 1.0 / np.sqrt(POLICY_HID)),
            "w3": _uniform(k5, (POLICY_HID, NUM_ACTIONS),
                           1.0 / np.sqrt(POLICY_HID)),
            "b3": _uniform(k6, (1, NUM_ACTIONS), 1.0 / np.sqrt(POLICY_HID)),
        })
    return params


# ------------------------------ JAX reference ------------------------------
# Mirrors the kernel's mixed precision (bf16 matmul operands, f32 accumulate).
def _rnn_dir_ref(x, wih, whh, bias):
    T, B, E = x.shape
    H = whh.shape[0]
    wih_bf = wih.astype(jnp.bfloat16)
    whh_bf = whh.astype(jnp.bfloat16)
    pre = (jnp.dot(x.reshape(T * B, E).astype(jnp.bfloat16), wih_bf,
                   preferred_element_type=jnp.float32).reshape(T, B, H)
           + bias)
    h = jnp.tanh(pre[0])
    outs = [h]
    for t in range(1, T):
        h = jnp.tanh(pre[t] + jnp.dot(h.astype(jnp.bfloat16), whh_bf,
                                      preferred_element_type=jnp.float32))
        outs.append(h)
    return jnp.stack(outs)


def forward_ref(params, embedded_tree):
    layer_in = embedded_tree
    h_n = []
    for layer in range(NUM_LAYERS):
        p = params["rnn"][layer]
        out_f = _rnn_dir_ref(layer_in, p["wih_f"], p["whh_f"], p["b_f"])
        out_b = _rnn_dir_ref(layer_in[::-1], p["wih_b"], p["whh_b"],
                             p["b_b"])[::-1]
        h_n.append(out_f[-1])
        h_n.append(out_b[0])
        layer_in = jnp.concatenate([out_f, out_b], axis=-1)
    c_out = layer_in
    c_hid = jnp.stack(h_n, axis=0)
    T, B, F = c_out.shape
    rows = c_out.reshape(T * B, F)
    policies = []
    for m in range(NUM_MEMS):
        pp = params["policy"][m]
        h1 = jnp.maximum(
            jnp.dot(rows.astype(jnp.bfloat16), pp["w1"].astype(jnp.bfloat16),
                    preferred_element_type=jnp.float32) + pp["b1"], 0.0)
        h2 = jnp.maximum(
            jnp.dot(h1.astype(jnp.bfloat16), pp["w2"].astype(jnp.bfloat16),
                    preferred_element_type=jnp.float32) + pp["b2"], 0.0)
        pol = (jnp.dot(h2.astype(jnp.bfloat16), pp["w3"].astype(jnp.bfloat16),
                       preferred_element_type=jnp.float32) + pp["b3"])
        policies.append(pol.reshape(T, B, NUM_ACTIONS))
    return c_out, c_hid, policies


# ---------------------------------- main -----------------------------------
if __name__ == "__main__":
    key = jax.random.PRNGKey(0)
    key, pkey, xkey = jax.random.split(key, 3)
    params = init_params(pkey)
    embedded_tree = jax.random.normal(xkey, (SEQ, BATCH, EMB), jnp.float32)

    split_dirs = _detect_split_dirs()
    c_out, c_hid, tapes, flag, policies = jax.block_until_ready(
        rnn_with_finish_and_mem_forward(params, embedded_tree, query=True,
                                        split_dirs=split_dirs))

    # sanity-check against the pure-JAX reference (bf16-mirrored, so the
    # tolerances account only for packing/accumulation-order differences).
    c_out_r, c_hid_r, policies_r = forward_ref(params, embedded_tree)
    assert c_out.shape == (SEQ, BATCH, 2 * HIDDEN)
    assert c_hid.shape == (2 * NUM_LAYERS, BATCH, HIDDEN)
    np.testing.assert_allclose(np.asarray(c_out), np.asarray(c_out_r),
                               rtol=2e-2, atol=2e-2)
    np.testing.assert_allclose(np.asarray(c_hid), np.asarray(c_hid_r),
                               rtol=2e-2, atol=2e-2)
    for p, pr in zip(policies, policies_r):
        np.testing.assert_allclose(np.asarray(p), np.asarray(pr),
                                   rtol=2e-2, atol=2e-2)

    print("KERNEL_OK")
</pallas_src>

<mosaic_0001>
module attributes {stable_mosaic.version = 11 : i64} {
  func.func @_fused_forward_kernel(%arg0: memref<8x8x16xf32, #tpu.memory_space<vmem>>, %arg1: memref<16x256xbf16, #tpu.memory_space<vmem>>, %arg2: memref<256x256xbf16, #tpu.memory_space<vmem>>, %arg3: memref<1x256xf32, #tpu.memory_space<vmem>>, %arg4: memref<256x256xbf16, #tpu.memory_space<vmem>>, %arg5: memref<256x256xbf16, #tpu.memory_space<vmem>>, %arg6: memref<1x256xf32, #tpu.memory_space<vmem>>, %arg7: memref<256x128xbf16, #tpu.memory_space<vmem>>, %arg8: memref<1x128xf32, #tpu.memory_space<vmem>>, %arg9: memref<128x128xbf16, #tpu.memory_space<vmem>>, %arg10: memref<1x128xf32, #tpu.memory_space<vmem>>, %arg11: memref<128x128xbf16, #tpu.memory_space<vmem>>, %arg12: memref<1x128xf32, #tpu.memory_space<vmem>>, %arg13: memref<8x8x256xf32, #tpu.memory_space<vmem>>, %arg14: memref<4x8x128xf32, #tpu.memory_space<vmem>>, %arg15: memref<8x8x128xf32, #tpu.memory_space<vmem>>, %arg16: memref<8x8x256xf32, #tpu.memory_space<vmem>>, %arg17: memref<8x8x256xf32, #tpu.memory_space<vmem>>) attributes {dimension_semantics = [], scalar_prefetch = 0 : i64, scratch_operands = 2 : i64, tpu.core_type = #tpu.core_type<tc>} {
    %c0 = arith.constant 0 : index
    %c0_0 = arith.constant 0 : index
    %c0_1 = arith.constant 0 : index
    %0 = vector.load %arg0[%c0, %c0_0, %c0_1] : memref<8x8x16xf32, #tpu.memory_space<vmem>>, vector<8x8x16xf32>
    %1 = vector.shape_cast %0 : vector<8x8x16xf32> to vector<64x16xf32>
    %2 = arith.truncf %1 : vector<64x16xf32> to vector<64x16xbf16>
    %c0_2 = arith.constant 0 : index
    %c0_3 = arith.constant 0 : index
    %3 = vector.load %arg1[%c0_2, %c0_3] : memref<16x256xbf16, #tpu.memory_space<vmem>>, vector<16x256xbf16>
    %cst = arith.constant dense<0.000000e+00> : vector<64x256xf32>
    %4 = tpu.matmul %2, %3, %cst {dimension_numbers = #tpu.dot_dimension_numbers<[1], [0], [0], [1], [0, 0, 1, 1], [], []>} : vector<64x16xbf16>, vector<16x256xbf16>, vector<64x256xf32> -> vector<64x256xf32>
    %c0_4 = arith.constant 0 : index
    %c0_5 = arith.constant 0 : index
    %5 = vector.load %arg3[%c0_4, %c0_5] : memref<1x256xf32, #tpu.memory_space<vmem>>, vector<1x256xf32>
    %6 = vector.broadcast %5 : vector<1x256xf32> to vector<64x256xf32>
    %7 = arith.addf %4, %6 : vector<64x256xf32>
    %8 = vector.shape_cast %7 : vector<64x256xf32> to vector<8x8x256xf32>
    %9 = vector.extract_strided_slice %8 {offsets = [0, 0, 0], sizes = [8, 8, 128], strides = [1, 1, 1]} : vector<8x8x256xf32> to vector<8x8x128xf32>
    %c0_6 = arith.constant 0 : index
    %c0_7 = arith.constant 0 : index
    %c0_8 = arith.constant 0 : index
    %10 = vector.load %arg16[%c0_6, %c0_7, %c0_8] : memref<8x8x256xf32, #tpu.memory_space<vmem>>, vector<8x8x128xf32>
    tpu.vector_store %arg16[%c0_6, %c0_7, %c0_8], %9 {strides = array<i32>} : memref<8x8x256xf32, #tpu.memory_space<vmem>>, vector<8x8x128xf32>,
    %11 = vector.extract_strided_slice %8 {offsets = [7, 0, 128], sizes = [1, 8, 128], strides = [1, 1, 1]} : vector<8x8x256xf32> to vector<1x8x128xf32>
    %12 = vector.shape_cast %11 : vector<1x8x128xf32> to vector<8x128xf32>
    %c0_9 = arith.constant 0 : index
    %c0_10 = arith.constant 0 : index
    %c128 = arith.constant 128 : index
    %13 = vector.load %arg16[%c0_9, %c0_10, %c128] : memref<8x8x256xf32, #tpu.memory_space<vmem>>, vector<1x8x128xf32>
    %14 = vector.shape_cast %13 : vector<1x8x128xf32> to vector<8x128xf32>
    %15 = vector.shape_cast %12 : vector<8x128xf32> to vector<1x8x128xf32>
    tpu.vector_store %arg16[%c0_9, %c0_10, %c128], %15 {strides = array<i32>} : memref<8x8x256xf32, #tpu.memory_space<vmem>>, vector<1x8x128xf32>,
    %16 = vector.extract_strided_slice %8 {offsets = [6, 0, 128], sizes = [1, 8, 128], strides = [1, 1, 1]} : vector<8x8x256xf32> to vector<1x8x128xf32>
    %17 = vector.shape_cast %16 : vector<1x8x128xf32> to vector<8x128xf32>
    %c1 = arith.constant 1 : index
    %c0_11 = arith.constant 0 : index
    %c128_12 = arith.constant 128 : index
    %18 = vector.load %arg16[%c1, %c0_11, %c128_12] : memref<8x8x256xf32, #tpu.memory_space<vmem>>, vector<1x8x128xf32>
    %19 = vector.shape_cast %18 : vector<1x8x128xf32> to vector<8x128xf32>
    %20 = vector.shape_cast %17 : vector<8x128xf32> to vector<1x8x128xf32>
    tpu.vector_store %arg16[%c1, %c0_11, %c128_12], %20 {strides = array<i32>} : memref<8x8x256xf32, #tpu.memory_space<vmem>>, vector<1x8x128xf32>,
    %21 = vector.extract_strided_slice %8 {offsets = [5, 0, 128], sizes = [1, 8, 128], strides = [1, 1, 1]} : vector<8x8x256xf32> to vector<1x8x128xf32>
    %22 = vector.shape_cast %21 : vector<1x8x128xf32> to vector<8x128xf32>
    %c2 = arith.constant 2 : index
    %c0_13 = arith.constant 0 : index
    %c128_14 = arith.constant 128 : index
    %23 = vector.load %arg16[%c2, %c0_13, %c128_14] : memref<8x8x256xf32, #tpu.memory_space<vmem>>, vector<1x8x128xf32>
    %24 = vector.shape_cast %23 : vector<1x8x128xf32> to vector<8x128xf32>
    %25 = vector.shape_cast %22 : vector<8x128xf32> to vector<1x8x128xf32>
    tpu.vector_store %arg16[%c2, %c0_13, %c128_14], %25 {strides = array<i32>} : memref<8x8x256xf32, #tpu.memory_space<vmem>>, vector<1x8x128xf32>,
    %26 = vector.extract_strided_slice %8 {offsets = [4, 0, 128], sizes = [1, 8, 128], strides = [1, 1, 1]} : vector<8x8x256xf32> to vector<1x8x128xf32>
    %27 = vector.shape_cast %26 : vector<1x8x128xf32> to vector<8x128xf32>
    %c3 = arith.constant 3 : index
    %c0_15 = arith.constant 0 : index
    %c128_16 = arith.constant 128 : index
    %28 = vector.load %arg16[%c3, %c0_15, %c128_16] : memref<8x8x256xf32, #tpu.memory_space<vmem>>, vector<1x8x128xf32>
    %29 = vector.shape_cast %28 : vector<1x8x128xf32> to vector<8x128xf32>
    %30 = vector.shape_cast %27 : vector<8x128xf32> to vector<1x8x128xf32>
    tpu.vector_store %arg16[%c3, %c0_15, %c128_16], %30 {strides = array<i32>} : memref<8x8x256xf32, #tpu.memory_space<vmem>>, vector<1x8x128xf32>,
    %31 = vector.extract_strided_slice %8 {offsets = [3, 0, 128], sizes = [1, 8, 128], strides = [1, 1, 1]} : vector<8x8x256xf32> to vector<1x8x128xf32>
    %32 = vector.shape_cast %31 : vector<1x8x128xf32> to vector<8x128xf32>
    %c4 = arith.constant 4 : index
    %c0_17 = arith.constant 0 : index
    %c128_18 = arith.constant 128 : index
    %33 = vector.load %arg16[%c4, %c0_17, %c128_18] : memref<8x8x256xf32, #tpu.memory_space<vmem>>, vector<1x8x128xf32>
    %34 = vector.shape_cast %33 : vector<1x8x128xf32> to vector<8x128xf32>
    %35 = vector.shape_cast %32 : vector<8x128xf32> to vector<1x8x128xf32>
    tpu.vector_store %arg16[%c4, %c0_17, %c128_18], %35 {strides = array<i32>} : memref<8x8x256xf32, #tpu.memory_space<vmem>>, vector<1x8x128xf32>,
    %36 = vector.extract_strided_slice %8 {offsets = [2, 0, 128], sizes = [1, 8, 128], strides = [1, 1, 1]} : vector<8x8x256xf32> to vector<1x8x128xf32>
    %37 = vector.shape_cast %36 : vector<1x8x128xf32> to vector<8x128xf32>
    %c5 = arith.constant 5 : index
    %c0_19 = arith.constant 0 : index
    %c128_20 = arith.constant 128 : index
    %38 = vector.load %arg16[%c5, %c0_19, %c128_20] : memref<8x8x256xf32, #tpu.memory_space<vmem>>, vector<1x8x128xf32>
    %39 = vector.shape_cast %38 : vector<1x8x128xf32> to vector<8x128xf32>
    %40 = vector.shape_cast %37 : vector<8x128xf32> to vector<1x8x128xf32>
    tpu.vector_store %arg16[%c5, %c0_19, %c128_20], %40 {strides = array<i32>} : memref<8x8x256xf32, #tpu.memory_space<vmem>>, vector<1x8x128xf32>,
    %41 = vector.extract_strided_slice %8 {offsets = [1, 0, 128], sizes = [1, 8, 128], strides = [1, 1, 1]} : vector<8x8x256xf32> to vector<1x8x128xf32>
    %42 = vector.shape_cast %41 : vector<1x8x128xf32> to vector<8x128xf32>
    %c6 = arith.constant 6 : index
    %c0_21 = arith.constant 0 : index
    %c128_22 = arith.constant 128 : index
    %43 = vector.load %arg16[%c6, %c0_21, %c128_22] : memref<8x8x256xf32, #tpu.memory_space<vmem>>, vector<1x8x128xf32>
    %44 = vector.shape_cast %43 : vector<1x8x128xf32> to vector<8x128xf32>
    %45 = vector.shape_cast %42 : vector<8x128xf32> to vector<1x8x128xf32>
    tpu.vector_store %arg16[%c6, %c0_21, %c128_22], %45 {strides = array<i32>} : memref<8x8x256xf32, #tpu.memory_space<vmem>>, vector<1x8x128xf32>,
    %46 = vector.extract_strided_slice %8 {offsets = [0, 0, 128], sizes = [1, 8, 128], strides = [1, 1, 1]} : vector<8x8x256xf32> to vector<1x8x128xf32>
    %47 = vector.shape_cast %46 : vector<1x8x128xf32> to vector<8x128xf32>
    %c7 = arith.constant 7 : index
    %c0_23 = arith.constant 0 : index
    %c128_24 = arith.constant 128 : index
    %48 = vector.load %arg16[%c7, %c0_23, %c128_24] : memref<8x8x256xf32, #tpu.memory_space<vmem>>, vector<1x8x128xf32>
    %49 = vector.shape_cast %48 : vector<1x8x128xf32> to vector<8x128xf32>
    %50 = vector.shape_cast %47 : vector<8x128xf32> to vector<1x8x128xf32>
    tpu.vector_store %arg16[%c7, %c0_23, %c128_24], %50 {strides = array<i32>} : memref<8x8x256xf32, #tpu.memory_space<vmem>>, vector<1x8x128xf32>,
    %c0_25 = arith.constant 0 : index
    %c0_26 = arith.constant 0 : index
    %c0_27 = arith.constant 0 : index
    %51 = vector.load %arg16[%c0_25, %c0_26, %c0_27] : memref<8x8x256xf32, #tpu.memory_space<vmem>>, vector<1x8x256xf32>
    %52 = vector.shape_cast %51 : vector<1x8x256xf32> to vector<8x256xf32>
    %53 = math.tanh %52 : vector<8x256xf32>
    %54 = vector.extract_strided_slice %53 {offsets = [0, 0], sizes = [8, 128], strides = [1, 1]} : vector<8x256xf32> to vector<8x128xf32>
    %c0_28 = arith.constant 0 : index
    %c0_29 = arith.constant 0 : index
    %c0_30 = arith.constant 0 : index
    %55 = vector.load %arg17[%c0_28, %c0_29, %c0_30] : memref<8x8x256xf32, #tpu.memory_space<vmem>>, vector<1x8x128xf32>
    %56 = vector.shape_cast %55 : vector<1x8x128xf32> to vector<8x128xf32>
    %57 = vector.shape_cast %54 : vector<8x128xf32> to vector<1x8x128xf32>
    tpu.vector_store %arg17[%c0_28, %c0_29, %c0_30], %57 {strides = array<i32>} : memref<8x8x256xf32, #tpu.memory_space<vmem>>, vector<1x8x128xf32>,
    %58 = vector.extract_strided_slice %53 {offsets = [0, 128], sizes = [8, 128], strides = [1, 1]} : vector<8x256xf32> to vector<8x128xf32>
    %c7_31 = arith.constant 7 : index
    %c0_32 = arith.constant 0 : index
    %c128_33 = arith.constant 128 : index
    %59 = vector.load %arg17[%c7_31, %c0_32, %c128_33] : memref<8x8x256xf32, #tpu.memory_space<vmem>>, vector<1x8x128xf32>
    %60 = vector.shape_cast %59 : vector<1x8x128xf32> to vector<8x128xf32>
    %61 = vector.shape_cast %58 : vector<8x128xf32> to vector<1x8x128xf32>
    tpu.vector_store %arg17[%c7_31, %c0_32, %c128_33], %61 {strides = array<i32>} : memref<8x8x256xf32, #tpu.memory_space<vmem>>, vector<1x8x128xf32>,
    %c1_34 = arith.constant 1 : index
    %c0_35 = arith.constant 0 : index
    %c0_36 = arith.constant 0 : index
    %62 = vector.load %arg16[%c1_34, %c0_35, %c0_36] : memref<8x8x256xf32, #tpu.memory_space<vmem>>, vector<1x8x256xf32>
    %63 = vector.shape_cast %62 : vector<1x8x256xf32> to vector<8x256xf32>
    %64 = arith.truncf %53 : vector<8x256xf32> to vector<8x256xbf16>
    %c0_37 = arith.constant 0 : index
    %c0_38 = arith.constant 0 : index
    %65 = vector.load %arg2[%c0_37, %c0_38] : memref<256x256xbf16, #tpu.memory_space<vmem>>, vector<256x256xbf16>
    %cst_39 = arith.constant dense<0.000000e+00> : vector<8x256xf32>
    %66 = tpu.matmul %64, %65, %cst_39 {dimension_numbers = #tpu.dot_dimension_numbers<[1], [0], [0], [1], [0, 0, 1, 1], [], []>} : vector<8x256xbf16>, vector<256x256xbf16>, vector<8x256xf32> -> vector<8x256xf32>
    %67 = arith.addf %63, %66 : vector<8x256xf32>
    %68 = math.tanh %67 : vector<8x256xf32>
    %69 = vector.extract_strided_slice %68 {offsets = [0, 0], sizes = [8, 128], strides = [1, 1]} : vector<8x256xf32> to vector<8x128xf32>
    %c1_40 = arith.constant 1 : index
    %c0_41 = arith.constant 0 : index
    %c0_42 = arith.constant 0 : index
    %70 = vector.load %arg17[%c1_40, %c0_41, %c0_42] : memref<8x8x256xf32, #tpu.memory_space<vmem>>, vector<1x8x128xf32>
    %71 = vector.shape_cast %70 : vector<1x8x128xf32> to vector<8x128xf32>
    %72 = vector.shape_cast %69 : vector<8x128xf32> to vector<1x8x128xf32>
    tpu.vector_store %arg17[%c1_40, %c0_41, %c0_42], %72 {strides = array<i32>} : memref<8x8x256xf32, #tpu.memory_space<vmem>>, vector<1x8x128xf32>,
    %73 = vector.extract_strided_slice %68 {offsets = [0, 128], sizes = [8, 128], strides = [1, 1]} : vector<8x256xf32> to vector<8x128xf32>
    %c6_43 = arith.constant 6 : index
    %c0_44 = arith.constant 0 : index
    %c128_45 = arith.constant 128 : index
    %74 = vector.load %arg17[%c6_43, %c0_44, %c128_45] : memref<8x8x256xf32, #tpu.memory_space<vmem>>, vector<1x8x128xf32>
    %75 = vector.shape_cast %74 : vector<1x8x128xf32> to vector<8x128xf32>
    %76 = vector.shape_cast %73 : vector<8x128xf32> to vector<1x8x128xf32>
    tpu.vector_store %arg17[%c6_43, %c0_44, %c128_45], %76 {strides = array<i32>} : memref<8x8x256xf32, #tpu.memory_space<vmem>>, vector<1x8x128xf32>,
    %c2_46 = arith.constant 2 : index
    %c0_47 = arith.constant 0 : index
    %c0_48 = arith.constant 0 : index
    %77 = vector.load %arg16[%c2_46, %c0_47, %c0_48] : memref<8x8x256xf32, #tpu.memory_space<vmem>>, vector<1x8x256xf32>
    %78 = vector.shape_cast %77 : vector<1x8x256xf32> to vector<8x256xf32>
    %79 = arith.truncf %68 : vector<8x256xf32> to vector<8x256xbf16>
    %c0_49 = arith.constant 0 : index
    %c0_50 = arith.constant 0 : index
    %80 = vector.load %arg2[%c0_49, %c0_50] : memref<256x256xbf16, #tpu.memory_space<vmem>>, vector<256x256xbf16>
    %cst_51 = arith.constant dense<0.000000e+00> : vector<8x256xf32>
    %81 = tpu.matmul %79, %80, %cst_51 {dimension_numbers = #tpu.dot_dimension_numbers<[1], [0], [0], [1], [0, 0, 1, 1], [], []>} : vector<8x256xbf16>, vector<256x256xbf16>, vector<8x256xf32> -> vector<8x256xf32>
    %82 = arith.addf %78, %81 : vector<8x256xf32>
    %83 = math.tanh %82 : vector<8x256xf32>
    %84 = vector.extract_strided_slice %83 {offsets = [0, 0], sizes = [8, 128], strides = [1, 1]} : vector<8x256xf32> to vector<8x128xf32>
    %c2_52 = arith.constant 2 : index
    %c0_53 = arith.constant 0 : index
    %c0_54 = arith.constant 0 : index
    %85 = vector.load %arg17[%c2_52, %c0_53, %c0_54] : memref<8x8x256xf32, #tpu.memory_space<vmem>>, vector<1x8x128xf32>
    %86 = vector.shape_cast %85 : vector<1x8x128xf32> to vector<8x128xf32>
    %87 = vector.shape_cast %84 : vector<8x128xf32> to vector<1x8x128xf32>
    tpu.vector_store %arg17[%c2_52, %c0_53, %c0_54], %87 {strides = array<i32>} : memref<8x8x256xf32, #tpu.memory_space<vmem>>, vector<1x8x128xf32>,
    %88 = vector.extract_strided_slice %83 {offsets = [0, 128], sizes = [8, 128], strides = [1, 1]} : vector<8x256xf32> to vector<8x128xf32>
    %c5_55 = arith.constant 5 : index
    %c0_56 = arith.constant 0 : index
    %c128_57 = arith.constant 128 : index
    %89 = vector.load %arg17[%c5_55, %c0_56, %c128_57] : memref<8x8x256xf32, #tpu.memory_space<vmem>>, vector<1x8x128xf32>
    %90 = vector.shape_cast %89 : vector<1x8x128xf32> to vector<8x128xf32>
    %91 = vector.shape_cast %88 : vector<8x128xf32> to vector<1x8x128xf32>
    tpu.vector_store %arg17[%c5_55, %c0_56, %c128_57], %91 {strides = array<i32>} : memref<8x8x256xf32, #tpu.memory_space<vmem>>, vector<1x8x128xf32>,
    %c3_58 = arith.constant 3 : index
    %c0_59 = arith.constant 0 : index
    %c0_60 = arith.constant 0 : index
    %92 = vector.load %arg16[%c3_58, %c0_59, %c0_60] : memref<8x8x256xf32, #tpu.memory_space<vmem>>, vector<1x8x256xf32>
    %93 = vector.shape_cast %92 : vector<1x8x256xf32> to vector<8x256xf32>
    %94 = arith.truncf %83 : vector<8x256xf32> to vector<8x256xbf16>
    %c0_61 = arith.constant 0 : index
    %c0_62 = arith.constant 0 : index
    %95 = vector.load %arg2[%c0_61, %c0_62] : memref<256x256xbf16, #tpu.memory_space<vmem>>, vector<256x256xbf16>
    %cst_63 = arith.constant dense<0.000000e+00> : vector<8x256xf32>
    %96 = tpu.matmul %94, %95, %cst_63 {dimension_numbers = #tpu.dot_dimension_numbers<[1], [0], [0], [1], [0, 0, 1, 1], [], []>} : vector<8x256xbf16>, vector<256x256xbf16>, vector<8x256xf32> -> vector<8x256xf32>
    %97 = arith.addf %93, %96 : vector<8x256xf32>
    %98 = math.tanh %97 : vector<8x256xf32>
    %99 = vector.extract_strided_slice %98 {offsets = [0, 0], sizes = [8, 128], strides = [1, 1]} : vector<8x256xf32> to vector<8x128xf32>
    %c3_64 = arith.constant 3 : index
    %c0_65 = arith.constant 0 : index
    %c0_66 = arith.constant 0 : index
    %100 = vector.load %arg17[%c3_64, %c0_65, %c0_66] : memref<8x8x256xf32, #tpu.memory_space<vmem>>, vector<1x8x128xf32>
    %101 = vector.shape_cast %100 : vector<1x8x128xf32> to vector<8x128xf32>
    %102 = vector.shape_cast %99 : vector<8x128xf32> to vector<1x8x128xf32>
    tpu.vector_store %arg17[%c3_64, %c0_65, %c0_66], %102 {strides = array<i32>} : memref<8x8x256xf32, #tpu.memory_space<vmem>>, vector<1x8x128xf32>,
    %103 = vector.extract_strided_slice %98 {offsets = [0, 128], sizes = [8, 128], strides = [1, 1]} : vector<8x256xf32> to vector<8x128xf32>
    %c4_67 = arith.constant 4 : index
    %c0_68 = arith.constant 0 : index
    %c128_69 = arith.constant 128 : index
    %104 = vector.load %arg17[%c4_67, %c0_68, %c128_69] : memref<8x8x256xf32, #tpu.memory_space<vmem>>, vector<1x8x128xf32>
    %105 = vector.shape_cast %104 : vector<1x8x128xf32> to vector<8x128xf32>
    %106 = vector.shape_cast %103 : vector<8x128xf32> to vector<1x8x128xf32>
    tpu.vector_store %arg17[%c4_67, %c0_68, %c128_69], %106 {strides = array<i32>} : memref<8x8x256xf32, #tpu.memory_space<vmem>>, vector<1x8x128xf32>,
    %c4_70 = arith.constant 4 : index
    %c0_71 = arith.constant 0 : index
    %c0_72 = arith.constant 0 : index
    %107 = vector.load %arg16[%c4_70, %c0_71, %c0_72] : memref<8x8x256xf32, #tpu.memory_space<vmem>>, vector<1x8x256xf32>
    %108 = vector.shape_cast %107 : vector<1x8x256xf32> to vector<8x256xf32>
    %109 = arith.truncf %98 : vector<8x256xf32> to vector<8x256xbf16>
    %c0_73 = arith.constant 0 : index
    %c0_74 = arith.constant 0 : index
    %110 = vector.load %arg2[%c0_73, %c0_74] : memref<256x256xbf16, #tpu.memory_space<vmem>>, vector<256x256xbf16>
    %cst_75 = arith.constant dense<0.000000e+00> : vector<8x256xf32>
    %111 = tpu.matmul %109, %110, %cst_75 {dimension_numbers = #tpu.dot_dimension_numbers<[1], [0], [0], [1], [0, 0, 1, 1], [], []>} : vector<8x256xbf16>, vector<256x256xbf16>, vector<8x256xf32> -> vector<8x256xf32>
    %112 = arith.addf %108, %111 : vector<8x256xf32>
    %113 = math.tanh %112 : vector<8x256xf32>
    %114 = vector.extract_strided_slice %113 {offsets = [0, 0], sizes = [8, 128], strides = [1, 1]} : vector<8x256xf32> to vector<8x128xf32>
    %c4_76 = arith.constant 4 : index
    %c0_77 = arith.constant 0 : index
    %c0_78 = arith.constant 0 : index
    %115 = vector.load %arg17[%c4_76, %c0_77, %c0_78] : memref<8x8x256xf32, #tpu.memory_space<vmem>>, vector<1x8x128xf32>
    %116 = vector.shape_cast %115 : vector<1x8x128xf32> to vector<8x128xf32>
    %117 = vector.shape_cast %114 : vector<8x128xf32> to vector<1x8x128xf32>
    tpu.vector_store %arg17[%c4_76, %c0_77, %c0_78], %117 {strides = array<i32>} : memref<8x8x256xf32, #tpu.memory_space<vmem>>, vector<1x8x128xf32>,
    %118 = vector.extract_strided_slice %113 {offsets = [0, 128], sizes = [8, 128], strides = [1, 1]} : vector<8x256xf32> to vector<8x128xf32>
    %c3_79 = arith.constant 3 : index
    %c0_80 = arith.constant 0 : index
    %c128_81 = arith.constant 128 : index
    %119 = vector.load %arg17[%c3_79, %c0_80, %c128_81] : memref<8x8x256xf32, #tpu.memory_space<vmem>>, vector<1x8x128xf32>
    %120 = vector.shape_cast %119 : vector<1x8x128xf32> to vector<8x128xf32>
    %121 = vector.shape_cast %118 : vector<8x128xf32> to vector<1x8x128xf32>
    tpu.vector_store %arg17[%c3_79, %c0_80, %c128_81], %121 {strides = array<i32>} : memref<8x8x256xf32, #tpu.memory_space<vmem>>, vector<1x8x128xf32>,
    %c5_82 = arith.constant 5 : index
    %c0_83 = arith.constant 0 : index
    %c0_84 = arith.constant 0 : index
    %122 = vector.load %arg16[%c5_82, %c0_83, %c0_84] : memref<8x8x256xf32, #tpu.memory_space<vmem>>, vector<1x8x256xf32>
    %123 = vector.shape_cast %122 : vector<1x8x256xf32> to vector<8x256xf32>
    %124 = arith.truncf %113 : vector<8x256xf32> to vector<8x256xbf16>
    %c0_85 = arith.constant 0 : index
    %c0_86 = arith.constant 0 : index
    %125 = vector.load %arg2[%c0_85, %c0_86] : memref<256x256xbf16, #tpu.memory_space<vmem>>, vector<256x256xbf16>
    %cst_87 = arith.constant dense<0.000000e+00> : vector<8x256xf32>
    %126 = tpu.matmul %124, %125, %cst_87 {dimension_numbers = #tpu.dot_dimension_numbers<[1], [0], [0], [1], [0, 0, 1, 1], [], []>} : vector<8x256xbf16>, vector<256x256xbf16>, vector<8x256xf32> -> vector<8x256xf32>
    %127 = arith.addf %123, %126 : vector<8x256xf32>
    %128 = math.tanh %127 : vector<8x256xf32>
    %129 = vector.extract_strided_slice %128 {offsets = [0, 0], sizes = [8, 128], strides = [1, 1]} : vector<8x256xf32> to vector<8x128xf32>
    %c5_88 = arith.constant 5 : index
    %c0_89 = arith.constant 0 : index
    %c0_90 = arith.constant 0 : index
    %130 = vector.load %arg17[%c5_88, %c0_89, %c0_90] : memref<8x8x256xf32, #tpu.memory_space<vmem>>, vector<1x8x128xf32>
    %131 = vector.shape_cast %130 : vector<1x8x128xf32> to vector<8x128xf32>
    %132 = vector.shape_cast %129 : vector<8x128xf32> to vector<1x8x128xf32>
    tpu.vector_store %arg17[%c5_88, %c0_89, %c0_90], %132 {strides = array<i32>} : memref<8x8x256xf32, #tpu.memory_space<vmem>>, vector<1x8x128xf32>,
    %133 = vector.extract_strided_slice %128 {offsets = [0, 128], sizes = [8, 128], strides = [1, 1]} : vector<8x256xf32> to vector<8x128xf32>
    %c2_91 = arith.constant 2 : index
    %c0_92 = arith.constant 0 : index
    %c128_93 = arith.constant 128 : index
    %134 = vector.load %arg17[%c2_91, %c0_92, %c128_93] : memref<8x8x256xf32, #tpu.memory_space<vmem>>, vector<1x8x128xf32>
    %135 = vector.shape_cast %134 : vector<1x8x128xf32> to vector<8x128xf32>
    %136 = vector.shape_cast %133 : vector<8x128xf32> to vector<1x8x128xf32>
    tpu.vector_store %arg17[%c2_91, %c0_92, %c128_93], %136 {strides = array<i32>} : memref<8x8x256xf32, #tpu.memory_space<vmem>>, vector<1x8x128xf32>,
    %c6_94 = arith.constant 6 : index
    %c0_95 = arith.constant 0 : index
    %c0_96 = arith.constant 0 : index
    %137 = vector.load %arg16[%c6_94, %c0_95, %c0_96] : memref<8x8x256xf32, #tpu.memory_space<vmem>>, vector<1x8x256xf32>
    %138 = vector.shape_cast %137 : vector<1x8x256xf32> to vector<8x256xf32>
    %139 = arith.truncf %128 : vector<8x256xf32> to vector<8x256xbf16>
    %c0_97 = arith.constant 0 : index
    %c0_98 = arith.constant 0 : index
    %140 = vector.load %arg2[%c0_97, %c0_98] : memref<256x256xbf16, #tpu.memory_space<vmem>>, vector<256x256xbf16>
    %cst_99 = arith.constant dense<0.000000e+00> : vector<8x256xf32>
    %141 = tpu.matmul %139, %140, %cst_99 {dimension_numbers = #tpu.dot_dimension_numbers<[1], [0], [0], [1], [0, 0, 1, 1], [], []>} : vector<8x256xbf16>, vector<256x256xbf16>, vector<8x256xf32> -> vector<8x256xf32>
    %142 = arith.addf %138, %141 : vector<8x256xf32>
    %143 = math.tanh %142 : vector<8x256xf32>
    %144 = vector.extract_strided_slice %143 {offsets = [0, 0], sizes = [8, 128], strides = [1, 1]} : vector<8x256xf32> to vector<8x128xf32>
    %c6_100 = arith.constant 6 : index
    %c0_101 = arith.constant 0 : index
    %c0_102 = arith.constant 0 : index
    %145 = vector.load %arg17[%c6_100, %c0_101, %c0_102] : memref<8x8x256xf32, #tpu.memory_space<vmem>>, vector<1x8x128xf32>
    %146 = vector.shape_cast %145 : vector<1x8x128xf32> to vector<8x128xf32>
    %147 = vector.shape_cast %144 : vector<8x128xf32> to vector<1x8x128xf32>
    tpu.vector_store %arg17[%c6_100, %c0_101, %c0_102], %147 {strides = array<i32>} : memref<8x8x256xf32, #tpu.memory_space<vmem>>, vector<1x8x128xf32>,
    %148 = vector.extract_strided_slice %143 {offsets = [0, 128], sizes = [8, 128], strides = [1, 1]} : vector<8x256xf32> to vector<8x128xf32>
    %c1_103 = arith.constant 1 : index
    %c0_104 = arith.constant 0 : index
    %c128_105 = arith.constant 128 : index
    %149 = vector.load %arg17[%c1_103, %c0_104, %c128_105] : memref<8x8x256xf32, #tpu.memory_space<vmem>>, vector<1x8x128xf32>
    %150 = vector.shape_cast %149 : vector<1x8x128xf32> to vector<8x128xf32>
    %151 = vector.shape_cast %148 : vector<8x128xf32> to vector<1x8x128xf32>
    tpu.vector_store %arg17[%c1_103, %c0_104, %c128_105], %151 {strides = array<i32>} : memref<8x8x256xf32, #tpu.memory_space<vmem>>, vector<1x8x128xf32>,
    %c7_106 = arith.constant 7 : index
    %c0_107 = arith.constant 0 : index
    %c0_108 = arith.constant 0 : index
    %152 = vector.load %arg16[%c7_106, %c0_107, %c0_108] : memref<8x8x256xf32, #tpu.memory_space<vmem>>, vector<1x8x256xf32>
    %153 = vector.shape_cast %152 : vector<1x8x256xf32> to vector<8x256xf32>
    %154 = arith.truncf %143 : vector<8x256xf32> to vector<8x256xbf16>
    %c0_109 = arith.constant 0 : index
    %c0_110 = arith.constant 0 : index
    %155 = vector.load %arg2[%c0_109, %c0_110] : memref<256x256xbf16, #tpu.memory_space<vmem>>, vector<256x256xbf16>
    %cst_111 = arith.constant dense<0.000000e+00> : vector<8x256xf32>
    %156 = tpu.matmul %154, %155, %cst_111 {dimension_numbers = #tpu.dot_dimension_numbers<[1], [0], [0], [1], [0, 0, 1, 1], [], []>} : vector<8x256xbf16>, vector<256x256xbf16>, vector<8x256xf32> -> vector<8x256xf32>
    %157 = arith.addf %153, %156 : vector<8x256xf32>
    %158 = math.tanh %157 : vector<8x256xf32>
    %159 = vector.extract_strided_slice %158 {offsets = [0, 0], sizes = [8, 128], strides = [1, 1]} : vector<8x256xf32> to vector<8x128xf32>
    %c7_112 = arith.constant 7 : index
    %c0_113 = arith.constant 0 : index
    %c0_114 = arith.constant 0 : index
    %160 = vector.load %arg17[%c7_112, %c0_113, %c0_114] : memref<8x8x256xf32, #tpu.memory_space<vmem>>, vector<1x8x128xf32>
    %161 = vector.shape_cast %160 : vector<1x8x128xf32> to vector<8x128xf32>
    %162 = vector.shape_cast %159 : vector<8x128xf32> to vector<1x8x128xf32>
    tpu.vector_store %arg17[%c7_112, %c0_113, %c0_114], %162 {strides = array<i32>} : memref<8x8x256xf32, #tpu.memory_space<vmem>>, vector<1x8x128xf32>,
    %163 = vector.extract_strided_slice %158 {offsets = [0, 128], sizes = [8, 128], strides = [1, 1]} : vector<8x256xf32> to vector<8x128xf32>
    %c0_115 = arith.constant 0 : index
    %c0_116 = arith.constant 0 : index
    %c128_117 = arith.constant 128 : index
    %164 = vector.load %arg17[%c0_115, %c0_116, %c128_117] : memref<8x8x256xf32, #tpu.memory_space<vmem>>, vector<1x8x128xf32>
    %165 = vector.shape_cast %164 : vector<1x8x128xf32> to vector<8x128xf32>
    %166 = vector.shape_cast %163 : vector<8x128xf32> to vector<1x8x128xf32>
    tpu.vector_store %arg17[%c0_115, %c0_116, %c128_117], %166 {strides = array<i32>} : memref<8x8x256xf32, #tpu.memory_space<vmem>>, vector<1x8x128xf32>,
    %167 = vector.extract_strided_slice %158 {offsets = [0, 0], sizes = [8, 128], strides = [1, 1]} : vector<8x256xf32> to vector<8x128xf32>
    %c0_118 = arith.constant 0 : index
    %c0_119 = arith.constant 0 : index
    %c0_120 = arith.constant 0 : index
    %168 = vector.load %arg14[%c0_118, %c0_119, %c0_120] : memref<4x8x128xf32, #tpu.memory_space<vmem>>, vector<1x8x128xf32>
    %169 = vector.shape_cast %168 : vector<1x8x128xf32> to vector<8x128xf32>
    %170 = vector.shape_cast %167 : vector<8x128xf32> to vector<1x8x128xf32>
    tpu.vector_store %arg14[%c0_118, %c0_119, %c0_120], %170 {strides = array<i32>} : memref<4x8x128xf32, #tpu.memory_space<vmem>>, vector<1x8x128xf32>,
    %171 = vector.extract_strided_slice %158 {offsets = [0, 128], sizes = [8, 128], strides = [1, 1]} : vector<8x256xf32> to vector<8x128xf32>
    %c1_121 = arith.constant 1 : index
    %c0_122 = arith.constant 0 : index
    %c0_123 = arith.constant 0 : index
    %172 = vector.load %arg14[%c1_121, %c0_122, %c0_123] : memref<4x8x128xf32, #tpu.memory_space<vmem>>, vector<1x8x128xf32>
    %173 = vector.shape_cast %172 : vector<1x8x128xf32> to vector<8x128xf32>
    %174 = vector.shape_cast %171 : vector<8x128xf32> to vector<1x8x128xf32>
    tpu.vector_store %arg14[%c1_121, %c0_122, %c0_123], %174 {strides = array<i32>} : memref<4x8x128xf32, #tpu.memory_space<vmem>>, vector<1x8x128xf32>,
    %c0_124 = arith.constant 0 : index
    %c0_125 = arith.constant 0 : index
    %c0_126 = arith.constant 0 : index
    %175 = vector.load %arg17[%c0_124, %c0_125, %c0_126] : memref<8x8x256xf32, #tpu.memory_space<vmem>>, vector<8x8x256xf32>
    %176 = vector.shape_cast %175 : vector<8x8x256xf32> to vector<64x256xf32>
    %177 = arith.truncf %176 : vector<64x256xf32> to vector<64x256xbf16>
    %c0_127 = arith.constant 0 : index
    %c0_128 = arith.constant 0 : index
    %178 = vector.load %arg4[%c0_127, %c0_128] : memref<256x256xbf16, #tpu.memory_space<vmem>>, vector<256x256xbf16>
    %cst_129 = arith.constant dense<0.000000e+00> : vector<64x256xf32>
    %179 = tpu.matmul %177, %178, %cst_129 {dimension_numbers = #tpu.dot_dimension_numbers<[1], [0], [0], [1], [0, 0, 1, 1], [], []>} : vector<64x256xbf16>, vector<256x256xbf16>, vector<64x256xf32> -> vector<64x256xf32>
    %c0_130 = arith.constant 0 : index
    %c0_131 = arith.constant 0 : index
    %180 = vector.load %arg6[%c0_130, %c0_131] : memref<1x256xf32, #tpu.memory_space<vmem>>, vector<1x256xf32>
    %181 = vector.broadcast %180 : vector<1x256xf32> to vector<64x256xf32>
    %182 = arith.addf %179, %181 : vector<64x256xf32>
    %183 = vector.shape_cast %182 : vector<64x256xf32> to vector<8x8x256xf32>
    %184 = vector.extract_strided_slice %183 {offsets = [0, 0, 0], sizes = [8, 8, 128], strides = [1, 1, 1]} : vector<8x8x256xf32> to vector<8x8x128xf32>
    %c0_132 = arith.constant 0 : index
    %c0_133 = arith.constant 0 : index
    %c0_134 = arith.constant 0 : index
    %185 = vector.load %arg16[%c0_132, %c0_133, %c0_134] : memref<8x8x256xf32, #tpu.memory_space<vmem>>, vector<8x8x128xf32>
    tpu.vector_store %arg16[%c0_132, %c0_133, %c0_134], %184 {strides = array<i32>} : memref<8x8x256xf32, #tpu.memory_space<vmem>>, vector<8x8x128xf32>,
    %186 = vector.extract_strided_slice %183 {offsets = [7, 0, 128], sizes = [1, 8, 128], strides = [1, 1, 1]} : vector<8x8x256xf32> to vector<1x8x128xf32>
    %187 = vector.shape_cast %186 : vector<1x8x128xf32> to vector<8x128xf32>
    %c0_135 = arith.constant 0 : index
    %c0_136 = arith.constant 0 : index
    %c128_137 = arith.constant 128 : index
    %188 = vector.load %arg16[%c0_135, %c0_136, %c128_137] : memref<8x8x256xf32, #tpu.memory_space<vmem>>, vector<1x8x128xf32>
    %189 = vector.shape_cast %188 : vector<1x8x128xf32> to vector<8x128xf32>
    %190 = vector.shape_cast %187 : vector<8x128xf32> to vector<1x8x128xf32>
    tpu.vector_store %arg16[%c0_135, %c0_136, %c128_137], %190 {strides = array<i32>} : memref<8x8x256xf32, #tpu.memory_space<vmem>>, vector<1x8x128xf32>,
    %191 = vector.extract_strided_slice %183 {offsets = [6, 0, 128], sizes = [1, 8, 128], strides = [1, 1, 1]} : vector<8x8x256xf32> to vector<1x8x128xf32>
    %192 = vector.shape_cast %191 : vector<1x8x128xf32> to vector<8x128xf32>
    %c1_138 = arith.constant 1 : index
    %c0_139 = arith.constant 0 : index
    %c128_140 = arith.constant 128 : index
    %193 = vector.load %arg16[%c1_138, %c0_139, %c128_140] : memref<8x8x256xf32, #tpu.memory_space<vmem>>, vector<1x8x128xf32>
    %194 = vector.shape_cast %193 : vector<1x8x128xf32> to vector<8x128xf32>
    %195 = vector.shape_cast %192 : vector<8x128xf32> to vector<1x8x128xf32>
    tpu.vector_store %arg16[%c1_138, %c0_139, %c128_140], %195 {strides = array<i32>} : memref<8x8x256xf32, #tpu.memory_space<vmem>>, vector<1x8x128xf32>,
    %196 = vector.extract_strided_slice %183 {offsets = [5, 0, 128], sizes = [1, 8, 128], strides = [1, 1, 1]} : vector<8x8x256xf32> to vector<1x8x128xf32>
    %197 = vector.shape_cast %196 : vector<1x8x128xf32> to vector<8x128xf32>
    %c2_141 = arith.constant 2 : index
    %c0_142 = arith.constant 0 : index
    %c128_143 = arith.constant 128 : index
    %198 = vector.load %arg16[%c2_141, %c0_142, %c128_143] : memref<8x8x256xf32, #tpu.memory_space<vmem>>, vector<1x8x128xf32>
    %199 = vector.shape_cast %198 : vector<1x8x128xf32> to vector<8x128xf32>
    %200 = vector.shape_cast %197 : vector<8x128xf32> to vector<1x8x128xf32>
    tpu.vector_store %arg16[%c2_141, %c0_142, %c128_143], %200 {strides = array<i32>} : memref<8x8x256xf32, #tpu.memory_space<vmem>>, vector<1x8x128xf32>,
    %201 = vector.extract_strided_slice %183 {offsets = [4, 0, 128], sizes = [1, 8, 128], strides = [1, 1, 1]} : vector<8x8x256xf32> to vector<1x8x128xf32>
    %202 = vector.shape_cast %201 : vector<1x8x128xf32> to vector<8x128xf32>
    %c3_144 = arith.constant 3 : index
    %c0_145 = arith.constant 0 : index
    %c128_146 = arith.constant 128 : index
    %203 = vector.load %arg16[%c3_144, %c0_145, %c128_146] : memref<8x8x256xf32, #tpu.memory_space<vmem>>, vector<1x8x128xf32>
    %204 = vector.shape_cast %203 : vector<1x8x128xf32> to vector<8x128xf32>
    %205 = vector.shape_cast %202 : vector<8x128xf32> to vector<1x8x128xf32>
    tpu.vector_store %arg16[%c3_144, %c0_145, %c128_146], %205 {strides = array<i32>} : memref<8x8x256xf32, #tpu.memory_space<vmem>>, vector<1x8x128xf32>,
    %206 = vector.extract_strided_slice %183 {offsets = [3, 0, 128], sizes = [1, 8, 128], strides = [1, 1, 1]} : vector<8x8x256xf32> to vector<1x8x128xf32>
    %207 = vector.shape_cast %206 : vector<1x8x128xf32> to vector<8x128xf32>
    %c4_147 = arith.constant 4 : index
    %c0_148 = arith.constant 0 : index
    %c128_149 = arith.constant 128 : index
    %208 = vector.load %arg16[%c4_147, %c0_148, %c128_149] : memref<8x8x256xf32, #tpu.memory_space<vmem>>, vector<1x8x128xf32>
    %209 = vector.shape_cast %208 : vector<1x8x128xf32> to vector<8x128xf32>
    %210 = vector.shape_cast %207 : vector<8x128xf32> to vector<1x8x128xf32>
    tpu.vector_store %arg16[%c4_147, %c0_148, %c128_149], %210 {strides = array<i32>} : memref<8x8x256xf32, #tpu.memory_space<vmem>>, vector<1x8x128xf32>,
    %211 = vector.extract_strided_slice %183 {offsets = [2, 0, 128], sizes = [1, 8, 128], strides = [1, 1, 1]} : vector<8x8x256xf32> to vector<1x8x128xf32>
    %212 = vector.shape_cast %211 : vector<1x8x128xf32> to vector<8x128xf32>
    %c5_150 = arith.constant 5 : index
    %c0_151 = arith.constant 0 : index
    %c128_152 = arith.constant 128 : index
    %213 = vector.load %arg16[%c5_150, %c0_151, %c128_152] : memref<8x8x256xf32, #tpu.memory_space<vmem>>, vector<1x8x128xf32>
    %214 = vector.shape_cast %213 : vector<1x8x128xf32> to vector<8x128xf32>
    %215 = vector.shape_cast %212 : vector<8x128xf32> to vector<1x8x128xf32>
    tpu.vector_store %arg16[%c5_150, %c0_151, %c128_152], %215 {strides = array<i32>} : memref<8x8x256xf32, #tpu.memory_space<vmem>>, vector<1x8x128xf32>,
    %216 = vector.extract_strided_slice %183 {offsets = [1, 0, 128], sizes = [1, 8, 128], strides = [1, 1, 1]} : vector<8x8x256xf32> to vector<1x8x128xf32>
    %217 = vector.shape_cast %216 : vector<1x8x128xf32> to vector<8x128xf32>
    %c6_153 = arith.constant 6 : index
    %c0_154 = arith.constant 0 : index
    %c128_155 = arith.constant 128 : index
    %218 = vector.load %arg16[%c6_153, %c0_154, %c128_155] : memref<8x8x256xf32, #tpu.memory_space<vmem>>, vector<1x8x128xf32>
    %219 = vector.shape_cast %218 : vector<1x8x128xf32> to vector<8x128xf32>
    %220 = vector.shape_cast %217 : vector<8x128xf32> to vector<1x8x128xf32>
    tpu.vector_store %arg16[%c6_153, %c0_154, %c128_155], %220 {strides = array<i32>} : memref<8x8x256xf32, #tpu.memory_space<vmem>>, vector<1x8x128xf32>,
    %221 = vector.extract_strided_slice %183 {offsets = [0, 0, 128], sizes = [1, 8, 128], strides = [1, 1, 1]} : vector<8x8x256xf32> to vector<1x8x128xf32>
    %222 = vector.shape_cast %221 : vector<1x8x128xf32> to vector<8x128xf32>
    %c7_156 = arith.constant 7 : index
    %c0_157 = arith.constant 0 : index
    %c128_158 = arith.constant 128 : index
    %223 = vector.load %arg16[%c7_156, %c0_157, %c128_158] : memref<8x8x256xf32, #tpu.memory_space<vmem>>, vector<1x8x128xf32>
    %224 = vector.shape_cast %223 : vector<1x8x128xf32> to vector<8x128xf32>
    %225 = vector.shape_cast %222 : vector<8x128xf32> to vector<1x8x128xf32>
    tpu.vector_store %arg16[%c7_156, %c0_157, %c128_158], %225 {strides = array<i32>} : memref<8x8x256xf32, #tpu.memory_space<vmem>>, vector<1x8x128xf32>,
    %c0_159 = arith.constant 0 : index
    %c0_160 = arith.constant 0 : index
    %c0_161 = arith.constant 0 : index
    %226 = vector.load %arg16[%c0_159, %c0_160, %c0_161] : memref<8x8x256xf32, #tpu.memory_space<vmem>>, vector<1x8x256xf32>
    %227 = vector.shape_cast %226 : vector<1x8x256xf32> to vector<8x256xf32>
    %228 = math.tanh %227 : vector<8x256xf32>
    %229 = vector.extract_strided_slice %228 {offsets = [0, 0], sizes = [8, 128], strides = [1, 1]} : vector<8x256xf32> to vector<8x128xf32>
    %c0_162 = arith.constant 0 : index
    %c0_163 = arith.constant 0 : index
    %c0_164 = arith.constant 0 : index
    %230 = vector.load %arg13[%c0_162, %c0_163, %c0_164] : memref<8x8x256xf32, #tpu.memory_space<vmem>>, vector<1x8x128xf32>
    %231 = vector.shape_cast %230 : vector<1x8x128xf32> to vector<8x128xf32>
    %232 = vector.shape_cast %229 : vector<8x128xf32> to vector<1x8x128xf32>
    tpu.vector_store %arg13[%c0_162, %c0_163, %c0_164], %232 {strides = array<i32>} : memref<8x8x256xf32, #tpu.memory_space<vmem>>, vector<1x8x128xf32>,
    %233 = vector.extract_strided_slice %228 {offsets = [0, 128], sizes = [8, 128], strides = [1, 1]} : vector<8x256xf32> to vector<8x128xf32>
    %c7_165 = arith.constant 7 : index
    %c0_166 = arith.constant 0 : index
    %c128_167 = arith.constant 128 : index
    %234 = vector.load %arg13[%c7_165, %c0_166, %c128_167] : memref<8x8x256xf32, #tpu.memory_space<vmem>>, vector<1x8x128xf32>
    %235 = vector.shape_cast %234 : vector<1x8x128xf32> to vector<8x128xf32>
    %236 = vector.shape_cast %233 : vector<8x128xf32> to vector<1x8x128xf32>
    tpu.vector_store %arg13[%c7_165, %c0_166, %c128_167], %236 {strides = array<i32>} : memref<8x8x256xf32, #tpu.memory_space<vmem>>, vector<1x8x128xf32>,
    %c1_168 = arith.constant 1 : index
    %c0_169 = arith.constant 0 : index
    %c0_170 = arith.constant 0 : index
    %237 = vector.load %arg16[%c1_168, %c0_169, %c0_170] : memref<8x8x256xf32, #tpu.memory_space<vmem>>, vector<1x8x256xf32>
    %238 = vector.shape_cast %237 : vector<1x8x256xf32> to vector<8x256xf32>
    %239 = arith.truncf %228 : vector<8x256xf32> to vector<8x256xbf16>
    %c0_171 = arith.constant 0 : index
    %c0_172 = arith.constant 0 : index
    %240 = vector.load %arg5[%c0_171, %c0_172] : memref<256x256xbf16, #tpu.memory_space<vmem>>, vector<256x256xbf16>
    %cst_173 = arith.constant dense<0.000000e+00> : vector<8x256xf32>
    %241 = tpu.matmul %239, %240, %cst_173 {dimension_numbers = #tpu.dot_dimension_numbers<[1], [0], [0], [1], [0, 0, 1, 1], [], []>} : vector<8x256xbf16>, vector<256x256xbf16>, vector<8x256xf32> -> vector<8x256xf32>
    %242 = arith.addf %238, %241 : vector<8x256xf32>
    %243 = math.tanh %242 : vector<8x256xf32>
    %244 = vector.extract_strided_slice %243 {offsets = [0, 0], sizes = [8, 128], strides = [1, 1]} : vector<8x256xf32> to vector<8x128xf32>
    %c1_174 = arith.constant 1 : index
    %c0_175 = arith.constant 0 : index
    %c0_176 = arith.constant 0 : index
    %245 = vector.load %arg13[%c1_174, %c0_175, %c0_176] : memref<8x8x256xf32, #tpu.memory_space<vmem>>, vector<1x8x128xf32>
    %246 = vector.shape_cast %245 : vector<1x8x128xf32> to vector<8x128xf32>
    %247 = vector.shape_cast %244 : vector<8x128xf32> to vector<1x8x128xf32>
    tpu.vector_store %arg13[%c1_174, %c0_175, %c0_176], %247 {strides = array<i32>} : memref<8x8x256xf32, #tpu.memory_space<vmem>>, vector<1x8x128xf32>,
    %248 = vector.extract_strided_slice %243 {offsets = [0, 128], sizes = [8, 128], strides = [1, 1]} : vector<8x256xf32> to vector<8x128xf32>
    %c6_177 = arith.constant 6 : index
    %c0_178 = arith.constant 0 : index
    %c128_179 = arith.constant 128 : index
    %249 = vector.load %arg13[%c6_177, %c0_178, %c128_179] : memref<8x8x256xf32, #tpu.memory_space<vmem>>, vector<1x8x128xf32>
    %250 = vector.shape_cast %249 : vector<1x8x128xf32> to vector<8x128xf32>
    %251 = vector.shape_cast %248 : vector<8x128xf32> to vector<1x8x128xf32>
    tpu.vector_store %arg13[%c6_177, %c0_178, %c128_179], %251 {strides = array<i32>} : memref<8x8x256xf32, #tpu.memory_space<vmem>>, vector<1x8x128xf32>,
    %c2_180 = arith.constant 2 : index
    %c0_181 = arith.constant 0 : index
    %c0_182 = arith.constant 0 : index
    %252 = vector.load %arg16[%c2_180, %c0_181, %c0_182] : memref<8x8x256xf32, #tpu.memory_space<vmem>>, vector<1x8x256xf32>
    %253 = vector.shape_cast %252 : vector<1x8x256xf32> to vector<8x256xf32>
    %254 = arith.truncf %243 : vector<8x256xf32> to vector<8x256xbf16>
    %c0_183 = arith.constant 0 : index
    %c0_184 = arith.constant 0 : index
    %255 = vector.load %arg5[%c0_183, %c0_184] : memref<256x256xbf16, #tpu.memory_space<vmem>>, vector<256x256xbf16>
    %cst_185 = arith.constant dense<0.000000e+00> : vector<8x256xf32>
    %256 = tpu.matmul %254, %255, %cst_185 {dimension_numbers = #tpu.dot_dimension_numbers<[1], [0], [0], [1], [0, 0, 1, 1], [], []>} : vector<8x256xbf16>, vector<256x256xbf16>, vector<8x256xf32> -> vector<8x256xf32>
    %257 = arith.addf %253, %256 : vector<8x256xf32>
    %258 = math.tanh %257 : vector<8x256xf32>
    %259 = vector.extract_strided_slice %258 {offsets = [0, 0], sizes = [8, 128], strides = [1, 1]} : vector<8x256xf32> to vector<8x128xf32>
    %c2_186 = arith.constant 2 : index
    %c0_187 = arith.constant 0 : index
    %c0_188 = arith.constant 0 : index
    %260 = vector.load %arg13[%c2_186, %c0_187, %c0_188] : memref<8x8x256xf32, #tpu.memory_space<vmem>>, vector<1x8x128xf32>
    %261 = vector.shape_cast %260 : vector<1x8x128xf32> to vector<8x128xf32>
    %262 = vector.shape_cast %259 : vector<8x128xf32> to vector<1x8x128xf32>
    tpu.vector_store %arg13[%c2_186, %c0_187, %c0_188], %262 {strides = array<i32>} : memref<8x8x256xf32, #tpu.memory_space<vmem>>, vector<1x8x128xf32>,
    %263 = vector.extract_strided_slice %258 {offsets = [0, 128], sizes = [8, 128], strides = [1, 1]} : vector<8x256xf32> to vector<8x128xf32>
    %c5_189 = arith.constant 5 : index
    %c0_190 = arith.constant 0 : index
    %c128_191 = arith.constant 128 : index
    %264 = vector.load %arg13[%c5_189, %c0_190, %c128_191] : memref<8x8x256xf32, #tpu.memory_space<vmem>>, vector<1x8x128xf32>
    %265 = vector.shape_cast %264 : vector<1x8x128xf32> to vector<8x128xf32>
    %266 = vector.shape_cast %263 : vector<8x128xf32> to vector<1x8x128xf32>
    tpu.vector_store %arg13[%c5_189, %c0_190, %c128_191], %266 {strides = array<i32>} : memref<8x8x256xf32, #tpu.memory_space<vmem>>, vector<1x8x128xf32>,
    %c3_192 = arith.constant 3 : index
    %c0_193 = arith.constant 0 : index
    %c0_194 = arith.constant 0 : index
    %267 = vector.load %arg16[%c3_192, %c0_193, %c0_194] : memref<8x8x256xf32, #tpu.memory_space<vmem>>, vector<1x8x256xf32>
    %268 = vector.shape_cast %267 : vector<1x8x256xf32> to vector<8x256xf32>
    %269 = arith.truncf %258 : vector<8x256xf32> to vector<8x256xbf16>
    %c0_195 = arith.constant 0 : index
    %c0_196 = arith.constant 0 : index
    %270 = vector.load %arg5[%c0_195, %c0_196] : memref<256x256xbf16, #tpu.memory_space<vmem>>, vector<256x256xbf16>
    %cst_197 = arith.constant dense<0.000000e+00> : vector<8x256xf32>
    %271 = tpu.matmul %269, %270, %cst_197 {dimension_numbers = #tpu.dot_dimension_numbers<[1], [0], [0], [1], [0, 0, 1, 1], [], []>} : vector<8x256xbf16>, vector<256x256xbf16>, vector<8x256xf32> -> vector<8x256xf32>
    %272 = arith.addf %268, %271 : vector<8x256xf32>
    %273 = math.tanh %272 : vector<8x256xf32>
    %274 = vector.extract_strided_slice %273 {offsets = [0, 0], sizes = [8, 128], strides = [1, 1]} : vector<8x256xf32> to vector<8x128xf32>
    %c3_198 = arith.constant 3 : index
    %c0_199 = arith.constant 0 : index
    %c0_200 = arith.constant 0 : index
    %275 = vector.load %arg13[%c3_198, %c0_199, %c0_200] : memref<8x8x256xf32, #tpu.memory_space<vmem>>, vector<1x8x128xf32>
    %276 = vector.shape_cast %275 : vector<1x8x128xf32> to vector<8x128xf32>
    %277 = vector.shape_cast %274 : vector<8x128xf32> to vector<1x8x128xf32>
    tpu.vector_store %arg13[%c3_198, %c0_199, %c0_200], %277 {strides = array<i32>} : memref<8x8x256xf32, #tpu.memory_space<vmem>>, vector<1x8x128xf32>,
    %278 = vector.extract_strided_slice %273 {offsets = [0, 128], sizes = [8, 128], strides = [1, 1]} : vector<8x256xf32> to vector<8x128xf32>
    %c4_201 = arith.constant 4 : index
    %c0_202 = arith.constant 0 : index
    %c128_203 = arith.constant 128 : index
    %279 = vector.load %arg13[%c4_201, %c0_202, %c128_203] : memref<8x8x256xf32, #tpu.memory_space<vmem>>, vector<1x8x128xf32>
    %280 = vector.shape_cast %279 : vector<1x8x128xf32> to vector<8x128xf32>
    %281 = vector.shape_cast %278 : vector<8x128xf32> to vector<1x8x128xf32>
    tpu.vector_store %arg13[%c4_201, %c0_202, %c128_203], %281 {strides = array<i32>} : memref<8x8x256xf32, #tpu.memory_space<vmem>>, vector<1x8x128xf32>,
    %c4_204 = arith.constant 4 : index
    %c0_205 = arith.constant 0 : index
    %c0_206 = arith.constant 0 : index
    %282 = vector.load %arg16[%c4_204, %c0_205, %c0_206] : memref<8x8x256xf32, #tpu.memory_space<vmem>>, vector<1x8x256xf32>
    %283 = vector.shape_cast %282 : vector<1x8x256xf32> to vector<8x256xf32>
    %284 = arith.truncf %273 : vector<8x256xf32> to vector<8x256xbf16>
    %c0_207 = arith.constant 0 : index
    %c0_208 = arith.constant 0 : index
    %285 = vector.load %arg5[%c0_207, %c0_208] : memref<256x256xbf16, #tpu.memory_space<vmem>>, vector<256x256xbf16>
    %cst_209 = arith.constant dense<0.000000e+00> : vector<8x256xf32>
    %286 = tpu.matmul %284, %285, %cst_209 {dimension_numbers = #tpu.dot_dimension_numbers<[1], [0], [0], [1], [0, 0, 1, 1], [], []>} : vector<8x256xbf16>, vector<256x256xbf16>, vector<8x256xf32> -> vector<8x256xf32>
    %287 = arith.addf %283, %286 : vector<8x256xf32>
    %288 = math.tanh %287 : vector<8x256xf32>
    %289 = vector.extract_strided_slice %288 {offsets = [0, 0], sizes = [8, 128], strides = [1, 1]} : vector<8x256xf32> to vector<8x128xf32>
    %c4_210 = arith.constant 4 : index
    %c0_211 = arith.constant 0 : index
    %c0_212 = arith.constant 0 : index
    %290 = vector.load %arg13[%c4_210, %c0_211, %c0_212] : memref<8x8x256xf32, #tpu.memory_space<vmem>>, vector<1x8x128xf32>
    %291 = vector.shape_cast %290 : vector<1x8x128xf32> to vector<8x128xf32>
    %292 = vector.shape_cast %289 : vector<8x128xf32> to vector<1x8x128xf32>
    tpu.vector_store %arg13[%c4_210, %c0_211, %c0_212], %292 {strides = array<i32>} : memref<8x8x256xf32, #tpu.memory_space<vmem>>, vector<1x8x128xf32>,
    %293 = vector.extract_strided_slice %288 {offsets = [0, 128], sizes = [8, 128], strides = [1, 1]} : vector<8x256xf32> to vector<8x128xf32>
    %c3_213 = arith.constant 3 : index
    %c0_214 = arith.constant 0 : index
    %c128_215 = arith.constant 128 : index
    %294 = vector.load %arg13[%c3_213, %c0_214, %c128_215] : memref<8x8x256xf32, #tpu.memory_space<vmem>>, vector<1x8x128xf32>
    %295 = vector.shape_cast %294 : vector<1x8x128xf32> to vector<8x128xf32>
    %296 = vector.shape_cast %293 : vector<8x128xf32> to vector<1x8x128xf32>
    tpu.vector_store %arg13[%c3_213, %c0_214, %c128_215], %296 {strides = array<i32>} : memref<8x8x256xf32, #tpu.memory_space<vmem>>, vector<1x8x128xf32>,
    %c5_216 = arith.constant 5 : index
    %c0_217 = arith.constant 0 : index
    %c0_218 = arith.constant 0 : index
    %297 = vector.load %arg16[%c5_216, %c0_217, %c0_218] : memref<8x8x256xf32, #tpu.memory_space<vmem>>, vector<1x8x256xf32>
    %298 = vector.shape_cast %297 : vector<1x8x256xf32> to vector<8x256xf32>
    %299 = arith.truncf %288 : vector<8x256xf32> to vector<8x256xbf16>
    %c0_219 = arith.constant 0 : index
    %c0_220 = arith.constant 0 : index
    %300 = vector.load %arg5[%c0_219, %c0_220] : memref<256x256xbf16, #tpu.memory_space<vmem>>, vector<256x256xbf16>
    %cst_221 = arith.constant dense<0.000000e+00> : vector<8x256xf32>
    %301 = tpu.matmul %299, %300, %cst_221 {dimension_numbers = #tpu.dot_dimension_numbers<[1], [0], [0], [1], [0, 0, 1, 1], [], []>} : vector<8x256xbf16>, vector<256x256xbf16>, vector<8x256xf32> -> vector<8x256xf32>
    %302 = arith.addf %298, %301 : vector<8x256xf32>
    %303 = math.tanh %302 : vector<8x256xf32>
    %304 = vector.extract_strided_slice %303 {offsets = [0, 0], sizes = [8, 128], strides = [1, 1]} : vector<8x256xf32> to vector<8x128xf32>
    %c5_222 = arith.constant 5 : index
    %c0_223 = arith.constant 0 : index
    %c0_224 = arith.constant 0 : index
    %305 = vector.load %arg13[%c5_222, %c0_223, %c0_224] : memref<8x8x256xf32, #tpu.memory_space<vmem>>, vector<1x8x128xf32>
    %306 = vector.shape_cast %305 : vector<1x8x128xf32> to vector<8x128xf32>
    %307 = vector.shape_cast %304 : vector<8x128xf32> to vector<1x8x128xf32>
    tpu.vector_store %arg13[%c5_222, %c0_223, %c0_224], %307 {strides = array<i32>} : memref<8x8x256xf32, #tpu.memory_space<vmem>>, vector<1x8x128xf32>,
    %308 = vector.extract_strided_slice %303 {offsets = [0, 128], sizes = [8, 128], strides = [1, 1]} : vector<8x256xf32> to vector<8x128xf32>
    %c2_225 = arith.constant 2 : index
    %c0_226 = arith.constant 0 : index
    %c128_227 = arith.constant 128 : index
    %309 = vector.load %arg13[%c2_225, %c0_226, %c128_227] : memref<8x8x256xf32, #tpu.memory_space<vmem>>, vector<1x8x128xf32>
    %310 = vector.shape_cast %309 : vector<1x8x128xf32> to vector<8x128xf32>
    %311 = vector.shape_cast %308 : vector<8x128xf32> to vector<1x8x128xf32>
    tpu.vector_store %arg13[%c2_225, %c0_226, %c128_227], %311 {strides = array<i32>} : memref<8x8x256xf32, #tpu.memory_space<vmem>>, vector<1x8x128xf32>,
    %c6_228 = arith.constant 6 : index
    %c0_229 = arith.constant 0 : index
    %c0_230 = arith.constant 0 : index
    %312 = vector.load %arg16[%c6_228, %c0_229, %c0_230] : memref<8x8x256xf32, #tpu.memory_space<vmem>>, vector<1x8x256xf32>
    %313 = vector.shape_cast %312 : vector<1x8x256xf32> to vector<8x256xf32>
    %314 = arith.truncf %303 : vector<8x256xf32> to vector<8x256xbf16>
    %c0_231 = arith.constant 0 : index
    %c0_232 = arith.constant 0 : index
    %315 = vector.load %arg5[%c0_231, %c0_232] : memref<256x256xbf16, #tpu.memory_space<vmem>>, vector<256x256xbf16>
    %cst_233 = arith.constant dense<0.000000e+00> : vector<8x256xf32>
    %316 = tpu.matmul %314, %315, %cst_233 {dimension_numbers = #tpu.dot_dimension_numbers<[1], [0], [0], [1], [0, 0, 1, 1], [], []>} : vector<8x256xbf16>, vector<256x256xbf16>, vector<8x256xf32> -> vector<8x256xf32>
    %317 = arith.addf %313, %316 : vector<8x256xf32>
    %318 = math.tanh %317 : vector<8x256xf32>
    %319 = vector.extract_strided_slice %318 {offsets = [0, 0], sizes = [8, 128], strides = [1, 1]} : vector<8x256xf32> to vector<8x128xf32>
    %c6_234 = arith.constant 6 : index
    %c0_235 = arith.constant 0 : index
    %c0_236 = arith.constant 0 : index
    %320 = vector.load %arg13[%c6_234, %c0_235, %c0_236] : memref<8x8x256xf32, #tpu.memory_space<vmem>>, vector<1x8x128xf32>
    %321 = vector.shape_cast %320 : vector<1x8x128xf32> to vector<8x128xf32>
    %322 = vector.shape_cast %319 : vector<8x128xf32> to vector<1x8x128xf32>
    tpu.vector_store %arg13[%c6_234, %c0_235, %c0_236], %322 {strides = array<i32>} : memref<8x8x256xf32, #tpu.memory_space<vmem>>, vector<1x8x128xf32>,
    %323 = vector.extract_strided_slice %318 {offsets = [0, 128], sizes = [8, 128], strides = [1, 1]} : vector<8x256xf32> to vector<8x128xf32>
    %c1_237 = arith.constant 1 : index
    %c0_238 = arith.constant 0 : index
    %c128_239 = arith.constant 128 : index
    %324 = vector.load %arg13[%c1_237, %c0_238, %c128_239] : memref<8x8x256xf32, #tpu.memory_space<vmem>>, vector<1x8x128xf32>
    %325 = vector.shape_cast %324 : vector<1x8x128xf32> to vector<8x128xf32>
    %326 = vector.shape_cast %323 : vector<8x128xf32> to vector<1x8x128xf32>
    tpu.vector_store %arg13[%c1_237, %c0_238, %c128_239], %326 {strides = array<i32>} : memref<8x8x256xf32, #tpu.memory_space<vmem>>, vector<1x8x128xf32>,
    %c7_240 = arith.constant 7 : index
    %c0_241 = arith.constant 0 : index
    %c0_242 = arith.constant 0 : index
    %327 = vector.load %arg16[%c7_240, %c0_241, %c0_242] : memref<8x8x256xf32, #tpu.memory_space<vmem>>, vector<1x8x256xf32>
    %328 = vector.shape_cast %327 : vector<1x8x256xf32> to vector<8x256xf32>
    %329 = arith.truncf %318 : vector<8x256xf32> to vector<8x256xbf16>
    %c0_243 = arith.constant 0 : index
    %c0_244 = arith.constant 0 : index
    %330 = vector.load %arg5[%c0_243, %c0_244] : memref<256x256xbf16, #tpu.memory_space<vmem>>, vector<256x256xbf16>
    %cst_245 = arith.constant dense<0.000000e+00> : vector<8x256xf32>
    %331 = tpu.matmul %329, %330, %cst_245 {dimension_numbers = #tpu.dot_dimension_numbers<[1], [0], [0], [1], [0, 0, 1, 1], [], []>} : vector<8x256xbf16>, vector<256x256xbf16>, vector<8x256xf32> -> vector<8x256xf32>
    %332 = arith.addf %328, %331 : vector<8x256xf32>
    %333 = math.tanh %332 : vector<8x256xf32>
    %334 = vector.extract_strided_slice %333 {offsets = [0, 0], sizes = [8, 128], strides = [1, 1]} : vector<8x256xf32> to vector<8x128xf32>
    %c7_246 = arith.constant 7 : index
    %c0_247 = arith.constant 0 : index
    %c0_248 = arith.constant 0 : index
    %335 = vector.load %arg13[%c7_246, %c0_247, %c0_248] : memref<8x8x256xf32, #tpu.memory_space<vmem>>, vector<1x8x128xf32>
    %336 = vector.shape_cast %335 : vector<1x8x128xf32> to vector<8x128xf32>
    %337 = vector.shape_cast %334 : vector<8x128xf32> to vector<1x8x128xf32>
    tpu.vector_store %arg13[%c7_246, %c0_247, %c0_248], %337 {strides = array<i32>} : memref<8x8x256xf32, #tpu.memory_space<vmem>>, vector<1x8x128xf32>,
    %338 = vector.extract_strided_slice %333 {offsets = [0, 128], sizes = [8, 128], strides = [1, 1]} : vector<8x256xf32> to vector<8x128xf32>
    %c0_249 = arith.constant 0 : index
    %c0_250 = arith.constant 0 : index
    %c128_251 = arith.constant 128 : index
    %339 = vector.load %arg13[%c0_249, %c0_250, %c128_251] : memref<8x8x256xf32, #tpu.memory_space<vmem>>, vector<1x8x128xf32>
    %340 = vector.shape_cast %339 : vector<1x8x128xf32> to vector<8x128xf32>
    %341 = vector.shape_cast %338 : vector<8x128xf32> to vector<1x8x128xf32>
    tpu.vector_store %arg13[%c0_249, %c0_250, %c128_251], %341 {strides = array<i32>} : memref<8x8x256xf32, #tpu.memory_space<vmem>>, vector<1x8x128xf32>,
    %342 = vector.extract_strided_slice %333 {offsets = [0, 0], sizes = [8, 128], strides = [1, 1]} : vector<8x256xf32> to vector<8x128xf32>
    %c2_252 = arith.constant 2 : index
    %c0_253 = arith.constant 0 : index
    %c0_254 = arith.constant 0 : index
    %343 = vector.load %arg14[%c2_252, %c0_253, %c0_254] : memref<4x8x128xf32, #tpu.memory_space<vmem>>, vector<1x8x128xf32>
    %344 = vector.shape_cast %343 : vector<1x8x128xf32> to vector<8x128xf32>
    %345 = vector.shape_cast %342 : vector<8x128xf32> to vector<1x8x128xf32>
    tpu.vector_store %arg14[%c2_252, %c0_253, %c0_254], %345 {strides = array<i32>} : memref<4x8x128xf32, #tpu.memory_space<vmem>>, vector<1x8x128xf32>,
    %346 = vector.extract_strided_slice %333 {offsets = [0, 128], sizes = [8, 128], strides = [1, 1]} : vector<8x256xf32> to vector<8x128xf32>
    %c3_255 = arith.constant 3 : index
    %c0_256 = arith.constant 0 : index
    %c0_257 = arith.constant 0 : index
    %347 = vector.load %arg14[%c3_255, %c0_256, %c0_257] : memref<4x8x128xf32, #tpu.memory_space<vmem>>, vector<1x8x128xf32>
    %348 = vector.shape_cast %347 : vector<1x8x128xf32> to vector<8x128xf32>
    %349 = vector.shape_cast %346 : vector<8x128xf32> to vector<1x8x128xf32>
    tpu.vector_store %arg14[%c3_255, %c0_256, %c0_257], %349 {strides = array<i32>} : memref<4x8x128xf32, #tpu.memory_space<vmem>>, vector<1x8x128xf32>,
    %c0_258 = arith.constant 0 : index
    %c0_259 = arith.constant 0 : index
    %c0_260 = arith.constant 0 : index
    %350 = vector.load %arg13[%c0_258, %c0_259, %c0_260] : memref<8x8x256xf32, #tpu.memory_space<vmem>>, vector<8x8x256xf32>
    %351 = vector.shape_cast %350 : vector<8x8x256xf32> to vector<64x256xf32>
    %352 = arith.truncf %351 : vector<64x256xf32> to vector<64x256xbf16>
    %c0_261 = arith.constant 0 : index
    %c0_262 = arith.constant 0 : index
    %353 = vector.load %arg7[%c0_261, %c0_262] : memref<256x128xbf16, #tpu.memory_space<vmem>>, vector<256x128xbf16>
    %cst_263 = arith.constant dense<0.000000e+00> : vector<64x128xf32>
    %354 = tpu.matmul %352, %353, %cst_263 {dimension_numbers = #tpu.dot_dimension_numbers<[1], [0], [0], [1], [0, 0, 1, 1], [], []>} : vector<64x256xbf16>, vector<256x128xbf16>, vector<64x128xf32> -> vector<64x128xf32>
    %c0_264 = arith.constant 0 : index
    %c0_265 = arith.constant 0 : index
    %355 = vector.load %arg8[%c0_264, %c0_265] : memref<1x128xf32, #tpu.memory_space<vmem>>, vector<1x128xf32>
    %356 = vector.broadcast %355 : vector<1x128xf32> to vector<64x128xf32>
    %357 = arith.addf %354, %356 : vector<64x128xf32>
    %cst_266 = arith.constant 0.000000e+00 : f32
    %358 = vector.broadcast %cst_266 : f32 to vector<64x128xf32>
    %359 = arith.maximumf %357, %358 : vector<64x128xf32>
    %360 = arith.truncf %359 : vector<64x128xf32> to vector<64x128xbf16>
    %c0_267 = arith.constant 0 : index
    %c0_268 = arith.constant 0 : index
    %361 = vector.load %arg9[%c0_267, %c0_268] : memref<128x128xbf16, #tpu.memory_space<vmem>>, vector<128x128xbf16>
    %cst_269 = arith.constant dense<0.000000e+00> : vector<64x128xf32>
    %362 = tpu.matmul %360, %361, %cst_269 {dimension_numbers = #tpu.dot_dimension_numbers<[1], [0], [0], [1], [0, 0, 1, 1], [], []>} : vector<64x128xbf16>, vector<128x128xbf16>, vector<64x128xf32> -> vector<64x128xf32>
    %c0_270 = arith.constant 0 : index
    %c0_271 = arith.constant 0 : index
    %363 = vector.load %arg10[%c0_270, %c0_271] : memref<1x128xf32, #tpu.memory_space<vmem>>, vector<1x128xf32>
    %364 = vector.broadcast %363 : vector<1x128xf32> to vector<64x128xf32>
    %365 = arith.addf %362, %364 : vector<64x128xf32>
    %cst_272 = arith.constant 0.000000e+00 : f32
    %366 = vector.broadcast %cst_272 : f32 to vector<64x128xf32>
    %367 = arith.maximumf %365, %366 : vector<64x128xf32>
    %368 = arith.truncf %367 : vector<64x128xf32> to vector<64x128xbf16>
    %c0_273 = arith.constant 0 : index
    %c0_274 = arith.constant 0 : index
    %369 = vector.load %arg11[%c0_273, %c0_274] : memref<128x128xbf16, #tpu.memory_space<vmem>>, vector<128x128xbf16>
    %cst_275 = arith.constant dense<0.000000e+00> : vector<64x128xf32>
    %370 = tpu.matmul %368, %369, %cst_275 {dimension_numbers = #tpu.dot_dimension_numbers<[1], [0], [0], [1], [0, 0, 1, 1], [], []>} : vector<64x128xbf16>, vector<128x128xbf16>, vector<64x128xf32> -> vector<64x128xf32>
    %c0_276 = arith.constant 0 : index
    %c0_277 = arith.constant 0 : index
    %371 = vector.load %arg12[%c0_276, %c0_277] : memref<1x128xf32, #tpu.memory_space<vmem>>, vector<1x128xf32>
    %372 = vector.broadcast %371 : vector<1x128xf32> to vector<64x128xf32>
    %373 = arith.addf %370, %372 : vector<64x128xf32>
    %374 = vector.shape_cast %373 : vector<64x128xf32> to vector<8x8x128xf32>
    %c0_278 = arith.constant 0 : index
    %c0_279 = arith.constant 0 : index
    %c0_280 = arith.constant 0 : index
    %375 = vector.load %arg15[%c0_278, %c0_279, %c0_280] : memref<8x8x128xf32, #tpu.memory_space<vmem>>, vector<8x8x128xf32>
    tpu.vector_store %arg15[%c0_278, %c0_279, %c0_280], %374 {strides = array<i32>} : memref<8x8x128xf32, #tpu.memory_space<vmem>>, vector<8x8x128xf32>,
    return
  }
}

</mosaic_0001>

<llo_original>
// kernel: rnn_with_finish_and_mem_forward.1
$region0: #{rnn_with_finish_and_mem_forward.1}
  #allocation0 [shape = 'u32[]', space=smem, size = 0x4, offset = 0x4, fixed_abs, tag = 'smem constant byte address 0x4 - core index']
  #allocation1 [shape = 'u32[72,128]{1,0:T(1,128)}', space=vmem, size = 0x9000, scoped, tag = 'internal scratch']
  #allocation2 [shape = 'f32[8,8,256]{2,1,0:T(8,128)}', space=vmem, size = 0x10000, scoped, tag = 'scratch operand']
  #allocation3 [shape = 'f32[8,8,256]{2,1,0:T(8,128)}', space=vmem, size = 0x10000, scoped, tag = 'scratch operand']
  %s0 = inlined_call_operand.vmem [shape: f32[8,8,16], index: 0, kind: input, shape index: {}]
  %s1 = inlined_call_operand.vmem [shape: bf16[16,256], index: 1, kind: input, shape index: {}]
  %s2 = inlined_call_operand.vmem [shape: bf16[256,256], index: 2, kind: input, shape index: {}]
  %s3 = inlined_call_operand.vmem [shape: f32[1,256], index: 3, kind: input, shape index: {}]
  %s4 = inlined_call_operand.vmem [shape: bf16[256,256], index: 4, kind: input, shape index: {}]
  %s5 = inlined_call_operand.vmem [shape: bf16[256,256], index: 5, kind: input, shape index: {}]
  %s6 = inlined_call_operand.vmem [shape: f32[1,256], index: 6, kind: input, shape index: {}]
  %s7 = inlined_call_operand.vmem [shape: bf16[256,128], index: 7, kind: input, shape index: {}]
  %s8 = inlined_call_operand.vmem [shape: f32[1,128], index: 8, kind: input, shape index: {}]
  %s9 = inlined_call_operand.vmem [shape: bf16[128,128], index: 9, kind: input, shape index: {}]
  %s10 = inlined_call_operand.vmem [shape: f32[1,128], index: 10, kind: input, shape index: {}]
  %s11 = inlined_call_operand.vmem [shape: bf16[128,128], index: 11, kind: input, shape index: {}]
  %s12 = inlined_call_operand.vmem [shape: f32[1,128], index: 12, kind: input, shape index: {}]
  %s13 = inlined_call_operand.hbm [shape: f32[8,8,256], index: 13, kind: output, shape index: {0}]
  %s14 = inlined_call_operand.hbm [shape: f32[4,8,128], index: 14, kind: output, shape index: {1}]
  %s15 = inlined_call_operand.vmem [shape: f32[8,8,128], index: 15, kind: output, shape index: {2}]
  %16 = xla_tuple %s13, %s14, %s15
  %s17 = sld [smem:[#allocation0]]
  $region78: #{rnn_with_finish_and_mem_forward.1} parent=0
    _
  %s19 = ssub.s32 1, %s17
  %s20 = scalar_select 0, %s19, %s17
  $region1: #{rnn_with_finish_and_mem_forward.1} parent=0
    #allocation4 [shape = 'u8[65536]{0}', space=vmem, size = 0x10000, scoped, tag = 'output window, operand 0, single buffered']
    #allocation5 [shape = 's32[1]{0}', space=sflag, size = 0x4, scoped, tag = 'scoped memory for rnn_with_finish_and_mem_forward.1']
    #allocation6 [shape = 'u8[16384]{0}', space=vmem, size = 0x4000, scoped, tag = 'output window, operand 1, single buffered']
    #allocation7 [shape = 's32[1]{0}', space=sflag, size = 0x4, scoped, tag = 'scoped memory for rnn_with_finish_and_mem_forward.1']
    %21 = vsyncpa [#allocation5], 0
    %22 = vsyncpa [#allocation7], 0
    // Predicated region
    $region2: #{rnn_with_finish_and_mem_forward.1} parent=1 // pred_check
      _
    $region3: #{rnn_with_finish_and_mem_forward.1} parent=1 // pred_check_branch
      %24 = sbr.rel (0) target = $region5
    $region4: #{rnn_with_finish_and_mem_forward.1} parent=1 // pred_region
      _
    $region5: #{rnn_with_finish_and_mem_forward.1} parent=1 // pred_fallthru
      _
    // Predicated region
    $region6: #{rnn_with_finish_and_mem_forward.1} parent=1 // pred_check
      _
    $region7: #{rnn_with_finish_and_mem_forward.1} parent=1 // pred_check_branch
      %26 = sbr.rel (0) target = $region9
    $region8: #{rnn_with_finish_and_mem_forward.1} parent=1 // pred_region
      _
    $region9: #{rnn_with_finish_and_mem_forward.1} parent=1 // pred_fallthru
      _
    // Predicated region
    $region10: #{rnn_with_finish_and_mem_forward.1} parent=1 // pred_check
      _
    $region11: #{rnn_with_finish_and_mem_forward.1} parent=1 // pred_check_branch
      %28 = sbr.rel (0) target = $region13
    $region12: #{rnn_with_finish_and_mem_forward.1} parent=1 // pred_region
      _
    $region13: #{rnn_with_finish_and_mem_forward.1} parent=1 // pred_fallthru
      _
    // Predicated region
    $region14: #{rnn_with_finish_and_mem_forward.1} parent=1 // pred_check
      _
    $region15: #{rnn_with_finish_and_mem_forward.1} parent=1 // pred_check_branch
      %30 = sbr.rel (0) target = $region17
    $region16: #{rnn_with_finish_and_mem_forward.1} parent=1 // pred_region
      _
    $region17: #{rnn_with_finish_and_mem_forward.1} parent=1 // pred_fallthru
      _
    // Predicated region
    $region18: #{rnn_with_finish_and_mem_forward.1} parent=1 // pred_check
      _
    $region19: #{rnn_with_finish_and_mem_forward.1} parent=1 // pred_check_branch
      %32 = sbr.rel (0) target = $region21
    $region20: #{rnn_with_finish_and_mem_forward.1} parent=1 // pred_region
      _
    $region21: #{rnn_with_finish_and_mem_forward.1} parent=1 // pred_fallthru
      _
    // Predicated region
    $region22: #{rnn_with_finish_and_mem_forward.1} parent=1 // pred_check
      _
    $region23: #{rnn_with_finish_and_mem_forward.1} parent=1 // pred_check_branch
      %34 = sbr.rel (0) target = $region25
    $region24: #{rnn_with_finish_and_mem_forward.1} parent=1 // pred_region
      _
    $region25: #{rnn_with_finish_and_mem_forward.1} parent=1 // pred_fallthru
      _
    // Predicated region
    $region26: #{rnn_with_finish_and_mem_forward.1} parent=1 // pred_check
      _
    $region27: #{rnn_with_finish_and_mem_forward.1} parent=1 // pred_check_branch
      %36 = sbr.rel (0) target = $region29
    $region28: #{rnn_with_finish_and_mem_forward.1} parent=1 // pred_region
      _
    $region29: #{rnn_with_finish_and_mem_forward.1} parent=1 // pred_fallthru
      _
    // Predicated region
    $region30: #{rnn_with_finish_and_mem_forward.1} parent=1 // pred_check
      _
    $region31: #{rnn_with_finish_and_mem_forward.1} parent=1 // pred_check_branch
      %38 = sbr.rel (0) target = $region33
    $region32: #{rnn_with_finish_and_mem_forward.1} parent=1 // pred_region
      _
    $region33: #{rnn_with_finish_and_mem_forward.1} parent=1 // pred_fallthru
      _
    // Predicated region
    $region34: #{rnn_with_finish_and_mem_forward.1} parent=1 // pred_check
      _
    $region35: #{rnn_with_finish_and_mem_forward.1} parent=1 // pred_check_branch
      %40 = sbr.rel (0) target = $region37
    $region36: #{rnn_with_finish_and_mem_forward.1} parent=1 // pred_region
      _
    $region37: #{rnn_with_finish_and_mem_forward.1} parent=1 // pred_fallthru
      _
    // Predicated region
    $region38: #{rnn_with_finish_and_mem_forward.1} parent=1 // pred_check
      _
    $region39: #{rnn_with_finish_and_mem_forward.1} parent=1 // pred_check_branch
      %42 = sbr.rel (0) target = $region41
    $region40: #{rnn_with_finish_and_mem_forward.1} parent=1 // pred_region
      _
    $region41: #{rnn_with_finish_and_mem_forward.1} parent=1 // pred_fallthru
      _
    // Predicated region
    $region42: #{rnn_with_finish_and_mem_forward.1} parent=1 // pred_check
      _
    $region43: #{rnn_with_finish_and_mem_forward.1} parent=1 // pred_check_branch
      %44 = sbr.rel (0) target = $region45
    $region44: #{rnn_with_finish_and_mem_forward.1} parent=1 // pred_region
      _
    $region45: #{rnn_with_finish_and_mem_forward.1} parent=1 // pred_fallthru
      _
    // Predicated region
    $region46: #{rnn_with_finish_and_mem_forward.1} parent=1 // pred_check
      _
    $region47: #{rnn_with_finish_and_mem_forward.1} parent=1 // pred_check_branch
      %46 = sbr.rel (0) target = $region49
    $region48: #{rnn_with_finish_and_mem_forward.1} parent=1 // pred_region
      _
    $region49: #{rnn_with_finish_and_mem_forward.1} parent=1 // pred_fallthru
      _
    // Predicated region
    $region50: #{rnn_with_finish_and_mem_forward.1} parent=1 // pred_check
      _
    $region51: #{rnn_with_finish_and_mem_forward.1} parent=1 // pred_check_branch
      %48 = sbr.rel (0) target = $region53
    $region52: #{rnn_with_finish_and_mem_forward.1} parent=1 // pred_region
      _
    $region53: #{rnn_with_finish_and_mem_forward.1} parent=1 // pred_fallthru
      _
    %v50 = vld [vmem:[%s0] sm:$0xff]
    %v51 = vld [vmem:[%s0 + $0x8] sm:$0xff]
    %v52 = vld [vmem:[%s0 + $0x10] sm:$0xff]
    %v53 = vld [vmem:[%s0 + $0x18] sm:$0xff]
    %v54 = vld [vmem:[%s0 + $0x20] sm:$0xff]
    %v55 = vld [vmem:[%s0 + $0x28] sm:$0xff]
    %v56 = vld [vmem:[%s0 + $0x30] sm:$0xff]
    %v57 = vld [vmem:[%s0 + $0x38] sm:$0xff]
    %v58 = vpack.c.bf16 %v51, %v50
    %v59 = vpack.c.bf16 %v53, %v52
    %v60 = vpack.c.bf16 %v55, %v54
    %v61 = vpack.c.bf16 %v57, %v56
    %v62 = vld [vmem:[%s1] sm:$0xff]
    %v63 = vld [vmem:[%s1 + $0x8] sm:$0xff]
    %v64 = vld [vmem:[%s3] sm:$0x3]
    %v66 = vperm.slane %v64, 0
    %v67 = vperm.slane %v64, 1
    %v72 = vunpack.c.l.b16 %v62
    %v73 = vunpack.c.h.b16 %v62
    %v74 = vunpack.c.l.b16 %v63
    %v75 = vunpack.c.h.b16 %v63
    %v76 = vpack.c.b16 %v74, %v72
    %v77 = vpack.c.b16 %v75, %v73
    %vm80 = vcmask 130048
    %v82 = vsel %vm80, %v58, 0
    %v85 = vsel %vm80, %v59, 0
    %v88 = vsel %vm80, %v60, 0
    %v91 = vsel %vm80, %v61, 0
    %93 = vmatpush.bf16.msra.mxu0 0
    %94 = vmatpush.bf16.msra.mxu0 0
    %95 = vmatpush.bf16.msra.mxu0 0
    %96 = vmatpush.bf16.msra.mxu0 0
    %97 = vmatpush.bf16.msra.mxu0 0
    %98 = vmatpush.bf16.msra.mxu0 0
    %99 = vmatpush.bf16.msra.mxu0 0
    %100 = vmatpush.bf16.msra.mxu0 %v76
    %101 = vmatmul.bf16.gmra.mxu0 %v82
    %v102 = vpop.f32.mrf.mxu0
    %v103 = vadd.f32 %v66, %v102
    %v104 = vpop.f32.mrf.mxu0
    %v105 = vadd.f32 %v66, %v104
    %106 = vmatmul.bf16.gmra.mxu0 %v85
    %v107 = vpop.f32.mrf.mxu0
    %v108 = vadd.f32 %v66, %v107
    %v109 = vpop.f32.mrf.mxu0
    %v110 = vadd.f32 %v66, %v109
    %111 = vmatmul.bf16.gmra.mxu0 %v88
    %v112 = vpop.f32.mrf.mxu0
    %v113 = vadd.f32 %v66, %v112
    %v114 = vpop.f32.mrf.mxu0
    %v115 = vadd.f32 %v66, %v114
    %116 = vmatmul.bf16.gmra.mxu0 %v91
    %v117 = vpop.f32.mrf.mxu0
    %v118 = vadd.f32 %v66, %v117
    %v119 = vpop.f32.mrf.mxu0
    %v120 = vadd.f32 %v66, %v119
    %121 = vdwg.mxu0
    %122 = vmatpush.bf16.msra.mxu0 0
    %123 = vmatpush.bf16.msra.mxu0 0
    %124 = vmatpush.bf16.msra.mxu0 0
    %125 = vmatpush.bf16.msra.mxu0 0
    %126 = vmatpush.bf16.msra.mxu0 0
    %127 = vmatpush.bf16.msra.mxu0 0
    %128 = vmatpush.bf16.msra.mxu0 0
    %129 = vmatpush.bf16.msra.mxu0 %v77
    %130 = vmatmul.bf16.gmra.mxu0 %v82
    %v131 = vpop.f32.mrf.mxu0
    %v132 = vadd.f32 %v67, %v131
    %v133 = vpop.f32.mrf.mxu0
    %v134 = vadd.f32 %v67, %v133
    %135 = vmatmul.bf16.gmra.mxu0 %v85
    %v136 = vpop.f32.mrf.mxu0
    %v137 = vadd.f32 %v67, %v136
    %v138 = vpop.f32.mrf.mxu0
    %v139 = vadd.f32 %v67, %v138
    %140 = vmatmul.bf16.gmra.mxu0 %v88
    %v141 = vpop.f32.mrf.mxu0
    %v142 = vadd.f32 %v67, %v141
    %v143 = vpop.f32.mrf.mxu0
    %v144 = vadd.f32 %v67, %v143
    %145 = vmatmul.bf16.gmra.mxu0 %v91
    %v146 = vpop.f32.mrf.mxu0
    %v147 = vadd.f32 %v67, %v146
    %v148 = vpop.f32.mrf.mxu0
    %v149 = vadd.f32 %v67, %v148
    %150 = vdwg.mxu0
    %151 = vst [vmem:[#allocation2] sm:$0xff] %v103
    %152 = vst [vmem:[#allocation2 + $0x10] sm:$0xff] %v105
    %153 = vst [vmem:[#allocation2 + $0x20] sm:$0xff] %v108
    %154 = vst [vmem:[#allocation2 + $0x30] sm:$0xff] %v110
    %155 = vst [vmem:[#allocation2 + $0x40] sm:$0xff] %v113
    %156 = vst [vmem:[#allocation2 + $0x50] sm:$0xff] %v115
    %157 = vst [vmem:[#allocation2 + $0x60] sm:$0xff] %v118
    %158 = vst [vmem:[#allocation2 + $0x70] sm:$0xff] %v120
    %159 = vst [vmem:[#allocation2 + $0x8] sm:$0xff] %v149
    %s160 = scalar_lea.vmem [#allocation2], 16
    %161 = vst [vmem:[%s160 + $0x8] sm:$0xff] %v147
    %s162 = scalar_lea.vmem [#allocation2], 32
    %163 = vst [vmem:[%s162 + $0x8] sm:$0xff] %v144
    %s164 = scalar_lea.vmem [#allocation2], 48
    %165 = vst [vmem:[%s164 + $0x8] sm:$0xff] %v142
    %s166 = scalar_lea.vmem [#allocation2], 64
    %167 = vst [vmem:[%s166 + $0x8] sm:$0xff] %v139
    %s168 = scalar_lea.vmem [#allocation2], 80
    %169 = vst [vmem:[%s168 + $0x8] sm:$0xff] %v137
    %s170 = scalar_lea.vmem [#allocation2], 96
    %171 = vst [vmem:[%s170 + $0x8] sm:$0xff] %v134
    %s172 = scalar_lea.vmem [#allocation2], 112
    %173 = vst [vmem:[%s172 + $0x8] sm:$0xff] %v132
    %v174 = vld [vmem:[#allocation2] sm:$0xff]
    %v175 = vld [vmem:[#allocation2 + $0x8] sm:$0xff]
    %v176 = vtanh.pop %v174
    %v177 = vtanh.pop %v175
    %178 = vst [vmem:[#allocation3] sm:$0xff] %v176
    %s179 = scalar_lea.vmem [#allocation3], 112
    %180 = vst [vmem:[%s179 + $0x8] sm:$0xff] %v177
    %v181 = vld [vmem:[%s160] sm:$0xff]
    %v182 = vld [vmem:[%s160 + $0x8] sm:$0xff]
    %v183 = vpack.c.bf16 %v176, %v176
    %v184 = vpack.c.bf16 %v177, %v177
    %v185 = vld [vmem:[%s2] sm:$0xff]
    %v186 = vld [vmem:[%s2 + $0x8] sm:$0xff]
    %v187 = vld [vmem:[%s2 + $0x10] sm:$0xff]
    %v188 = vld [vmem:[%s2 + $0x18] sm:$0xff]
    %v189 = vld [vmem:[%s2 + $0x20] sm:$0xff]
    %v190 = vld [vmem:[%s2 + $0x28] sm:$0xff]
    %v191 = vld [vmem:[%s2 + $0x30] sm:$0xff]
    %v192 = vld [vmem:[%s2 + $0x38] sm:$0xff]
    %v193 = vld [vmem:[%s2 + $0x40] sm:$0xff]
    %v194 = vld [vmem:[%s2 + $0x48] sm:$0xff]
    %v195 = vld [vmem:[%s2 + $0x50] sm:$0xff]
    %v196 = vld [vmem:[%s2 + $0x58] sm:$0xff]
    %v197 = vld [vmem:[%s2 + $0x60] sm:$0xff]
    %v198 = vld [vmem:[%s2 + $0x68] sm:$0xff]
    %v199 = vld [vmem:[%s2 + $0x70] sm:$0xff]
    %v200 = vld [vmem:[%s2 + $0x78] sm:$0xff]
    %v201 = vld [vmem:[%s2 + $0x80] sm:$0xff]
    %v202 = vld [vmem:[%s2 + $0x88] sm:$0xff]
    %v203 = vld [vmem:[%s2 + $0x90] sm:$0xff]
    %v204 = vld [vmem:[%s2 + $0x98] sm:$0xff]
    %v205 = vld [vmem:[%s2 + $0xa0] sm:$0xff]
    %v206 = vld [vmem:[%s2 + $0xa8] sm:$0xff]
    %v207 = vld [vmem:[%s2 + $0xb0] sm:$0xff]
    %v208 = vld [vmem:[%s2 + $0xb8] sm:$0xff]
    %v209 = vld [vmem:[%s2 + $0xc0] sm:$0xff]
    %v210 = vld [vmem:[%s2 + $0xc8] sm:$0xff]
    %v211 = vld [vmem:[%s2 + $0xd0] sm:$0xff]
    %v212 = vld [vmem:[%s2 + $0xd8] sm:$0xff]
    %v213 = vld [vmem:[%s2 + $0xe0] sm:$0xff]
    %v214 = vld [vmem:[%s2 + $0xe8] sm:$0xff]
    %v215 = vld [vmem:[%s2 + $0xf0] sm:$0xff]
    %v216 = vld [vmem:[%s2 + $0xf8] sm:$0xff]
    %v249 = vunpack.c.l.b16 %v185
    %v250 = vunpack.c.h.b16 %v185
    %v251 = vunpack.c.l.b16 %v186
    %v252 = vunpack.c.h.b16 %v186
    %v253 = vunpack.c.l.b16 %v187
    %v254 = vunpack.c.h.b16 %v187
    %v255 = vunpack.c.l.b16 %v188
    %v256 = vunpack.c.h.b16 %v188
    %v257 = vunpack.c.l.b16 %v189
    %v258 = vunpack.c.h.b16 %v189
    %v259 = vunpack.c.l.b16 %v190
    %v260 = vunpack.c.h.b16 %v190
    %v261 = vunpack.c.l.b16 %v191
    %v262 = vunpack.c.h.b16 %v191
    %v263 = vunpack.c.l.b16 %v192
    %v264 = vunpack.c.h.b16 %v192
    %v265 = vunpack.c.l.b16 %v193
    %v266 = vunpack.c.h.b16 %v193
    %v267 = vunpack.c.l.b16 %v194
    %v268 = vunpack.c.h.b16 %v194
    %v269 = vunpack.c.l.b16 %v195
    %v270 = vunpack.c.h.b16 %v195
    %v271 = vunpack.c.l.b16 %v196
    %v272 = vunpack.c.h.b16 %v196
    %v273 = vunpack.c.l.b16 %v197
    %v274 = vunpack.c.h.b16 %v197
    %v275 = vunpack.c.l.b16 %v198
    %v276 = vunpack.c.h.b16 %v198
    %v277 = vunpack.c.l.b16 %v199
    %v278 = vunpack.c.h.b16 %v199
    %v279 = vunpack.c.l.b16 %v200
    %v280 = vunpack.c.h.b16 %v200
    %v281 = vunpack.c.l.b16 %v201
    %v282 = vunpack.c.h.b16 %v201
    %v283 = vunpack.c.l.b16 %v202
    %v284 = vunpack.c.h.b16 %v202
    %v285 = vunpack.c.l.b16 %v203
    %v286 = vunpack.c.h.b16 %v203
    %v287 = vunpack.c.l.b16 %v204
    %v288 = vunpack.c.h.b16 %v204
    %v289 = vunpack.c.l.b16 %v205
    %v290 = vunpack.c.h.b16 %v205
    %v291 = vunpack.c.l.b16 %v206
    %v292 = vunpack.c.h.b16 %v206
    %v293 = vunpack.c.l.b16 %v207
    %v294 = vunpack.c.h.b16 %v207
    %v295 = vunpack.c.l.b16 %v208
    %v296 = vunpack.c.h.b16 %v208
    %v297 = vunpack.c.l.b16 %v209
    %v298 = vunpack.c.h.b16 %v209
    %v299 = vunpack.c.l.b16 %v210
    %v300 = vunpack.c.h.b16 %v210
    %v301 = vunpack.c.l.b16 %v211
    %v302 = vunpack.c.h.b16 %v211
    %v303 = vunpack.c.l.b16 %v212
    %v304 = vunpack.c.h.b16 %v212
    %v305 = vunpack.c.l.b16 %v213
    %v306 = vunpack.c.h.b16 %v213
    %v307 = vunpack.c.l.b16 %v214
    %v308 = vunpack.c.h.b16 %v214
    %v309 = vunpack.c.l.b16 %v215
    %v310 = vunpack.c.h.b16 %v215
    %v311 = vunpack.c.l.b16 %v216
    %v312 = vunpack.c.h.b16 %v216
    %v313 = vpack.c.b16 %v251, %v249
    %v314 = vpack.c.b16 %v252, %v250
    %v315 = vpack.c.b16 %v255, %v253
    %v316 = vpack.c.b16 %v256, %v254
    %v317 = vpack.c.b16 %v259, %v257
    %v318 = vpack.c.b16 %v260, %v258
    %v319 = vpack.c.b16 %v263, %v261
    %v320 = vpack.c.b16 %v264, %v262
    %v321 = vpack.c.b16 %v267, %v265
    %v322 = vpack.c.b16 %v268, %v266
    %v323 = vpack.c.b16 %v271, %v269
    %v324 = vpack.c.b16 %v272, %v270
    %v325 = vpack.c.b16 %v275, %v273
    %v326 = vpack.c.b16 %v276, %v274
    %v327 = vpack.c.b16 %v279, %v277
    %v328 = vpack.c.b16 %v280, %v278
    %v329 = vpack.c.b16 %v283, %v281
    %v330 = vpack.c.b16 %v284, %v282
    %v331 = vpack.c.b16 %v287, %v285
    %v332 = vpack.c.b16 %v288, %v286
    %v333 = vpack.c.b16 %v291, %v289
    %v334 = vpack.c.b16 %v292, %v290
    %v335 = vpack.c.b16 %v295, %v293
    %v336 = vpack.c.b16 %v296, %v294
    %v337 = vpack.c.b16 %v299, %v297
    %v338 = vpack.c.b16 %v300, %v298
    %v339 = vpack.c.b16 %v303, %v301
    %v340 = vpack.c.b16 %v304, %v302
    %v341 = vpack.c.b16 %v307, %v305
    %v342 = vpack.c.b16 %v308, %v306
    %v343 = vpack.c.b16 %v311, %v309
    %v344 = vpack.c.b16 %v312, %v310
    %377 = vmatpush.bf16.msra.mxu0 %v327
    %378 = vmatpush.bf16.msra.mxu0 %v325
    %379 = vmatpush.bf16.msra.mxu0 %v323
    %380 = vmatpush.bf16.msra.mxu0 %v321
    %381 = vmatpush.bf16.msra.mxu0 %v319
    %382 = vmatpush.bf16.msra.mxu0 %v317
    %383 = vmatpush.bf16.msra.mxu0 %v315
    %384 = vmatpush.bf16.msra.mxu0 %v313
    %385 = vmatmul.bf16.gmra.mxu0 %v183
    %v386 = vpop.f32.mrf.mxu0
    %v387 = vadd.f32 0.0, %v386
    %v388 = vpop.f32.mrf.mxu0
    %389 = vdwg.mxu0
    %390 = vmatpush.bf16.msra.mxu0 %v343
    %391 = vmatpush.bf16.msra.mxu0 %v341
    %392 = vmatpush.bf16.msra.mxu0 %v339
    %393 = vmatpush.bf16.msra.mxu0 %v337
    %394 = vmatpush.bf16.msra.mxu0 %v335
    %395 = vmatpush.bf16.msra.mxu0 %v333
    %396 = vmatpush.bf16.msra.mxu0 %v331
    %397 = vmatpush.bf16.msra.mxu0 %v329
    %398 = vmatmul.bf16.gmra.mxu0 %v184
    %v399 = vpop.f32.mrf.mxu0
    %v400 = vadd.f32 %v387, %v399
    %v401 = vpop.f32.mrf.mxu0
    %402 = vdwg.mxu0
    %403 = vmatpush.bf16.msra.mxu0 %v328
    %404 = vmatpush.bf16.msra.mxu0 %v326
    %405 = vmatpush.bf16.msra.mxu0 %v324
    %406 = vmatpush.bf16.msra.mxu0 %v322
    %407 = vmatpush.bf16.msra.mxu0 %v320
    %408 = vmatpush.bf16.msra.mxu0 %v318
    %409 = vmatpush.bf16.msra.mxu0 %v316
    %410 = vmatpush.bf16.msra.mxu0 %v314
    %411 = vmatmul.bf16.gmra.mxu0 %v183
    %v412 = vpop.f32.mrf.mxu0
    %v413 = vadd.f32 0.0, %v412
    %v414 = vpop.f32.mrf.mxu0
    %415 = vdwg.mxu0
    %416 = vmatpush.bf16.msra.mxu0 %v344
    %417 = vmatpush.bf16.msra.mxu0 %v342
    %418 = vmatpush.bf16.msra.mxu0 %v340
    %419 = vmatpush.bf16.msra.mxu0 %v338
    %420 = vmatpush.bf16.msra.mxu0 %v336
    %421 = vmatpush.bf16.msra.mxu0 %v334
    %422 = vmatpush.bf16.msra.mxu0 %v332
    %423 = vmatpush.bf16.msra.mxu0 %v330
    %424 = vmatmul.bf16.gmra.mxu0 %v184
    %v425 = vpop.f32.mrf.mxu0
    %v426 = vadd.f32 %v413, %v425
    %v427 = vpop.f32.mrf.mxu0
    %428 = vdwg.mxu0
    %v429 = vadd.f32 %v181, %v400
    %v430 = vadd.f32 %v182, %v426
    %v431 = vtanh.pop %v429
    %v432 = vtanh.pop %v430
    %s433 = scalar_lea.vmem [#allocation3], 16
    %434 = vst [vmem:[%s433] sm:$0xff] %v431
    %s435 = scalar_lea.vmem [#allocation3], 96
    %436 = vst [vmem:[%s435 + $0x8] sm:$0xff] %v432
    %v437 = vld [vmem:[%s162] sm:$0xff]
    %v438 = vld [vmem:[%s162 + $0x8] sm:$0xff]
    %v439 = vpack.c.bf16 %v431, %v431
    %v440 = vpack.c.bf16 %v432, %v432
    %v441 = vld [vmem:[%s2] sm:$0xff]
    %v442 = vld [vmem:[%s2 + $0x8] sm:$0xff]
    %v443 = vld [vmem:[%s2 + $0x10] sm:$0xff]
    %v444 = vld [vmem:[%s2 + $0x18] sm:$0xff]
    %v445 = vld [vmem:[%s2 + $0x20] sm:$0xff]
    %v446 = vld [vmem:[%s2 + $0x28] sm:$0xff]
    %v447 = vld [vmem:[%s2 + $0x30] sm:$0xff]
    %v448 = vld [vmem:[%s2 + $0x38] sm:$0xff]
    %v449 = vld [vmem:[%s2 + $0x40] sm:$0xff]
    %v450 = vld [vmem:[%s2 + $0x48] sm:$0xff]
    %v451 = vld [vmem:[%s2 + $0x50] sm:$0xff]
    %v452 = vld [vmem:[%s2 + $0x58] sm:$0xff]
    %v453 = vld [vmem:[%s2 + $0x60] sm:$0xff]
    %v454 = vld [vmem:[%s2 + $0x68] sm:$0xff]
    %v455 = vld [vmem:[%s2 + $0x70] sm:$0xff]
    %v456 = vld [vmem:[%s2 + $0x78] sm:$0xff]
    %v457 = vld [vmem:[%s2 + $0x80] sm:$0xff]
    %v458 = vld [vmem:[%s2 + $0x88] sm:$0xff]
    %v459 = vld [vmem:[%s2 + $0x90] sm:$0xff]
    %v460 = vld [vmem:[%s2 + $0x98] sm:$0xff]
    %v461 = vld [vmem:[%s2 + $0xa0] sm:$0xff]
    %v462 = vld [vmem:[%s2 + $0xa8] sm:$0xff]
    %v463 = vld [vmem:[%s2 + $0xb0] sm:$0xff]
    %v464 = vld [vmem:[%s2 + $0xb8] sm:$0xff]
    %v465 = vld [vmem:[%s2 + $0xc0] sm:$0xff]
    %v466 = vld [vmem:[%s2 + $0xc8] sm:$0xff]
    %v467 = vld [vmem:[%s2 + $0xd0] sm:$0xff]
    %v468 = vld [vmem:[%s2 + $0xd8] sm:$0xff]
    %v469 = vld [vmem:[%s2 + $0xe0] sm:$0xff]
    %v470 = vld [vmem:[%s2 + $0xe8] sm:$0xff]
    %v471 = vld [vmem:[%s2 + $0xf0] sm:$0xff]
    %v472 = vld [vmem:[%s2 + $0xf8] sm:$0xff]
    %v505 = vunpack.c.l.b16 %v441
    %v506 = vunpack.c.h.b16 %v441
    %v507 = vunpack.c.l.b16 %v442
    %v508 = vunpack.c.h.b16 %v442
    %v509 = vunpack.c.l.b16 %v443
    %v510 = vunpack.c.h.b16 %v443
    %v511 = vunpack.c.l.b16 %v444
    %v512 = vunpack.c.h.b16 %v444
    %v513 = vunpack.c.l.b16 %v445
    %v514 = vunpack.c.h.b16 %v445
    %v515 = vunpack.c.l.b16 %v446
    %v516 = vunpack.c.h.b16 %v446
    %v517 = vunpack.c.l.b16 %v447
    %v518 = vunpack.c.h.b16 %v447
    %v519 = vunpack.c.l.b16 %v448
    %v520 = vunpack.c.h.b16 %v448
    %v521 = vunpack.c.l.b16 %v449
    %v522 = vunpack.c.h.b16 %v449
    %v523 = vunpack.c.l.b16 %v450
    %v524 = vunpack.c.h.b16 %v450
    %v525 = vunpack.c.l.b16 %v451
    %v526 = vunpack.c.h.b16 %v451
    %v527 = vunpack.c.l.b16 %v452
    %v528 = vunpack.c.h.b16 %v452
    %v529 = vunpack.c.l.b16 %v453
    %v530 = vunpack.c.h.b16 %v453
    %v531 = vunpack.c.l.b16 %v454
    %v532 = vunpack.c.h.b16 %v454
    %v533 = vunpack.c.l.b16 %v455
    %v534 = vunpack.c.h.b16 %v455
    %v535 = vunpack.c.l.b16 %v456
    %v536 = vunpack.c.h.b16 %v456
    %v537 = vunpack.c.l.b16 %v457
    %v538 = vunpack.c.h.b16 %v457
    %v539 = vunpack.c.l.b16 %v458
    %v540 = vunpack.c.h.b16 %v458
    %v541 = vunpack.c.l.b16 %v459
    %v542 = vunpack.c.h.b16 %v459
    %v543 = vunpack.c.l.b16 %v460
    %v544 = vunpack.c.h.b16 %v460
    %v545 = vunpack.c.l.b16 %v461
    %v546 = vunpack.c.h.b16 %v461
    %v547 = vunpack.c.l.b16 %v462
    %v548 = vunpack.c.h.b16 %v462
    %v549 = vunpack.c.l.b16 %v463
    %v550 = vunpack.c.h.b16 %v463
    %v551 = vunpack.c.l.b16 %v464
    %v552 = vunpack.c.h.b16 %v464
    %v553 = vunpack.c.l.b16 %v465
    %v554 = vunpack.c.h.b16 %v465
    %v555 = vunpack.c.l.b16 %v466
    %v556 = vunpack.c.h.b16 %v466
    %v557 = vunpack.c.l.b16 %v467
    %v558 = vunpack.c.h.b16 %v467
    %v559 = vunpack.c.l.b16 %v468
    %v560 = vunpack.c.h.b16 %v468
    %v561 = vunpack.c.l.b16 %v469
    %v562 = vunpack.c.h.b16 %v469
    %v563 = vunpack.c.l.b16 %v470
    %v564 = vunpack.c.h.b16 %v470
    %v565 = vunpack.c.l.b16 %v471
    %v566 = vunpack.c.h.b16 %v471
    %v567 = vunpack.c.l.b16 %v472
    %v568 = vunpack.c.h.b16 %v472
    %v569 = vpack.c.b16 %v507, %v505
    %v570 = vpack.c.b16 %v508, %v506
    %v571 = vpack.c.b16 %v511, %v509
    %v572 = vpack.c.b16 %v512, %v510
    %v573 = vpack.c.b16 %v515, %v513
    %v574 = vpack.c.b16 %v516, %v514
    %v575 = vpack.c.b16 %v519, %v517
    %v576 = vpack.c.b16 %v520, %v518
    %v577 = vpack.c.b16 %v523, %v521
    %v578 = vpack.c.b16 %v524, %v522
    %v579 = vpack.c.b16 %v527, %v525
    %v580 = vpack.c.b16 %v528, %v526
    %v581 = vpack.c.b16 %v531, %v529
    %v582 = vpack.c.b16 %v532, %v530
    %v583 = vpack.c.b16 %v535, %v533
    %v584 = vpack.c.b16 %v536, %v534
    %v585 = vpack.c.b16 %v539, %v537
    %v586 = vpack.c.b16 %v540, %v538
    %v587 = vpack.c.b16 %v543, %v541
    %v588 = vpack.c.b16 %v544, %v542
    %v589 = vpack.c.b16 %v547, %v545
    %v590 = vpack.c.b16 %v548, %v546
    %v591 = vpack.c.b16 %v551, %v549
    %v592 = vpack.c.b16 %v552, %v550
    %v593 = vpack.c.b16 %v555, %v553
    %v594 = vpack.c.b16 %v556, %v554
    %v595 = vpack.c.b16 %v559, %v557
    %v596 = vpack.c.b16 %v560, %v558
    %v597 = vpack.c.b16 %v563, %v561
    %v598 = vpack.c.b16 %v564, %v562
    %v599 = vpack.c.b16 %v567, %v565
    %v600 = vpack.c.b16 %v568, %v566
    %633 = vmatpush.bf16.msra.mxu0 %v583
    %634 = vmatpush.bf16.msra.mxu0 %v581
    %635 = vmatpush.bf16.msra.mxu0 %v579
    %636 = vmatpush.bf16.msra.mxu0 %v577
    %637 = vmatpush.bf16.msra.mxu0 %v575
    %638 = vmatpush.bf16.msra.mxu0 %v573
    %639 = vmatpush.bf16.msra.mxu0 %v571
    %640 = vmatpush.bf16.msra.mxu0 %v569
    %641 = vmatmul.bf16.gmra.mxu0 %v439
    %v642 = vpop.f32.mrf.mxu0
    %v643 = vadd.f32 0.0, %v642
    %v644 = vpop.f32.mrf.mxu0
    %645 = vdwg.mxu0
    %646 = vmatpush.bf16.msra.mxu0 %v599
    %647 = vmatpush.bf16.msra.mxu0 %v597
    %648 = vmatpush.bf16.msra.mxu0 %v595
    %649 = vmatpush.bf16.msra.mxu0 %v593
    %650 = vmatpush.bf16.msra.mxu0 %v591
    %651 = vmatpush.bf16.msra.mxu0 %v589
    %652 = vmatpush.bf16.msra.mxu0 %v587
    %653 = vmatpush.bf16.msra.mxu0 %v585
    %654 = vmatmul.bf16.gmra.mxu0 %v440
    %v655 = vpop.f32.mrf.mxu0
    %v656 = vadd.f32 %v643, %v655
    %v657 = vpop.f32.mrf.mxu0
    %658 = vdwg.mxu0
    %659 = vmatpush.bf16.msra.mxu0 %v584
    %660 = vmatpush.bf16.msra.mxu0 %v582
    %661 = vmatpush.bf16.msra.mxu0 %v580
    %662 = vmatpush.bf16.msra.mxu0 %v578
    %663 = vmatpush.bf16.msra.mxu0 %v576
    %664 = vmatpush.bf16.msra.mxu0 %v574
    %665 = vmatpush.bf16.msra.mxu0 %v572
    %666 = vmatpush.bf16.msra.mxu0 %v570
    %667 = vmatmul.bf16.gmra.mxu0 %v439
    %v668 = vpop.f32.mrf.mxu0
    %v669 = vadd.f32 0.0, %v668
    %v670 = vpop.f32.mrf.mxu0
    %671 = vdwg.mxu0
    %672 = vmatpush.bf16.msra.mxu0 %v600
    %673 = vmatpush.bf16.msra.mxu0 %v598
    %674 = vmatpush.bf16.msra.mxu0 %v596
    %675 = vmatpush.bf16.msra.mxu0 %v594
    %676 = vmatpush.bf16.msra.mxu0 %v592
    %677 = vmatpush.bf16.msra.mxu0 %v590
    %678 = vmatpush.bf16.msra.mxu0 %v588
    %679 = vmatpush.bf16.msra.mxu0 %v586
    %680 = vmatmul.bf16.gmra.mxu0 %v440
    %v681 = vpop.f32.mrf.mxu0
    %v682 = vadd.f32 %v669, %v681
    %v683 = vpop.f32.mrf.mxu0
    %684 = vdwg.mxu0
    %v685 = vadd.f32 %v437, %v656
    %v686 = vadd.f32 %v438, %v682
    %v687 = vtanh.pop %v685
    %v688 = vtanh.pop %v686
    %s689 = scalar_lea.vmem [#allocation3], 32
    %690 = vst [vmem:[%s689] sm:$0xff] %v687
    %s691 = scalar_lea.vmem [#allocation3], 80
    %692 = vst [vmem:[%s691 + $0x8] sm:$0xff] %v688
    %v693 = vld [vmem:[%s164] sm:$0xff]
    %v694 = vld [vmem:[%s164 + $0x8] sm:$0xff]
    %v695 = vpack.c.bf16 %v687, %v687
    %v696 = vpack.c.bf16 %v688, %v688
    %v697 = vld [vmem:[%s2] sm:$0xff]
    %v698 = vld [vmem:[%s2 + $0x8] sm:$0xff]
    %v699 = vld [vmem:[%s2 + $0x10] sm:$0xff]
    %v700 = vld [vmem:[%s2 + $0x18] sm:$0xff]
    %v701 = vld [vmem:[%s2 + $0x20] sm:$0xff]
    %v702 = vld [vmem:[%s2 + $0x28] sm:$0xff]
    %v703 = vld [vmem:[%s2 + $0x30] sm:$0xff]
    %v704 = vld [vmem:[%s2 + $0x38] sm:$0xff]
    %v705 = vld [vmem:[%s2 + $0x40] sm:$0xff]
    %v706 = vld [vmem:[%s2 + $0x48] sm:$0xff]
    %v707 = vld [vmem:[%s2 + $0x50] sm:$0xff]
    %v708 = vld [vmem:[%s2 + $0x58] sm:$0xff]
    %v709 = vld [vmem:[%s2 + $0x60] sm:$0xff]
    %v710 = vld [vmem:[%s2 + $0x68] sm:$0xff]
    %v711 = vld [vmem:[%s2 + $0x70] sm:$0xff]
    %v712 = vld [vmem:[%s2 + $0x78] sm:$0xff]
    %v713 = vld [vmem:[%s2 + $0x80] sm:$0xff]
    %v714 = vld [vmem:[%s2 + $0x88] sm:$0xff]
    %v715 = vld [vmem:[%s2 + $0x90] sm:$0xff]
    %v716 = vld [vmem:[%s2 + $0x98] sm:$0xff]
    %v717 = vld [vmem:[%s2 + $0xa0] sm:$0xff]
    %v718 = vld [vmem:[%s2 + $0xa8] sm:$0xff]
    %v719 = vld [vmem:[%s2 + $0xb0] sm:$0xff]
    %v720 = vld [vmem:[%s2 + $0xb8] sm:$0xff]
    %v721 = vld [vmem:[%s2 + $0xc0] sm:$0xff]
    %v722 = vld [vmem:[%s2 + $0xc8] sm:$0xff]
    %v723 = vld [vmem:[%s2 + $0xd0] sm:$0xff]
    %v724 = vld [vmem:[%s2 + $0xd8] sm:$0xff]
    %v725 = vld [vmem:[%s2 + $0xe0] sm:$0xff]
    %v726 = vld [vmem:[%s2 + $0xe8] sm:$0xff]
    %v727 = vld [vmem:[%s2 + $0xf0] sm:$0xff]
    %v728 = vld [vmem:[%s2 + $0xf8] sm:$0xff]
    %v761 = vunpack.c.l.b16 %v697
    %v762 = vunpack.c.h.b16 %v697
    %v763 = vunpack.c.l.b16 %v698
    %v764 = vunpack.c.h.b16 %v698
    %v765 = vunpack.c.l.b16 %v699
    %v766 = vunpack.c.h.b16 %v699
    %v767 = vunpack.c.l.b16 %v700
    %v768 = vunpack.c.h.b16 %v700
    %v769 = vunpack.c.l.b16 %v701
    %v770 = vunpack.c.h.b16 %v701
    %v771 = vunpack.c.l.b16 %v702
    %v772 = vunpack.c.h.b16 %v702
    %v773 = vunpack.c.l.b16 %v703
    %v774 = vunpack.c.h.b16 %v703
    %v775 = vunpack.c.l.b16 %v704
    %v776 = vunpack.c.h.b16 %v704
    %v777 = vunpack.c.l.b16 %v705
    %v778 = vunpack.c.h.b16 %v705
    %v779 = vunpack.c.l.b16 %v706
    %v780 = vunpack.c.h.b16 %v706
    %v781 = vunpack.c.l.b16 %v707
    %v782 = vunpack.c.h.b16 %v707
    %v783 = vunpack.c.l.b16 %v708
    %v784 = vunpack.c.h.b16 %v708
    %v785 = vunpack.c.l.b16 %v709
    %v786 = vunpack.c.h.b16 %v709
    %v787 = vunpack.c.l.b16 %v710
    %v788 = vunpack.c.h.b16 %v710
    %v789 = vunpack.c.l.b16 %v711
    %v790 = vunpack.c.h.b16 %v711
    %v791 = vunpack.c.l.b16 %v712
    %v792 = vunpack.c.h.b16 %v712
    %v793 = vunpack.c.l.b16 %v713
    %v794 = vunpack.c.h.b16 %v713
    %v795 = vunpack.c.l.b16 %v714
    %v796 = vunpack.c.h.b16 %v714
    %v797 = vunpack.c.l.b16 %v715
    %v798 = vunpack.c.h.b16 %v715
    %v799 = vunpack.c.l.b16 %v716
    %v800 = vunpack.c.h.b16 %v716
    %v801 = vunpack.c.l.b16 %v717
    %v802 = vunpack.c.h.b16 %v717
    %v803 = vunpack.c.l.b16 %v718
    %v804 = vunpack.c.h.b16 %v718
    %v805 = vunpack.c.l.b16 %v719
    %v806 = vunpack.c.h.b16 %v719
    %v807 = vunpack.c.l.b16 %v720
    %v808 = vunpack.c.h.b16 %v720
    %v809 = vunpack.c.l.b16 %v721
    %v810 = vunpack.c.h.b16 %v721
    %v811 = vunpack.c.l.b16 %v722
    %v812 = vunpack.c.h.b16 %v722
    %v813 = vunpack.c.l.b16 %v723
    %v814 = vunpack.c.h.b16 %v723
    %v815 = vunpack.c.l.b16 %v724
    %v816 = vunpack.c.h.b16 %v724
    %v817 = vunpack.c.l.b16 %v725
    %v818 = vunpack.c.h.b16 %v725
    %v819 = vunpack.c.l.b16 %v726
    %v820 = vunpack.c.h.b16 %v726
    %v821 = vunpack.c.l.b16 %v727
    %v822 = vunpack.c.h.b16 %v727
    %v823 = vunpack.c.l.b16 %v728
    %v824 = vunpack.c.h.b16 %v728
    %v825 = vpack.c.b16 %v763, %v761
    %v826 = vpack.c.b16 %v764, %v762
    %v827 = vpack.c.b16 %v767, %v765
    %v828 = vpack.c.b16 %v768, %v766
    %v829 = vpack.c.b16 %v771, %v769
    %v830 = vpack.c.b16 %v772, %v770
    %v831 = vpack.c.b16 %v775, %v773
    %v832 = vpack.c.b16 %v776, %v774
    %v833 = vpack.c.b16 %v779, %v777
    %v834 = vpack.c.b16 %v780, %v778
    %v835 = vpack.c.b16 %v783, %v781
    %v836 = vpack.c.b16 %v784, %v782
    %v837 = vpack.c.b16 %v787, %v785
    %v838 = vpack.c.b16 %v788, %v786
    %v839 = vpack.c.b16 %v791, %v789
    %v840 = vpack.c.b16 %v792, %v790
    %v841 = vpack.c.b16 %v795, %v793
    %v842 = vpack.c.b16 %v796, %v794
    %v843 = vpack.c.b16 %v799, %v797
    %v844 = vpack.c.b16 %v800, %v798
    %v845 = vpack.c.b16 %v803, %v801
    %v846 = vpack.c.b16 %v804, %v802
    %v847 = vpack.c.b16 %v807, %v805
    %v848 = vpack.c.b16 %v808, %v806
    %v849 = vpack.c.b16 %v811, %v809
    %v850 = vpack.c.b16 %v812, %v810
    %v851 = vpack.c.b16 %v815, %v813
    %v852 = vpack.c.b16 %v816, %v814
    %v853 = vpack.c.b16 %v819, %v817
    %v854 = vpack.c.b16 %v820, %v818
    %v855 = vpack.c.b16 %v823, %v821
    %v856 = vpack.c.b16 %v824, %v822
    %889 = vmatpush.bf16.msra.mxu0 %v839
    %890 = vmatpush.bf16.msra.mxu0 %v837
    %891 = vmatpush.bf16.msra.mxu0 %v835
    %892 = vmatpush.bf16.msra.mxu0 %v833
    %893 = vmatpush.bf16.msra.mxu0 %v831
    %894 = vmatpush.bf16.msra.mxu0 %v829
    %895 = vmatpush.bf16.msra.mxu0 %v827
    %896 = vmatpush.bf16.msra.mxu0 %v825
    %897 = vmatmul.bf16.gmra.mxu0 %v695
    %v898 = vpop.f32.mrf.mxu0
    %v899 = vadd.f32 0.0, %v898
    %v900 = vpop.f32.mrf.mxu0
    %901 = vdwg.mxu0
    %902 = vmatpush.bf16.msra.mxu0 %v855
    %903 = vmatpush.bf16.msra.mxu0 %v853
    %904 = vmatpush.bf16.msra.mxu0 %v851
    %905 = vmatpush.bf16.msra.mxu0 %v849
    %906 = vmatpush.bf16.msra.mxu0 %v847
    %907 = vmatpush.bf16.msra.mxu0 %v845
    %908 = vmatpush.bf16.msra.mxu0 %v843
    %909 = vmatpush.bf16.msra.mxu0 %v841
    %910 = vmatmul.bf16.gmra.mxu0 %v696
    %v911 = vpop.f32.mrf.mxu0
    %v912 = vadd.f32 %v899, %v911
    %v913 = vpop.f32.mrf.mxu0
    %914 = vdwg.mxu0
    %915 = vmatpush.bf16.msra.mxu0 %v840
    %916 = vmatpush.bf16.msra.mxu0 %v838
    %917 = vmatpush.bf16.msra.mxu0 %v836
    %918 = vmatpush.bf16.msra.mxu0 %v834
    %919 = vmatpush.bf16.msra.mxu0 %v832
    %920 = vmatpush.bf16.msra.mxu0 %v830
    %921 = vmatpush.bf16.msra.mxu0 %v828
    %922 = vmatpush.bf16.msra.mxu0 %v826
    %923 = vmatmul.bf16.gmra.mxu0 %v695
    %v924 = vpop.f32.mrf.mxu0
    %v925 = vadd.f32 0.0, %v924
    %v926 = vpop.f32.mrf.mxu0
    %927 = vdwg.mxu0
    %928 = vmatpush.bf16.msra.mxu0 %v856
    %929 = vmatpush.bf16.msra.mxu0 %v854
    %930 = vmatpush.bf16.msra.mxu0 %v852
    %931 = vmatpush.bf16.msra.mxu0 %v850
    %932 = vmatpush.bf16.msra.mxu0 %v848
    %933 = vmatpush.bf16.msra.mxu0 %v846
    %934 = vmatpush.bf16.msra.mxu0 %v844
    %935 = vmatpush.bf16.msra.mxu0 %v842
    %936 = vmatmul.bf16.gmra.mxu0 %v696
    %v937 = vpop.f32.mrf.mxu0
    %v938 = vadd.f32 %v925, %v937
    %v939 = vpop.f32.mrf.mxu0
    %940 = vdwg.mxu0
    %v941 = vadd.f32 %v693, %v912
    %v942 = vadd.f32 %v694, %v938
    %v943 = vtanh.pop %v941
    %v944 = vtanh.pop %v942
    %s945 = scalar_lea.vmem [#allocation3], 48
    %946 = vst [vmem:[%s945] sm:$0xff] %v943
    %s947 = scalar_lea.vmem [#allocation3], 64
    %948 = vst [vmem:[%s947 + $0x8] sm:$0xff] %v944
    %v949 = vld [vmem:[%s166] sm:$0xff]
    %v950 = vld [vmem:[%s166 + $0x8] sm:$0xff]
    %v951 = vpack.c.bf16 %v943, %v943
    %v952 = vpack.c.bf16 %v944, %v944
    %v953 = vld [vmem:[%s2] sm:$0xff]
    %v954 = vld [vmem:[%s2 + $0x8] sm:$0xff]
    %v955 = vld [vmem:[%s2 + $0x10] sm:$0xff]
    %v956 = vld [vmem:[%s2 + $0x18] sm:$0xff]
    %v957 = vld [vmem:[%s2 + $0x20] sm:$0xff]
    %v958 = vld [vmem:[%s2 + $0x28] sm:$0xff]
    %v959 = vld [vmem:[%s2 + $0x30] sm:$0xff]
    %v960 = vld [vmem:[%s2 + $0x38] sm:$0xff]
    %v961 = vld [vmem:[%s2 + $0x40] sm:$0xff]
    %v962 = vld [vmem:[%s2 + $0x48] sm:$0xff]
    %v963 = vld [vmem:[%s2 + $0x50] sm:$0xff]
    %v964 = vld [vmem:[%s2 + $0x58] sm:$0xff]
    %v965 = vld [vmem:[%s2 + $0x60] sm:$0xff]
    %v966 = vld [vmem:[%s2 + $0x68] sm:$0xff]
    %v967 = vld [vmem:[%s2 + $0x70] sm:$0xff]
    %v968 = vld [vmem:[%s2 + $0x78] sm:$0xff]
    %v969 = vld [vmem:[%s2 + $0x80] sm:$0xff]
    %v970 = vld [vmem:[%s2 + $0x88] sm:$0xff]
    %v971 = vld [vmem:[%s2 + $0x90] sm:$0xff]
    %v972 = vld [vmem:[%s2 + $0x98] sm:$0xff]
    %v973 = vld [vmem:[%s2 + $0xa0] sm:$0xff]
    %v974 = vld [vmem:[%s2 + $0xa8] sm:$0xff]
    %v975 = vld [vmem:[%s2 + $0xb0] sm:$0xff]
    %v976 = vld [vmem:[%s2 + $0xb8] sm:$0xff]
    %v977 = vld [vmem:[%s2 + $0xc0] sm:$0xff]
    %v978 = vld [vmem:[%s2 + $0xc8] sm:$0xff]
    %v979 = vld [vmem:[%s2 + $0xd0] sm:$0xff]
    %v980 = vld [vmem:[%s2 + $0xd8] sm:$0xff]
    %v981 = vld [vmem:[%s2 + $0xe0] sm:$0xff]
    %v982 = vld [vmem:[%s2 + $0xe8] sm:$0xff]
    %v983 = vld [vmem:[%s2 + $0xf0] sm:$0xff]
    %v984 = vld [vmem:[%s2 + $0xf8] sm:$0xff]
    %v1017 = vunpack.c.l.b16 %v953
    %v1018 = vunpack.c.h.b16 %v953
    %v1019 = vunpack.c.l.b16 %v954
    %v1020 = vunpack.c.h.b16 %v954
    %v1021 = vunpack.c.l.b16 %v955
    %v1022 = vunpack.c.h.b16 %v955
    %v1023 = vunpack.c.l.b16 %v956
    %v1024 = vunpack.c.h.b16 %v956
    %v1025 = vunpack.c.l.b16 %v957
    %v1026 = vunpack.c.h.b16 %v957
    %v1027 = vunpack.c.l.b16 %v958
    %v1028 = vunpack.c.h.b16 %v958
    %v1029 = vunpack.c.l.b16 %v959
    %v1030 = vunpack.c.h.b16 %v959
    %v1031 = vunpack.c.l.b16 %v960
    %v1032 = vunpack.c.h.b16 %v960
    %v1033 = vunpack.c.l.b16 %v961
    %v1034 = vunpack.c.h.b16 %v961
    %v1035 = vunpack.c.l.b16 %v962
    %v1036 = vunpack.c.h.b16 %v962
    %v1037 = vunpack.c.l.b16 %v963
    %v1038 = vunpack.c.h.b16 %v963
    %v1039 = vunpack.c.l.b16 %v964
    %v1040 = vunpack.c.h.b16 %v964
    %v1041 = vunpack.c.l.b16 %v965
    %v1042 = vunpack.c.h.b16 %v965
    %v1043 = vunpack.c.l.b16 %v966
    %v1044 = vunpack.c.h.b16 %v966
    %v1045 = vunpack.c.l.b16 %v967
    %v1046 = vunpack.c.h.b16 %v967
    %v1047 = vunpack.c.l.b16 %v968
    %v1048 = vunpack.c.h.b16 %v968
    %v1049 = vunpack.c.l.b16 %v969
    %v1050 = vunpack.c.h.b16 %v969
    %v1051 = vunpack.c.l.b16 %v970
    %v1052 = vunpack.c.h.b16 %v970
    %v1053 = vunpack.c.l.b16 %v971
    %v1054 = vunpack.c.h.b16 %v971
    %v1055 = vunpack.c.l.b16 %v972
    %v1056 = vunpack.c.h.b16 %v972
    %v1057 = vunpack.c.l.b16 %v973
    %v1058 = vunpack.c.h.b16 %v973
    %v1059 = vunpack.c.l.b16 %v974
    %v1060 = vunpack.c.h.b16 %v974
    %v1061 = vunpack.c.l.b16 %v975
    %v1062 = vunpack.c.h.b16 %v975
    %v1063 = vunpack.c.l.b16 %v976
    %v1064 = vunpack.c.h.b16 %v976
    %v1065 = vunpack.c.l.b16 %v977
    %v1066 = vunpack.c.h.b16 %v977
    %v1067 = vunpack.c.l.b16 %v978
    %v1068 = vunpack.c.h.b16 %v978
    %v1069 = vunpack.c.l.b16 %v979
    %v1070 = vunpack.c.h.b16 %v979
    %v1071 = vunpack.c.l.b16 %v980
    %v1072 = vunpack.c.h.b16 %v980
    %v1073 = vunpack.c.l.b16 %v981
    %v1074 = vunpack.c.h.b16 %v981
    %v1075 = vunpack.c.l.b16 %v982
    %v1076 = vunpack.c.h.b16 %v982
    %v1077 = vunpack.c.l.b16 %v983
    %v1078 = vunpack.c.h.b16 %v983
    %v1079 = vunpack.c.l.b16 %v984
    %v1080 = vunpack.c.h.b16 %v984
    %v1081 = vpack.c.b16 %v1019, %v1017
    %v1082 = vpack.c.b16 %v1020, %v1018
    %v1083 = vpack.c.b16 %v1023, %v1021
    %v1084 = vpack.c.b16 %v1024, %v1022
    %v1085 = vpack.c.b16 %v1027, %v1025
    %v1086 = vpack.c.b16 %v1028, %v1026
    %v1087 = vpack.c.b16 %v1031, %v1029
    %v1088 = vpack.c.b16 %v1032, %v1030
    %v1089 = vpack.c.b16 %v1035, %v1033
    %v1090 = vpack.c.b16 %v1036, %v1034
    %v1091 = vpack.c.b16 %v1039, %v1037
    %v1092 = vpack.c.b16 %v1040, %v1038
    %v1093 = vpack.c.b16 %v1043, %v1041
    %v1094 = vpack.c.b16 %v1044, %v1042
    %v1095 = vpack.c.b16 %v1047, %v1045
    %v1096 = vpack.c.b16 %v1048, %v1046
    %v1097 = vpack.c.b16 %v1051, %v1049
    %v1098 = vpack.c.b16 %v1052, %v1050
    %v1099 = vpack.c.b16 %v1055, %v1053
    %v1100 = vpack.c.b16 %v1056, %v1054
    %v1101 = vpack.c.b16 %v1059, %v1057
    %v1102 = vpack.c.b16 %v1060, %v1058
    %v1103 = vpack.c.b16 %v1063, %v1061
    %v1104 = vpack.c.b16 %v1064, %v1062
    %v1105 = vpack.c.b16 %v1067, %v1065
    %v1106 = vpack.c.b16 %v1068, %v1066
    %v1107 = vpack.c.b16 %v1071, %v1069
    %v1108 = vpack.c.b16 %v1072, %v1070
    %v1109 = vpack.c.b16 %v1075, %v1073
    %v1110 = vpack.c.b16 %v1076, %v1074
    %v1111 = vpack.c.b16 %v1079, %v1077
    %v1112 = vpack.c.b16 %v1080, %v1078
    %1145 = vmatpush.bf16.msra.mxu0 %v1095
    %1146 = vmatpush.bf16.msra.mxu0 %v1093
    %1147 = vmatpush.bf16.msra.mxu0 %v1091
    %1148 = vmatpush.bf16.msra.mxu0 %v1089
    %1149 = vmatpush.bf16.msra.mxu0 %v1087
    %1150 = vmatpush.bf16.msra.mxu0 %v1085
    %1151 = vmatpush.bf16.msra.mxu0 %v1083
    %1152 = vmatpush.bf16.msra.mxu0 %v1081
    %1153 = vmatmul.bf16.gmra.mxu0 %v951
    %v1154 = vpop.f32.mrf.mxu0
    %v1155 = vadd.f32 0.0, %v1154
    %v1156 = vpop.f32.mrf.mxu0
    %1157 = vdwg.mxu0
    %1158 = vmatpush.bf16.msra.mxu0 %v1111
    %1159 = vmatpush.bf16.msra.mxu0 %v1109
    %1160 = vmatpush.bf16.msra.mxu0 %v1107
    %1161 = vmatpush.bf16.msra.mxu0 %v1105
    %1162 = vmatpush.bf16.msra.mxu0 %v1103
    %1163 = vmatpush.bf16.msra.mxu0 %v1101
    %1164 = vmatpush.bf16.msra.mxu0 %v1099
    %1165 = vmatpush.bf16.msra.mxu0 %v1097
    %1166 = vmatmul.bf16.gmra.mxu0 %v952
    %v1167 = vpop.f32.mrf.mxu0
    %v1168 = vadd.f32 %v1155, %v1167
    %v1169 = vpop.f32.mrf.mxu0
    %1170 = vdwg.mxu0
    %1171 = vmatpush.bf16.msra.mxu0 %v1096
    %1172 = vmatpush.bf16.msra.mxu0 %v1094
    %1173 = vmatpush.bf16.msra.mxu0 %v1092
    %1174 = vmatpush.bf16.msra.mxu0 %v1090
    %1175 = vmatpush.bf16.msra.mxu0 %v1088
    %1176 = vmatpush.bf16.msra.mxu0 %v1086
    %1177 = vmatpush.bf16.msra.mxu0 %v1084
    %1178 = vmatpush.bf16.msra.mxu0 %v1082
    %1179 = vmatmul.bf16.gmra.mxu0 %v951
    %v1180 = vpop.f32.mrf.mxu0
    %v1181 = vadd.f32 0.0, %v1180
    %v1182 = vpop.f32.mrf.mxu0
    %1183 = vdwg.mxu0
    %1184 = vmatpush.bf16.msra.mxu0 %v1112
    %1185 = vmatpush.bf16.msra.mxu0 %v1110
    %1186 = vmatpush.bf16.msra.mxu0 %v1108
    %1187 = vmatpush.bf16.msra.mxu0 %v1106
    %1188 = vmatpush.bf16.msra.mxu0 %v1104
    %1189 = vmatpush.bf16.msra.mxu0 %v1102
    %1190 = vmatpush.bf16.msra.mxu0 %v1100
    %1191 = vmatpush.bf16.msra.mxu0 %v1098
    %1192 = vmatmul.bf16.gmra.mxu0 %v952
    %v1193 = vpop.f32.mrf.mxu0
    %v1194 = vadd.f32 %v1181, %v1193
    %v1195 = vpop.f32.mrf.mxu0
    %1196 = vdwg.mxu0
    %v1197 = vadd.f32 %v949, %v1168
    %v1198 = vadd.f32 %v950, %v1194
    %v1199 = vtanh.pop %v1197
    %v1200 = vtanh.pop %v1198
    %1201 = vst [vmem:[%s947] sm:$0xff] %v1199
    %1202 = vst [vmem:[%s945 + $0x8] sm:$0xff] %v1200
    %v1203 = vld [vmem:[%s168] sm:$0xff]
    %v1204 = vld [vmem:[%s168 + $0x8] sm:$0xff]
    %v1205 = vpack.c.bf16 %v1199, %v1199
    %v1206 = vpack.c.bf16 %v1200, %v1200
    %v1207 = vld [vmem:[%s2] sm:$0xff]
    %v1208 = vld [vmem:[%s2 + $0x8] sm:$0xff]
    %v1209 = vld [vmem:[%s2 + $0x10] sm:$0xff]
    %v1210 = vld [vmem:[%s2 + $0x18] sm:$0xff]
    %v1211 = vld [vmem:[%s2 + $0x20] sm:$0xff]
    %v1212 = vld [vmem:[%s2 + $0x28] sm:$0xff]
    %v1213 = vld [vmem:[%s2 + $0x30] sm:$0xff]
    %v1214 = vld [vmem:[%s2 + $0x38] sm:$0xff]
    %v1215 = vld [vmem:[%s2 + $0x40] sm:$0xff]
    %v1216 = vld [vmem:[%s2 + $0x48] sm:$0xff]
    %v1217 = vld [vmem:[%s2 + $0x50] sm:$0xff]
    %v1218 = vld [vmem:[%s2 + $0x58] sm:$0xff]
    %v1219 = vld [vmem:[%s2 + $0x60] sm:$0xff]
    %v1220 = vld [vmem:[%s2 + $0x68] sm:$0xff]
    %v1221 = vld [vmem:[%s2 + $0x70] sm:$0xff]
    %v1222 = vld [vmem:[%s2 + $0x78] sm:$0xff]
    %v1223 = vld [vmem:[%s2 + $0x80] sm:$0xff]
    %v1224 = vld [vmem:[%s2 + $0x88] sm:$0xff]
    %v1225 = vld [vmem:[%s2 + $0x90] sm:$0xff]
    %v1226 = vld [vmem:[%s2 + $0x98] sm:$0xff]
    %v1227 = vld [vmem:[%s2 + $0xa0] sm:$0xff]
    %v1228 = vld [vmem:[%s2 + $0xa8] sm:$0xff]
    %v1229 = vld [vmem:[%s2 + $0xb0] sm:$0xff]
    %v1230 = vld [vmem:[%s2 + $0xb8] sm:$0xff]
    %v1231 = vld [vmem:[%s2 + $0xc0] sm:$0xff]
    %v1232 = vld [vmem:[%s2 + $0xc8] sm:$0xff]
    %v1233 = vld [vmem:[%s2 + $0xd0] sm:$0xff]
    %v1234 = vld [vmem:[%s2 + $0xd8] sm:$0xff]
    %v1235 = vld [vmem:[%s2 + $0xe0] sm:$0xff]
    %v1236 = vld [vmem:[%s2 + $0xe8] sm:$0xff]
    %v1237 = vld [vmem:[%s2 + $0xf0] sm:$0xff]
    %v1238 = vld [vmem:[%s2 + $0xf8] sm:$0xff]
    %v1271 = vunpack.c.l.b16 %v1207
    %v1272 = vunpack.c.h.b16 %v1207
    %v1273 = vunpack.c.l.b16 %v1208
    %v1274 = vunpack.c.h.b16 %v1208
    %v1275 = vunpack.c.l.b16 %v1209
    %v1276 = vunpack.c.h.b16 %v1209
    %v1277 = vunpack.c.l.b16 %v1210
    %v1278 = vunpack.c.h.b16 %v1210
    %v1279 = vunpack.c.l.b16 %v1211
    %v1280 = vunpack.c.h.b16 %v1211
    %v1281 = vunpack.c.l.b16 %v1212
    %v1282 = vunpack.c.h.b16 %v1212
    %v1283 = vunpack.c.l.b16 %v1213
    %v1284 = vunpack.c.h.b16 %v1213
    %v1285 = vunpack.c.l.b16 %v1214
    %v1286 = vunpack.c.h.b16 %v1214
    %v1287 = vunpack.c.l.b16 %v1215
    %v1288 = vunpack.c.h.b16 %v1215
    %v1289 = vunpack.c.l.b16 %v1216
    %v1290 = vunpack.c.h.b16 %v1216
    %v1291 = vunpack.c.l.b16 %v1217
    %v1292 = vunpack.c.h.b16 %v1217
    %v1293 = vunpack.c.l.b16 %v1218
    %v1294 = vunpack.c.h.b16 %v1218
    %v1295 = vunpack.c.l.b16 %v1219
    %v1296 = vunpack.c.h.b16 %v1219
    %v1297 = vunpack.c.l.b16 %v1220
    %v1298 = vunpack.c.h.b16 %v1220
    %v1299 = vunpack.c.l.b16 %v1221
    %v1300 = vunpack.c.h.b16 %v1221
    %v1301 = vunpack.c.l.b16 %v1222
    %v1302 = vunpack.c.h.b16 %v1222
    %v1303 = vunpack.c.l.b16 %v1223
    %v1304 = vunpack.c.h.b16 %v1223
    %v1305 = vunpack.c.l.b16 %v1224
    %v1306 = vunpack.c.h.b16 %v1224
    %v1307 = vunpack.c.l.b16 %v1225
    %v1308 = vunpack.c.h.b16 %v1225
    %v1309 = vunpack.c.l.b16 %v1226
    %v1310 = vunpack.c.h.b16 %v1226
    %v1311 = vunpack.c.l.b16 %v1227
    %v1312 = vunpack.c.h.b16 %v1227
    %v1313 = vunpack.c.l.b16 %v1228
    %v1314 = vunpack.c.h.b16 %v1228
    %v1315 = vunpack.c.l.b16 %v1229
    %v1316 = vunpack.c.h.b16 %v1229
    %v1317 = vunpack.c.l.b16 %v1230
    %v1318 = vunpack.c.h.b16 %v1230
    %v1319 = vunpack.c.l.b16 %v1231
    %v1320 = vunpack.c.h.b16 %v1231
    %v1321 = vunpack.c.l.b16 %v1232
    %v1322 = vunpack.c.h.b16 %v1232
    %v1323 = vunpack.c.l.b16 %v1233
    %v1324 = vunpack.c.h.b16 %v1233
    %v1325 = vunpack.c.l.b16 %v1234
    %v1326 = vunpack.c.h.b16 %v1234
    %v1327 = vunpack.c.l.b16 %v1235
    %v1328 = vunpack.c.h.b16 %v1235
    %v1329 = vunpack.c.l.b16 %v1236
    %v1330 = vunpack.c.h.b16 %v1236
    %v1331 = vunpack.c.l.b16 %v1237
    %v1332 = vunpack.c.h.b16 %v1237
    %v1333 = vunpack.c.l.b16 %v1238
    %v1334 = vunpack.c.h.b16 %v1238
    %v1335 = vpack.c.b16 %v1273, %v1271
    %v1336 = vpack.c.b16 %v1274, %v1272
    %v1337 = vpack.c.b16 %v1277, %v1275
    %v1338 = vpack.c.b16 %v1278, %v1276
    %v1339 = vpack.c.b16 %v1281, %v1279
    %v1340 = vpack.c.b16 %v1282, %v1280
    %v1341 = vpack.c.b16 %v1285, %v1283
    %v1342 = vpack.c.b16 %v1286, %v1284
    %v1343 = vpack.c.b16 %v1289, %v1287
    %v1344 = vpack.c.b16 %v1290, %v1288
    %v1345 = vpack.c.b16 %v1293, %v1291
    %v1346 = vpack.c.b16 %v1294, %v1292
    %v1347 = vpack.c.b16 %v1297, %v1295
    %v1348 = vpack.c.b16 %v1298, %v1296
    %v1349 = vpack.c.b16 %v1301, %v1299
    %v1350 = vpack.c.b16 %v1302, %v1300
    %v1351 = vpack.c.b16 %v1305, %v1303
    %v1352 = vpack.c.b16 %v1306, %v1304
    %v1353 = vpack.c.b16 %v1309, %v1307
    %v1354 = vpack.c.b16 %v1310, %v1308
    %v1355 = vpack.c.b16 %v1313, %v1311
    %v1356 = vpack.c.b16 %v1314, %v1312
    %v1357 = vpack.c.b16 %v1317, %v1315
    %v1358 = vpack.c.b16 %v1318, %v1316
    %v1359 = vpack.c.b16 %v1321, %v1319
    %v1360 = vpack.c.b16 %v1322, %v1320
    %v1361 = vpack.c.b16 %v1325, %v1323
    %v1362 = vpack.c.b16 %v1326, %v1324
    %v1363 = vpack.c.b16 %v1329, %v1327
    %v1364 = vpack.c.b16 %v1330, %v1328
    %v1365 = vpack.c.b16 %v1333, %v1331
    %v1366 = vpack.c.b16 %v1334, %v1332
    %1399 = vmatpush.bf16.msra.mxu0 %v1349
    %1400 = vmatpush.bf16.msra.mxu0 %v1347
    %1401 = vmatpush.bf16.msra.mxu0 %v1345
    %1402 = vmatpush.bf16.msra.mxu0 %v1343
    %1403 = vmatpush.bf16.msra.mxu0 %v1341
    %1404 = vmatpush.bf16.msra.mxu0 %v1339
    %1405 = vmatpush.bf16.msra.mxu0 %v1337
    %1406 = vmatpush.bf16.msra.mxu0 %v1335
    %1407 = vmatmul.bf16.gmra.mxu0 %v1205
    %v1408 = vpop.f32.mrf.mxu0
    %v1409 = vadd.f32 0.0, %v1408
    %v1410 = vpop.f32.mrf.mxu0
    %1411 = vdwg.mxu0
    %1412 = vmatpush.bf16.msra.mxu0 %v1365
    %1413 = vmatpush.bf16.msra.mxu0 %v1363
    %1414 = vmatpush.bf16.msra.mxu0 %v1361
    %1415 = vmatpush.bf16.msra.mxu0 %v1359
    %1416 = vmatpush.bf16.msra.mxu0 %v1357
    %1417 = vmatpush.bf16.msra.mxu0 %v1355
    %1418 = vmatpush.bf16.msra.mxu0 %v1353
    %1419 = vmatpush.bf16.msra.mxu0 %v1351
    %1420 = vmatmul.bf16.gmra.mxu0 %v1206
    %v1421 = vpop.f32.mrf.mxu0
    %v1422 = vadd.f32 %v1409, %v1421
    %v1423 = vpop.f32.mrf.mxu0
    %1424 = vdwg.mxu0
    %1425 = vmatpush.bf16.msra.mxu0 %v1350
    %1426 = vmatpush.bf16.msra.mxu0 %v1348
    %1427 = vmatpush.bf16.msra.mxu0 %v1346
    %1428 = vmatpush.bf16.msra.mxu0 %v1344
    %1429 = vmatpush.bf16.msra.mxu0 %v1342
    %1430 = vmatpush.bf16.msra.mxu0 %v1340
    %1431 = vmatpush.bf16.msra.mxu0 %v1338
    %1432 = vmatpush.bf16.msra.mxu0 %v1336
    %1433 = vmatmul.bf16.gmra.mxu0 %v1205
    %v1434 = vpop.f32.mrf.mxu0
    %v1435 = vadd.f32 0.0, %v1434
    %v1436 = vpop.f32.mrf.mxu0
    %1437 = vdwg.mxu0
    %1438 = vmatpush.bf16.msra.mxu0 %v1366
    %1439 = vmatpush.bf16.msra.mxu0 %v1364
    %1440 = vmatpush.bf16.msra.mxu0 %v1362
    %1441 = vmatpush.bf16.msra.mxu0 %v1360
    %1442 = vmatpush.bf16.msra.mxu0 %v1358
    %1443 = vmatpush.bf16.msra.mxu0 %v1356
    %1444 = vmatpush.bf16.msra.mxu0 %v1354
    %1445 = vmatpush.bf16.msra.mxu0 %v1352
    %1446 = vmatmul.bf16.gmra.mxu0 %v1206
    %v1447 = vpop.f32.mrf.mxu0
    %v1448 = vadd.f32 %v1435, %v1447
    %v1449 = vpop.f32.mrf.mxu0
    %1450 = vdwg.mxu0
    %v1451 = vadd.f32 %v1203, %v1422
    %v1452 = vadd.f32 %v1204, %v1448
    %v1453 = vtanh.pop %v1451
    %v1454 = vtanh.pop %v1452
    %1455 = vst [vmem:[%s691] sm:$0xff] %v1453
    %1456 = vst [vmem:[%s689 + $0x8] sm:$0xff] %v1454
    %v1457 = vld [vmem:[%s170] sm:$0xff]
    %v1458 = vld [vmem:[%s170 + $0x8] sm:$0xff]
    %v1459 = vpack.c.bf16 %v1453, %v1453
    %v1460 = vpack.c.bf16 %v1454, %v1454
    %v1461 = vld [vmem:[%s2] sm:$0xff]
    %v1462 = vld [vmem:[%s2 + $0x8] sm:$0xff]
    %v1463 = vld [vmem:[%s2 + $0x10] sm:$0xff]
    %v1464 = vld [vmem:[%s2 + $0x18] sm:$0xff]
    %v1465 = vld [vmem:[%s2 + $0x20] sm:$0xff]
    %v1466 = vld [vmem:[%s2 + $0x28] sm:$0xff]
    %v1467 = vld [vmem:[%s2 + $0x30] sm:$0xff]
    %v1468 = vld [vmem:[%s2 + $0x38] sm:$0xff]
    %v1469 = vld [vmem:[%s2 + $0x40] sm:$0xff]
    %v1470 = vld [vmem:[%s2 + $0x48] sm:$0xff]
    %v1471 = vld [vmem:[%s2 + $0x50] sm:$0xff]
    %v1472 = vld [vmem:[%s2 + $0x58] sm:$0xff]
    %v1473 = vld [vmem:[%s2 + $0x60] sm:$0xff]
    %v1474 = vld [vmem:[%s2 + $0x68] sm:$0xff]
    %v1475 = vld [vmem:[%s2 + $0x70] sm:$0xff]
    %v1476 = vld [vmem:[%s2 + $0x78] sm:$0xff]
    %v1477 = vld [vmem:[%s2 + $0x80] sm:$0xff]
    %v1478 = vld [vmem:[%s2 + $0x88] sm:$0xff]
    %v1479 = vld [vmem:[%s2 + $0x90] sm:$0xff]
    %v1480 = vld [vmem:[%s2 + $0x98] sm:$0xff]
    %v1481 = vld [vmem:[%s2 + $0xa0] sm:$0xff]
    %v1482 = vld [vmem:[%s2 + $0xa8] sm:$0xff]
    %v1483 = vld [vmem:[%s2 + $0xb0] sm:$0xff]
    %v1484 = vld [vmem:[%s2 + $0xb8] sm:$0xff]
    %v1485 = vld [vmem:[%s2 + $0xc0] sm:$0xff]
    %v1486 = vld [vmem:[%s2 + $0xc8] sm:$0xff]
    %v1487 = vld [vmem:[%s2 + $0xd0] sm:$0xff]
    %v1488 = vld [vmem:[%s2 + $0xd8] sm:$0xff]
    %v1489 = vld [vmem:[%s2 + $0xe0] sm:$0xff]
    %v1490 = vld [vmem:[%s2 + $0xe8] sm:$0xff]
    %v1491 = vld [vmem:[%s2 + $0xf0] sm:$0xff]
    %v1492 = vld [vmem:[%s2 + $0xf8] sm:$0xff]
    %v1525 = vunpack.c.l.b16 %v1461
    %v1526 = vunpack.c.h.b16 %v1461
    %v1527 = vunpack.c.l.b16 %v1462
    %v1528 = vunpack.c.h.b16 %v1462
    %v1529 = vunpack.c.l.b16 %v1463
    %v1530 = vunpack.c.h.b16 %v1463
    %v1531 = vunpack.c.l.b16 %v1464
    %v1532 = vunpack.c.h.b16 %v1464
    %v1533 = vunpack.c.l.b16 %v1465
    %v1534 = vunpack.c.h.b16 %v1465
    %v1535 = vunpack.c.l.b16 %v1466
    %v1536 = vunpack.c.h.b16 %v1466
    %v1537 = vunpack.c.l.b16 %v1467
    %v1538 = vunpack.c.h.b16 %v1467
    %v1539 = vunpack.c.l.b16 %v1468
    %v1540 = vunpack.c.h.b16 %v1468
    %v1541 = vunpack.c.l.b16 %v1469
    %v1542 = vunpack.c.h.b16 %v1469
    %v1543 = vunpack.c.l.b16 %v1470
    %v1544 = vunpack.c.h.b16 %v1470
    %v1545 = vunpack.c.l.b16 %v1471
    %v1546 = vunpack.c.h.b16 %v1471
    %v1547 = vunpack.c.l.b16 %v1472
    %v1548 = vunpack.c.h.b16 %v1472
    %v1549 = vunpack.c.l.b16 %v1473
    %v1550 = vunpack.c.h.b16 %v1473
    %v1551 = vunpack.c.l.b16 %v1474
    %v1552 = vunpack.c.h.b16 %v1474
    %v1553 = vunpack.c.l.b16 %v1475
    %v1554 = vunpack.c.h.b16 %v1475
    %v1555 = vunpack.c.l.b16 %v1476
    %v1556 = vunpack.c.h.b16 %v1476
    %v1557 = vunpack.c.l.b16 %v1477
    %v1558 = vunpack.c.h.b16 %v1477
    %v1559 = vunpack.c.l.b16 %v1478
    %v1560 = vunpack.c.h.b16 %v1478
    %v1561 = vunpack.c.l.b16 %v1479
    %v1562 = vunpack.c.h.b16 %v1479
    %v1563 = vunpack.c.l.b16 %v1480
    %v1564 = vunpack.c.h.b16 %v1480
    %v1565 = vunpack.c.l.b16 %v1481
    %v1566 = vunpack.c.h.b16 %v1481
    %v1567 = vunpack.c.l.b16 %v1482
    %v1568 = vunpack.c.h.b16 %v1482
    %v1569 = vunpack.c.l.b16 %v1483
    %v1570 = vunpack.c.h.b16 %v1483
    %v1571 = vunpack.c.l.b16 %v1484
    %v1572 = vunpack.c.h.b16 %v1484
    %v1573 = vunpack.c.l.b16 %v1485
    %v1574 = vunpack.c.h.b16 %v1485
    %v1575 = vunpack.c.l.b16 %v1486
    %v1576 = vunpack.c.h.b16 %v1486
    %v1577 = vunpack.c.l.b16 %v1487
    %v1578 = vunpack.c.h.b16 %v1487
    %v1579 = vunpack.c.l.b16 %v1488
    %v1580 = vunpack.c.h.b16 %v1488
    %v1581 = vunpack.c.l.b16 %v1489
    %v1582 = vunpack.c.h.b16 %v1489
    %v1583 = vunpack.c.l.b16 %v1490
    %v1584 = vunpack.c.h.b16 %v1490
    %v1585 = vunpack.c.l.b16 %v1491
    %v1586 = vunpack.c.h.b16 %v1491
    %v1587 = vunpack.c.l.b16 %v1492
    %v1588 = vunpack.c.h.b16 %v1492
    %v1589 = vpack.c.b16 %v1527, %v1525
    %v1590 = vpack.c.b16 %v1528, %v1526
    %v1591 = vpack.c.b16 %v1531, %v1529
    %v1592 = vpack.c.b16 %v1532, %v1530
    %v1593 = vpack.c.b16 %v1535, %v1533
    %v1594 = vpack.c.b16 %v1536, %v1534
    %v1595 = vpack.c.b16 %v1539, %v1537
    %v1596 = vpack.c.b16 %v1540, %v1538
    %v1597 = vpack.c.b16 %v1543, %v1541
    %v1598 = vpack.c.b16 %v1544, %v1542
    %v1599 = vpack.c.b16 %v1547, %v1545
    %v1600 = vpack.c.b16 %v1548, %v1546
    %v1601 = vpack.c.b16 %v1551, %v1549
    %v1602 = vpack.c.b16 %v1552, %v1550
    %v1603 = vpack.c.b16 %v1555, %v1553
    %v1604 = vpack.c.b16 %v1556, %v1554
    %v1605 = vpack.c.b16 %v1559, %v1557
    %v1606 = vpack.c.b16 %v1560, %v1558
    %v1607 = vpack.c.b16 %v1563, %v1561
    %v1608 = vpack.c.b16 %v1564, %v1562
    %v1609 = vpack.c.b16 %v1567, %v1565
    %v1610 = vpack.c.b16 %v1568, %v1566
    %v1611 = vpack.c.b16 %v1571, %v1569
    %v1612 = vpack.c.b16 %v1572, %v1570
    %v1613 = vpack.c.b16 %v1575, %v1573
    %v1614 = vpack.c.b16 %v1576, %v1574
    %v1615 = vpack.c.b16 %v1579, %v1577
    %v1616 = vpack.c.b16 %v1580, %v1578
    %v1617 = vpack.c.b16 %v1583, %v1581
    %v1618 = vpack.c.b16 %v1584, %v1582
    %v1619 = vpack.c.b16 %v1587, %v1585
    %v1620 = vpack.c.b16 %v1588, %v1586
    %1653 = vmatpush.bf16.msra.mxu0 %v1603
    %1654 = vmatpush.bf16.msra.mxu0 %v1601
    %1655 = vmatpush.bf16.msra.mxu0 %v1599
    %1656 = vmatpush.bf16.msra.mxu0 %v1597
    %1657 = vmatpush.bf16.msra.mxu0 %v1595
    %1658 = vmatpush.bf16.msra.mxu0 %v1593
    %1659 = vmatpush.bf16.msra.mxu0 %v1591
    %1660 = vmatpush.bf16.msra.mxu0 %v1589
    %1661 = vmatmul.bf16.gmra.mxu0 %v1459
    %v1662 = vpop.f32.mrf.mxu0
    %v1663 = vadd.f32 0.0, %v1662
    %v1664 = vpop.f32.mrf.mxu0
    %1665 = vdwg.mxu0
    %1666 = vmatpush.bf16.msra.mxu0 %v1619
    %1667 = vmatpush.bf16.msra.mxu0 %v1617
    %1668 = vmatpush.bf16.msra.mxu0 %v1615
    %1669 = vmatpush.bf16.msra.mxu0 %v1613
    %1670 = vmatpush.bf16.msra.mxu0 %v1611
    %1671 = vmatpush.bf16.msra.mxu0 %v1609
    %1672 = vmatpush.bf16.msra.mxu0 %v1607
    %1673 = vmatpush.bf16.msra.mxu0 %v1605
    %1674 = vmatmul.bf16.gmra.mxu0 %v1460
    %v1675 = vpop.f32.mrf.mxu0
    %v1676 = vadd.f32 %v1663, %v1675
    %v1677 = vpop.f32.mrf.mxu0
    %1678 = vdwg.mxu0
    %1679 = vmatpush.bf16.msra.mxu0 %v1604
    %1680 = vmatpush.bf16.msra.mxu0 %v1602
    %1681 = vmatpush.bf16.msra.mxu0 %v1600
    %1682 = vmatpush.bf16.msra.mxu0 %v1598
    %1683 = vmatpush.bf16.msra.mxu0 %v1596
    %1684 = vmatpush.bf16.msra.mxu0 %v1594
    %1685 = vmatpush.bf16.msra.mxu0 %v1592
    %1686 = vmatpush.bf16.msra.mxu0 %v1590
    %1687 = vmatmul.bf16.gmra.mxu0 %v1459
    %v1688 = vpop.f32.mrf.mxu0
    %v1689 = vadd.f32 0.0, %v1688
    %v1690 = vpop.f32.mrf.mxu0
    %1691 = vdwg.mxu0
    %1692 = vmatpush.bf16.msra.mxu0 %v1620
    %1693 = vmatpush.bf16.msra.mxu0 %v1618
    %1694 = vmatpush.bf16.msra.mxu0 %v1616
    %1695 = vmatpush.bf16.msra.mxu0 %v1614
    %1696 = vmatpush.bf16.msra.mxu0 %v1612
    %1697 = vmatpush.bf16.msra.mxu0 %v1610
    %1698 = vmatpush.bf16.msra.mxu0 %v1608
    %1699 = vmatpush.bf16.msra.mxu0 %v1606
    %1700 = vmatmul.bf16.gmra.mxu0 %v1460
    %v1701 = vpop.f32.mrf.mxu0
    %v1702 = vadd.f32 %v1689, %v1701
    %v1703 = vpop.f32.mrf.mxu0
    %1704 = vdwg.mxu0
    %v1705 = vadd.f32 %v1457, %v1676
    %v1706 = vadd.f32 %v1458, %v1702
    %v1707 = vtanh.pop %v1705
    %v1708 = vtanh.pop %v1706
    %1709 = vst [vmem:[%s435] sm:$0xff] %v1707
    %1710 = vst [vmem:[%s433 + $0x8] sm:$0xff] %v1708
    %v1711 = vld [vmem:[%s172] sm:$0xff]
    %v1712 = vld [vmem:[%s172 + $0x8] sm:$0xff]
    %v1713 = vpack.c.bf16 %v1707, %v1707
    %v1714 = vpack.c.bf16 %v1708, %v1708
    %v1715 = vld [vmem:[%s2] sm:$0xff]
    %v1716 = vld [vmem:[%s2 + $0x8] sm:$0xff]
    %v1717 = vld [vmem:[%s2 + $0x10] sm:$0xff]
    %v1718 = vld [vmem:[%s2 + $0x18] sm:$0xff]
    %v1719 = vld [vmem:[%s2 + $0x20] sm:$0xff]
    %v1720 = vld [vmem:[%s2 + $0x28] sm:$0xff]
    %v1721 = vld [vmem:[%s2 + $0x30] sm:$0xff]
    %v1722 = vld [vmem:[%s2 + $0x38] sm:$0xff]
    %v1723 = vld [vmem:[%s2 + $0x40] sm:$0xff]
    %v1724 = vld [vmem:[%s2 + $0x48] sm:$0xff]
    %v1725 = vld [vmem:[%s2 + $0x50] sm:$0xff]
    %v1726 = vld [vmem:[%s2 + $0x58] sm:$0xff]
    %v1727 = vld [vmem:[%s2 + $0x60] sm:$0xff]
    %v1728 = vld [vmem:[%s2 + $0x68] sm:$0xff]
    %v1729 = vld [vmem:[%s2 + $0x70] sm:$0xff]
    %v1730 = vld [vmem:[%s2 + $0x78] sm:$0xff]
    %v1731 = vld [vmem:[%s2 + $0x80] sm:$0xff]
    %v1732 = vld [vmem:[%s2 + $0x88] sm:$0xff]
    %v1733 = vld [vmem:[%s2 + $0x90] sm:$0xff]
    %v1734 = vld [vmem:[%s2 + $0x98] sm:$0xff]
    %v1735 = vld [vmem:[%s2 + $0xa0] sm:$0xff]
    %v1736 = vld [vmem:[%s2 + $0xa8] sm:$0xff]
    %v1737 = vld [vmem:[%s2 + $0xb0] sm:$0xff]
    %v1738 = vld [vmem:[%s2 + $0xb8] sm:$0xff]
    %v1739 = vld [vmem:[%s2 + $0xc0] sm:$0xff]
    %v1740 = vld [vmem:[%s2 + $0xc8] sm:$0xff]
    %v1741 = vld [vmem:[%s2 + $0xd0] sm:$0xff]
    %v1742 = vld [vmem:[%s2 + $0xd8] sm:$0xff]
    %v1743 = vld [vmem:[%s2 + $0xe0] sm:$0xff]
    %v1744 = vld [vmem:[%s2 + $0xe8] sm:$0xff]
    %v1745 = vld [vmem:[%s2 + $0xf0] sm:$0xff]
    %v1746 = vld [vmem:[%s2 + $0xf8] sm:$0xff]
    %v1779 = vunpack.c.l.b16 %v1715
    %v1780 = vunpack.c.h.b16 %v1715
    %v1781 = vunpack.c.l.b16 %v1716
    %v1782 = vunpack.c.h.b16 %v1716
    %v1783 = vunpack.c.l.b16 %v1717
    %v1784 = vunpack.c.h.b16 %v1717
    %v1785 = vunpack.c.l.b16 %v1718
    %v1786 = vunpack.c.h.b16 %v1718
    %v1787 = vunpack.c.l.b16 %v1719
    %v1788 = vunpack.c.h.b16 %v1719
    %v1789 = vunpack.c.l.b16 %v1720
    %v1790 = vunpack.c.h.b16 %v1720
    %v1791 = vunpack.c.l.b16 %v1721
    %v1792 = vunpack.c.h.b16 %v1721
    %v1793 = vunpack.c.l.b16 %v1722
    %v1794 = vunpack.c.h.b16 %v1722
    %v1795 = vunpack.c.l.b16 %v1723
    %v1796 = vunpack.c.h.b16 %v1723
    %v1797 = vunpack.c.l.b16 %v1724
    %v1798 = vunpack.c.h.b16 %v1724
    %v1799 = vunpack.c.l.b16 %v1725
    %v1800 = vunpack.c.h.b16 %v1725
    %v1801 = vunpack.c.l.b16 %v1726
    %v1802 = vunpack.c.h.b16 %v1726
    %v1803 = vunpack.c.l.b16 %v1727
    %v1804 = vunpack.c.h.b16 %v1727
    %v1805 = vunpack.c.l.b16 %v1728
    %v1806 = vunpack.c.h.b16 %v1728
    %v1807 = vunpack.c.l.b16 %v1729
    %v1808 = vunpack.c.h.b16 %v1729
    %v1809 = vunpack.c.l.b16 %v1730
    %v1810 = vunpack.c.h.b16 %v1730
    %v1811 = vunpack.c.l.b16 %v1731
    %v1812 = vunpack.c.h.b16 %v1731
    %v1813 = vunpack.c.l.b16 %v1732
    %v1814 = vunpack.c.h.b16 %v1732
    %v1815 = vunpack.c.l.b16 %v1733
    %v1816 = vunpack.c.h.b16 %v1733
    %v1817 = vunpack.c.l.b16 %v1734
    %v1818 = vunpack.c.h.b16 %v1734
    %v1819 = vunpack.c.l.b16 %v1735
    %v1820 = vunpack.c.h.b16 %v1735
    %v1821 = vunpack.c.l.b16 %v1736
    %v1822 = vunpack.c.h.b16 %v1736
    %v1823 = vunpack.c.l.b16 %v1737
    %v1824 = vunpack.c.h.b16 %v1737
    %v1825 = vunpack.c.l.b16 %v1738
    %v1826 = vunpack.c.h.b16 %v1738
    %v1827 = vunpack.c.l.b16 %v1739
    %v1828 = vunpack.c.h.b16 %v1739
    %v1829 = vunpack.c.l.b16 %v1740
    %v1830 = vunpack.c.h.b16 %v1740
    %v1831 = vunpack.c.l.b16 %v1741
    %v1832 = vunpack.c.h.b16 %v1741
    %v1833 = vunpack.c.l.b16 %v1742
    %v1834 = vunpack.c.h.b16 %v1742
    %v1835 = vunpack.c.l.b16 %v1743
    %v1836 = vunpack.c.h.b16 %v1743
    %v1837 = vunpack.c.l.b16 %v1744
    %v1838 = vunpack.c.h.b16 %v1744
    %v1839 = vunpack.c.l.b16 %v1745
    %v1840 = vunpack.c.h.b16 %v1745
    %v1841 = vunpack.c.l.b16 %v1746
    %v1842 = vunpack.c.h.b16 %v1746
    %v1843 = vpack.c.b16 %v1781, %v1779
    %v1844 = vpack.c.b16 %v1782, %v1780
    %v1845 = vpack.c.b16 %v1785, %v1783
    %v1846 = vpack.c.b16 %v1786, %v1784
    %v1847 = vpack.c.b16 %v1789, %v1787
    %v1848 = vpack.c.b16 %v1790, %v1788
    %v1849 = vpack.c.b16 %v1793, %v1791
    %v1850 = vpack.c.b16 %v1794, %v1792
    %v1851 = vpack.c.b16 %v1797, %v1795
    %v1852 = vpack.c.b16 %v1798, %v1796
    %v1853 = vpack.c.b16 %v1801, %v1799
    %v1854 = vpack.c.b16 %v1802, %v1800
    %v1855 = vpack.c.b16 %v1805, %v1803
    %v1856 = vpack.c.b16 %v1806, %v1804
    %v1857 = vpack.c.b16 %v1809, %v1807
    %v1858 = vpack.c.b16 %v1810, %v1808
    %v1859 = vpack.c.b16 %v1813, %v1811
    %v1860 = vpack.c.b16 %v1814, %v1812
    %v1861 = vpack.c.b16 %v1817, %v1815
    %v1862 = vpack.c.b16 %v1818, %v1816
    %v1863 = vpack.c.b16 %v1821, %v1819
    %v1864 = vpack.c.b16 %v1822, %v1820
    %v1865 = vpack.c.b16 %v1825, %v1823
    %v1866 = vpack.c.b16 %v1826, %v1824
    %v1867 = vpack.c.b16 %v1829, %v1827
    %v1868 = vpack.c.b16 %v1830, %v1828
    %v1869 = vpack.c.b16 %v1833, %v1831
    %v1870 = vpack.c.b16 %v1834, %v1832
    %v1871 = vpack.c.b16 %v1837, %v1835
    %v1872 = vpack.c.b16 %v1838, %v1836
    %v1873 = vpack.c.b16 %v1841, %v1839
    %v1874 = vpack.c.b16 %v1842, %v1840
    %1907 = vmatpush.bf16.msra.mxu0 %v1857
    %1908 = vmatpush.bf16.msra.mxu0 %v1855
    %1909 = vmatpush.bf16.msra.mxu0 %v1853
    %1910 = vmatpush.bf16.msra.mxu0 %v1851
    %1911 = vmatpush.bf16.msra.mxu0 %v1849
    %1912 = vmatpush.bf16.msra.mxu0 %v1847
    %1913 = vmatpush.bf16.msra.mxu0 %v1845
    %1914 = vmatpush.bf16.msra.mxu0 %v1843
    %1915 = vmatmul.bf16.gmra.mxu0 %v1713
    %v1916 = vpop.f32.mrf.mxu0
    %v1917 = vadd.f32 0.0, %v1916
    %v1918 = vpop.f32.mrf.mxu0
    %1919 = vdwg.mxu0
    %1920 = vmatpush.bf16.msra.mxu0 %v1873
    %1921 = vmatpush.bf16.msra.mxu0 %v1871
    %1922 = vmatpush.bf16.msra.mxu0 %v1869
    %1923 = vmatpush.bf16.msra.mxu0 %v1867
    %1924 = vmatpush.bf16.msra.mxu0 %v1865
    %1925 = vmatpush.bf16.msra.mxu0 %v1863
    %1926 = vmatpush.bf16.msra.mxu0 %v1861
    %1927 = vmatpush.bf16.msra.mxu0 %v1859
    %1928 = vmatmul.bf16.gmra.mxu0 %v1714
    %v1929 = vpop.f32.mrf.mxu0
    %v1930 = vadd.f32 %v1917, %v1929
    %v1931 = vpop.f32.mrf.mxu0
    %1932 = vdwg.mxu0
    %1933 = vmatpush.bf16.msra.mxu0 %v1858
    %1934 = vmatpush.bf16.msra.mxu0 %v1856
    %1935 = vmatpush.bf16.msra.mxu0 %v1854
    %1936 = vmatpush.bf16.msra.mxu0 %v1852
    %1937 = vmatpush.bf16.msra.mxu0 %v1850
    %1938 = vmatpush.bf16.msra.mxu0 %v1848
    %1939 = vmatpush.bf16.msra.mxu0 %v1846
    %1940 = vmatpush.bf16.msra.mxu0 %v1844
    %1941 = vmatmul.bf16.gmra.mxu0 %v1713
    %v1942 = vpop.f32.mrf.mxu0
    %v1943 = vadd.f32 0.0, %v1942
    %v1944 = vpop.f32.mrf.mxu0
    %1945 = vdwg.mxu0
    %1946 = vmatpush.bf16.msra.mxu0 %v1874
    %1947 = vmatpush.bf16.msra.mxu0 %v1872
    %1948 = vmatpush.bf16.msra.mxu0 %v1870
    %1949 = vmatpush.bf16.msra.mxu0 %v1868
    %1950 = vmatpush.bf16.msra.mxu0 %v1866
    %1951 = vmatpush.bf16.msra.mxu0 %v1864
    %1952 = vmatpush.bf16.msra.mxu0 %v1862
    %1953 = vmatpush.bf16.msra.mxu0 %v1860
    %1954 = vmatmul.bf16.gmra.mxu0 %v1714
    %v1955 = vpop.f32.mrf.mxu0
    %v1956 = vadd.f32 %v1943, %v1955
    %v1957 = vpop.f32.mrf.mxu0
    %1958 = vdwg.mxu0
    %v1959 = vadd.f32 %v1711, %v1930
    %v1960 = vadd.f32 %v1712, %v1956
    %v1961 = vtanh.pop %v1959
    %v1962 = vtanh.pop %v1960
    %1963 = vst [vmem:[%s179] sm:$0xff] %v1961
    %1964 = vst [vmem:[#allocation3 + $0x8] sm:$0xff] %v1962
    %1965 = vst [vmem:[#allocation6] sm:$0xff] %v1961
    %s1966 = scalar_lea.vmem [#allocation6], 8
    %1967 = vst [vmem:[%s1966] sm:$0xff] %v1962
    %v1968 = vld [vmem:[#allocation3] sm:$0xff]
    %v1969 = vld [vmem:[#allocation3 + $0x8] sm:$0xff]
    %v1970 = vld [vmem:[#allocation3 + $0x10] sm:$0xff]
    %v1971 = vld [vmem:[#allocation3 + $0x18] sm:$0xff]
    %v1972 = vld [vmem:[#allocation3 + $0x20] sm:$0xff]
    %v1973 = vld [vmem:[#allocation3 + $0x28] sm:$0xff]
    %v1974 = vld [vmem:[#allocation3 + $0x30] sm:$0xff]
    %v1975 = vld [vmem:[#allocation3 + $0x38] sm:$0xff]
    %v1976 = vld [vmem:[#allocation3 + $0x40] sm:$0xff]
    %v1977 = vld [vmem:[#allocation3 + $0x48] sm:$0xff]
    %v1978 = vld [vmem:[#allocation3 + $0x50] sm:$0xff]
    %v1979 = vld [vmem:[#allocation3 + $0x58] sm:$0xff]
    %v1980 = vld [vmem:[#allocation3 + $0x60] sm:$0xff]
    %v1981 = vld [vmem:[#allocation3 + $0x68] sm:$0xff]
    %v1982 = vld [vmem:[#allocation3 + $0x70] sm:$0xff]
    %v1983 = vld [vmem:[#allocation3 + $0x78] sm:$0xff]
    %v1984 = vpack.c.bf16 %v1970, %v1968
    %v1985 = vpack.c.bf16 %v1971, %v1969
    %v1986 = vpack.c.bf16 %v1974, %v1972
    %v1987 = vpack.c.bf16 %v1975, %v1973
    %v1988 = vpack.c.bf16 %v1978, %v1976
    %v1989 = vpack.c.bf16 %v1979, %v1977
    %v1990 = vpack.c.bf16 %v1982, %v1980
    %v1991 = vpack.c.bf16 %v1983, %v1981
    %v1992 = vld [vmem:[%s4] sm:$0xff]
    %v1993 = vld [vmem:[%s4 + $0x8] sm:$0xff]
    %v1994 = vld [vmem:[%s4 + $0x10] sm:$0xff]
    %v1995 = vld [vmem:[%s4 + $0x18] sm:$0xff]
    %v1996 = vld [vmem:[%s4 + $0x20] sm:$0xff]
    %v1997 = vld [vmem:[%s4 + $0x28] sm:$0xff]
    %v1998 = vld [vmem:[%s4 + $0x30] sm:$0xff]
    %v1999 = vld [vmem:[%s4 + $0x38] sm:$0xff]
    %v2000 = vld [vmem:[%s4 + $0x40] sm:$0xff]
    %v2001 = vld [vmem:[%s4 + $0x48] sm:$0xff]
    %v2002 = vld [vmem:[%s4 + $0x50] sm:$0xff]
    %v2003 = vld [vmem:[%s4 + $0x58] sm:$0xff]
    %v2004 = vld [vmem:[%s4 + $0x60] sm:$0xff]
    %v2005 = vld [vmem:[%s4 + $0x68] sm:$0xff]
    %v2006 = vld [vmem:[%s4 + $0x70] sm:$0xff]
    %v2007 = vld [vmem:[%s4 + $0x78] sm:$0xff]
    %v2008 = vld [vmem:[%s4 + $0x80] sm:$0xff]
    %v2009 = vld [vmem:[%s4 + $0x88] sm:$0xff]
    %v2010 = vld [vmem:[%s4 + $0x90] sm:$0xff]
    %v2011 = vld [vmem:[%s4 + $0x98] sm:$0xff]
    %v2012 = vld [vmem:[%s4 + $0xa0] sm:$0xff]
    %v2013 = vld [vmem:[%s4 + $0xa8] sm:$0xff]
    %v2014 = vld [vmem:[%s4 + $0xb0] sm:$0xff]
    %v2015 = vld [vmem:[%s4 + $0xb8] sm:$0xff]
    %v2016 = vld [vmem:[%s4 + $0xc0] sm:$0xff]
    %v2017 = vld [vmem:[%s4 + $0xc8] sm:$0xff]
    %v2018 = vld [vmem:[%s4 + $0xd0] sm:$0xff]
    %v2019 = vld [vmem:[%s4 + $0xd8] sm:$0xff]
    %v2020 = vld [vmem:[%s4 + $0xe0] sm:$0xff]
    %v2021 = vld [vmem:[%s4 + $0xe8] sm:$0xff]
    %v2022 = vld [vmem:[%s4 + $0xf0] sm:$0xff]
    %v2023 = vld [vmem:[%s4 + $0xf8] sm:$0xff]
    %v2024 = vld [vmem:[%s6] sm:$0x3]
    %v2026 = vperm.slane %v2024, 0
    %v2027 = vperm.slane %v2024, 1
    %v2062 = vunpack.c.l.b16 %v1992
    %v2063 = vunpack.c.h.b16 %v1992
    %v2064 = vunpack.c.l.b16 %v1993
    %v2065 = vunpack.c.h.b16 %v1993
    %v2066 = vunpack.c.l.b16 %v1994
    %v2067 = vunpack.c.h.b16 %v1994
    %v2068 = vunpack.c.l.b16 %v1995
    %v2069 = vunpack.c.h.b16 %v1995
    %v2070 = vunpack.c.l.b16 %v1996
    %v2071 = vunpack.c.h.b16 %v1996
    %v2072 = vunpack.c.l.b16 %v1997
    %v2073 = vunpack.c.h.b16 %v1997
    %v2074 = vunpack.c.l.b16 %v1998
    %v2075 = vunpack.c.h.b16 %v1998
    %v2076 = vunpack.c.l.b16 %v1999
    %v2077 = vunpack.c.h.b16 %v1999
    %v2078 = vunpack.c.l.b16 %v2000
    %v2079 = vunpack.c.h.b16 %v2000
    %v2080 = vunpack.c.l.b16 %v2001
    %v2081 = vunpack.c.h.b16 %v2001
    %v2082 = vunpack.c.l.b16 %v2002
    %v2083 = vunpack.c.h.b16 %v2002
    %v2084 = vunpack.c.l.b16 %v2003
    %v2085 = vunpack.c.h.b16 %v2003
    %v2086 = vunpack.c.l.b16 %v2004
    %v2087 = vunpack.c.h.b16 %v2004
    %v2088 = vunpack.c.l.b16 %v2005
    %v2089 = vunpack.c.h.b16 %v2005
    %v2090 = vunpack.c.l.b16 %v2006
    %v2091 = vunpack.c.h.b16 %v2006
    %v2092 = vunpack.c.l.b16 %v2007
    %v2093 = vunpack.c.h.b16 %v2007
    %v2094 = vunpack.c.l.b16 %v2008
    %v2095 = vunpack.c.h.b16 %v2008
    %v2096 = vunpack.c.l.b16 %v2009
    %v2097 = vunpack.c.h.b16 %v2009
    %v2098 = vunpack.c.l.b16 %v2010
    %v2099 = vunpack.c.h.b16 %v2010
    %v2100 = vunpack.c.l.b16 %v2011
    %v2101 = vunpack.c.h.b16 %v2011
    %v2102 = vunpack.c.l.b16 %v2012
    %v2103 = vunpack.c.h.b16 %v2012
    %v2104 = vunpack.c.l.b16 %v2013
    %v2105 = vunpack.c.h.b16 %v2013
    %v2106 = vunpack.c.l.b16 %v2014
    %v2107 = vunpack.c.h.b16 %v2014
    %v2108 = vunpack.c.l.b16 %v2015
    %v2109 = vunpack.c.h.b16 %v2015
    %v2110 = vunpack.c.l.b16 %v2016
    %v2111 = vunpack.c.h.b16 %v2016
    %v2112 = vunpack.c.l.b16 %v2017
    %v2113 = vunpack.c.h.b16 %v2017
    %v2114 = vunpack.c.l.b16 %v2018
    %v2115 = vunpack.c.h.b16 %v2018
    %v2116 = vunpack.c.l.b16 %v2019
    %v2117 = vunpack.c.h.b16 %v2019
    %v2118 = vunpack.c.l.b16 %v2020
    %v2119 = vunpack.c.h.b16 %v2020
    %v2120 = vunpack.c.l.b16 %v2021
    %v2121 = vunpack.c.h.b16 %v2021
    %v2122 = vunpack.c.l.b16 %v2022
    %v2123 = vunpack.c.h.b16 %v2022
    %v2124 = vunpack.c.l.b16 %v2023
    %v2125 = vunpack.c.h.b16 %v2023
    %v2126 = vpack.c.b16 %v2064, %v2062
    %v2127 = vpack.c.b16 %v2065, %v2063
    %v2128 = vpack.c.b16 %v2068, %v2066
    %v2129 = vpack.c.b16 %v2069, %v2067
    %v2130 = vpack.c.b16 %v2072, %v2070
    %v2131 = vpack.c.b16 %v2073, %v2071
    %v2132 = vpack.c.b16 %v2076, %v2074
    %v2133 = vpack.c.b16 %v2077, %v2075
    %v2134 = vpack.c.b16 %v2080, %v2078
    %v2135 = vpack.c.b16 %v2081, %v2079
    %v2136 = vpack.c.b16 %v2084, %v2082
    %v2137 = vpack.c.b16 %v2085, %v2083
    %v2138 = vpack.c.b16 %v2088, %v2086
    %v2139 = vpack.c.b16 %v2089, %v2087
    %v2140 = vpack.c.b16 %v2092, %v2090
    %v2141 = vpack.c.b16 %v2093, %v2091
    %v2142 = vpack.c.b16 %v2096, %v2094
    %v2143 = vpack.c.b16 %v2097, %v2095
    %v2144 = vpack.c.b16 %v2100, %v2098
    %v2145 = vpack.c.b16 %v2101, %v2099
    %v2146 = vpack.c.b16 %v2104, %v2102
    %v2147 = vpack.c.b16 %v2105, %v2103
    %v2148 = vpack.c.b16 %v2108, %v2106
    %v2149 = vpack.c.b16 %v2109, %v2107
    %v2150 = vpack.c.b16 %v2112, %v2110
    %v2151 = vpack.c.b16 %v2113, %v2111
    %v2152 = vpack.c.b16 %v2116, %v2114
    %v2153 = vpack.c.b16 %v2117, %v2115
    %v2154 = vpack.c.b16 %v2120, %v2118
    %v2155 = vpack.c.b16 %v2121, %v2119
    %v2156 = vpack.c.b16 %v2124, %v2122
    %v2157 = vpack.c.b16 %v2125, %v2123
    %2190 = vmatpush.bf16.msra.mxu0 %v2140
    %2191 = vmatpush.bf16.msra.mxu0 %v2138
    %2192 = vmatpush.bf16.msra.mxu0 %v2136
    %2193 = vmatpush.bf16.msra.mxu0 %v2134
    %2194 = vmatpush.bf16.msra.mxu0 %v2132
    %2195 = vmatpush.bf16.msra.mxu0 %v2130
    %2196 = vmatpush.bf16.msra.mxu0 %v2128
    %2197 = vmatpush.bf16.msra.mxu0 %v2126
    %2198 = vmatmul.bf16.gmra.mxu0 %v1984
    %v2199 = vpop.f32.mrf.mxu0
    %v2200 = vadd.f32 %v2026, %v2199
    %v2201 = vpop.f32.mrf.mxu0
    %v2202 = vadd.f32 %v2026, %v2201
    %2203 = vmatmul.bf16.gmra.mxu0 %v1986
    %v2204 = vpop.f32.mrf.mxu0
    %v2205 = vadd.f32 %v2026, %v2204
    %v2206 = vpop.f32.mrf.mxu0
    %v2207 = vadd.f32 %v2026, %v2206
    %2208 = vmatmul.bf16.gmra.mxu0 %v1988
    %v2209 = vpop.f32.mrf.mxu0
    %v2210 = vadd.f32 %v2026, %v2209
    %v2211 = vpop.f32.mrf.mxu0
    %v2212 = vadd.f32 %v2026, %v2211
    %2213 = vmatmul.bf16.gmra.mxu0 %v1990
    %v2214 = vpop.f32.mrf.mxu0
    %v2215 = vadd.f32 %v2026, %v2214
    %v2216 = vpop.f32.mrf.mxu0
    %v2217 = vadd.f32 %v2026, %v2216
    %2218 = vdwg.mxu0
    %2219 = vmatpush.bf16.msra.mxu0 %v2156
    %2220 = vmatpush.bf16.msra.mxu0 %v2154
    %2221 = vmatpush.bf16.msra.mxu0 %v2152
    %2222 = vmatpush.bf16.msra.mxu0 %v2150
    %2223 = vmatpush.bf16.msra.mxu0 %v2148
    %2224 = vmatpush.bf16.msra.mxu0 %v2146
    %2225 = vmatpush.bf16.msra.mxu0 %v2144
    %2226 = vmatpush.bf16.msra.mxu0 %v2142
    %2227 = vmatmul.bf16.gmra.mxu0 %v1985
    %v2228 = vpop.f32.mrf.mxu0
    %v2229 = vadd.f32 %v2200, %v2228
    %v2230 = vpop.f32.mrf.mxu0
    %v2231 = vadd.f32 %v2202, %v2230
    %2232 = vmatmul.bf16.gmra.mxu0 %v1987
    %v2233 = vpop.f32.mrf.mxu0
    %v2234 = vadd.f32 %v2205, %v2233
    %v2235 = vpop.f32.mrf.mxu0
    %v2236 = vadd.f32 %v2207, %v2235
    %2237 = vmatmul.bf16.gmra.mxu0 %v1989
    %v2238 = vpop.f32.mrf.mxu0
    %v2239 = vadd.f32 %v2210, %v2238
    %v2240 = vpop.f32.mrf.mxu0
    %v2241 = vadd.f32 %v2212, %v2240
    %2242 = vmatmul.bf16.gmra.mxu0 %v1991
    %v2243 = vpop.f32.mrf.mxu0
    %v2244 = vadd.f32 %v2215, %v2243
    %v2245 = vpop.f32.mrf.mxu0
    %v2246 = vadd.f32 %v2217, %v2245
    %2247 = vdwg.mxu0
    %2248 = vmatpush.bf16.msra.mxu0 %v2141
    %2249 = vmatpush.bf16.msra.mxu0 %v2139
    %2250 = vmatpush.bf16.msra.mxu0 %v2137
    %2251 = vmatpush.bf16.msra.mxu0 %v2135
    %2252 = vmatpush.bf16.msra.mxu0 %v2133
    %2253 = vmatpush.bf16.msra.mxu0 %v2131
    %2254 = vmatpush.bf16.msra.mxu0 %v2129
    %2255 = vmatpush.bf16.msra.mxu0 %v2127
    %2256 = vmatmul.bf16.gmra.mxu0 %v1984
    %v2257 = vpop.f32.mrf.mxu0
    %v2258 = vadd.f32 %v2027, %v2257
    %v2259 = vpop.f32.mrf.mxu0
    %v2260 = vadd.f32 %v2027, %v2259
    %2261 = vmatmul.bf16.gmra.mxu0 %v1986
    %v2262 = vpop.f32.mrf.mxu0
    %v2263 = vadd.f32 %v2027, %v2262
    %v2264 = vpop.f32.mrf.mxu0
    %v2265 = vadd.f32 %v2027, %v2264
    %2266 = vmatmul.bf16.gmra.mxu0 %v1988
    %v2267 = vpop.f32.mrf.mxu0
    %v2268 = vadd.f32 %v2027, %v2267
    %v2269 = vpop.f32.mrf.mxu0
    %v2270 = vadd.f32 %v2027, %v2269
    %2271 = vmatmul.bf16.gmra.mxu0 %v1990
    %v2272 = vpop.f32.mrf.mxu0
    %v2273 = vadd.f32 %v2027, %v2272
    %v2274 = vpop.f32.mrf.mxu0
    %v2275 = vadd.f32 %v2027, %v2274
    %2276 = vdwg.mxu0
    %2277 = vmatpush.bf16.msra.mxu0 %v2157
    %2278 = vmatpush.bf16.msra.mxu0 %v2155
    %2279 = vmatpush.bf16.msra.mxu0 %v2153
    %2280 = vmatpush.bf16.msra.mxu0 %v2151
    %2281 = vmatpush.bf16.msra.mxu0 %v2149
    %2282 = vmatpush.bf16.msra.mxu0 %v2147
    %2283 = vmatpush.bf16.msra.mxu0 %v2145
    %2284 = vmatpush.bf16.msra.mxu0 %v2143
    %2285 = vmatmul.bf16.gmra.mxu0 %v1985
    %v2286 = vpop.f32.mrf.mxu0
    %v2287 = vadd.f32 %v2258, %v2286
    %v2288 = vpop.f32.mrf.mxu0
    %v2289 = vadd.f32 %v2260, %v2288
    %2290 = vmatmul.bf16.gmra.mxu0 %v1987
    %v2291 = vpop.f32.mrf.mxu0
    %v2292 = vadd.f32 %v2263, %v2291
    %v2293 = vpop.f32.mrf.mxu0
    %v2294 = vadd.f32 %v2265, %v2293
    %2295 = vmatmul.bf16.gmra.mxu0 %v1989
    %v2296 = vpop.f32.mrf.mxu0
    %v2297 = vadd.f32 %v2268, %v2296
    %v2298 = vpop.f32.mrf.mxu0
    %v2299 = vadd.f32 %v2270, %v2298
    %2300 = vmatmul.bf16.gmra.mxu0 %v1991
    %v2301 = vpop.f32.mrf.mxu0
    %v2302 = vadd.f32 %v2273, %v2301
    %v2303 = vpop.f32.mrf.mxu0
    %v2304 = vadd.f32 %v2275, %v2303
    %2305 = vdwg.mxu0
    %2306 = vst [vmem:[#allocation2] sm:$0xff] %v2229
    %2307 = vst [vmem:[#allocation2 + $0x10] sm:$0xff] %v2231
    %2308 = vst [vmem:[#allocation2 + $0x20] sm:$0xff] %v2234
    %2309 = vst [vmem:[#allocation2 + $0x30] sm:$0xff] %v2236
    %2310 = vst [vmem:[#allocation2 + $0x40] sm:$0xff] %v2239
    %2311 = vst [vmem:[#allocation2 + $0x50] sm:$0xff] %v2241
    %2312 = vst [vmem:[#allocation2 + $0x60] sm:$0xff] %v2244
    %2313 = vst [vmem:[#allocation2 + $0x70] sm:$0xff] %v2246
    %2314 = vst [vmem:[#allocation2 + $0x8] sm:$0xff] %v2304
    %2315 = vst [vmem:[%s160 + $0x8] sm:$0xff] %v2302
    %2316 = vst [vmem:[%s162 + $0x8] sm:$0xff] %v2299
    %2317 = vst [vmem:[%s164 + $0x8] sm:$0xff] %v2297
    %2318 = vst [vmem:[%s166 + $0x8] sm:$0xff] %v2294
    %2319 = vst [vmem:[%s168 + $0x8] sm:$0xff] %v2292
    %2320 = vst [vmem:[%s170 + $0x8] sm:$0xff] %v2289
    %2321 = vst [vmem:[%s172 + $0x8] sm:$0xff] %v2287
    %v2322 = vld [vmem:[#allocation2] sm:$0xff]
    %v2323 = vld [vmem:[#allocation2 + $0x8] sm:$0xff]
    %v2324 = vtanh.pop %v2322
    %v2325 = vtanh.pop %v2323
    %2326 = vst [vmem:[#allocation4] sm:$0xff] %v2324
    %s2327 = scalar_lea.vmem [#allocation4], 112
    %2328 = vst [vmem:[%s2327 + $0x8] sm:$0xff] %v2325
    %v2329 = vld [vmem:[%s160] sm:$0xff]
    %v2330 = vld [vmem:[%s160 + $0x8] sm:$0xff]
    %v2331 = vpack.c.bf16 %v2324, %v2324
    %v2332 = vpack.c.bf16 %v2325, %v2325
    %v2333 = vld [vmem:[%s5] sm:$0xff]
    %v2334 = vld [vmem:[%s5 + $0x8] sm:$0xff]
    %v2335 = vld [vmem:[%s5 + $0x10] sm:$0xff]
    %v2336 = vld [vmem:[%s5 + $0x18] sm:$0xff]
    %v2337 = vld [vmem:[%s5 + $0x20] sm:$0xff]
    %v2338 = vld [vmem:[%s5 + $0x28] sm:$0xff]
    %v2339 = vld [vmem:[%s5 + $0x30] sm:$0xff]
    %v2340 = vld [vmem:[%s5 + $0x38] sm:$0xff]
    %v2341 = vld [vmem:[%s5 + $0x40] sm:$0xff]
    %v2342 = vld [vmem:[%s5 + $0x48] sm:$0xff]
    %v2343 = vld [vmem:[%s5 + $0x50] sm:$0xff]
    %v2344 = vld [vmem:[%s5 + $0x58] sm:$0xff]
    %v2345 = vld [vmem:[%s5 + $0x60] sm:$0xff]
    %v2346 = vld [vmem:[%s5 + $0x68] sm:$0xff]
    %v2347 = vld [vmem:[%s5 + $0x70] sm:$0xff]
    %v2348 = vld [vmem:[%s5 + $0x78] sm:$0xff]
    %v2349 = vld [vmem:[%s5 + $0x80] sm:$0xff]
    %v2350 = vld [vmem:[%s5 + $0x88] sm:$0xff]
    %v2351 = vld [vmem:[%s5 + $0x90] sm:$0xff]
    %v2352 = vld [vmem:[%s5 + $0x98] sm:$0xff]
    %v2353 = vld [vmem:[%s5 + $0xa0] sm:$0xff]
    %v2354 = vld [vmem:[%s5 + $0xa8] sm:$0xff]
    %v2355 = vld [vmem:[%s5 + $0xb0] sm:$0xff]
    %v2356 = vld [vmem:[%s5 + $0xb8] sm:$0xff]
    %v2357 = vld [vmem:[%s5 + $0xc0] sm:$0xff]
    %v2358 = vld [vmem:[%s5 + $0xc8] sm:$0xff]
    %v2359 = vld [vmem:[%s5 + $0xd0] sm:$0xff]
    %v2360 = vld [vmem:[%s5 + $0xd8] sm:$0xff]
    %v2361 = vld [vmem:[%s5 + $0xe0] sm:$0xff]
    %v2362 = vld [vmem:[%s5 + $0xe8] sm:$0xff]
    %v2363 = vld [vmem:[%s5 + $0xf0] sm:$0xff]
    %v2364 = vld [vmem:[%s5 + $0xf8] sm:$0xff]
    %v2397 = vunpack.c.l.b16 %v2333
    %v2398 = vunpack.c.h.b16 %v2333
    %v2399 = vunpack.c.l.b16 %v2334
    %v2400 = vunpack.c.h.b16 %v2334
    %v2401 = vunpack.c.l.b16 %v2335
    %v2402 = vunpack.c.h.b16 %v2335
    %v2403 = vunpack.c.l.b16 %v2336
    %v2404 = vunpack.c.h.b16 %v2336
    %v2405 = vunpack.c.l.b16 %v2337
    %v2406 = vunpack.c.h.b16 %v2337
    %v2407 = vunpack.c.l.b16 %v2338
    %v2408 = vunpack.c.h.b16 %v2338
    %v2409 = vunpack.c.l.b16 %v2339
    %v2410 = vunpack.c.h.b16 %v2339
    %v2411 = vunpack.c.l.b16 %v2340
    %v2412 = vunpack.c.h.b16 %v2340
    %v2413 = vunpack.c.l.b16 %v2341
    %v2414 = vunpack.c.h.b16 %v2341
    %v2415 = vunpack.c.l.b16 %v2342
    %v2416 = vunpack.c.h.b16 %v2342
    %v2417 = vunpack.c.l.b16 %v2343
    %v2418 = vunpack.c.h.b16 %v2343
    %v2419 = vunpack.c.l.b16 %v2344
    %v2420 = vunpack.c.h.b16 %v2344
    %v2421 = vunpack.c.l.b16 %v2345
    %v2422 = vunpack.c.h.b16 %v2345
    %v2423 = vunpack.c.l.b16 %v2346
    %v2424 = vunpack.c.h.b16 %v2346
    %v2425 = vunpack.c.l.b16 %v2347
    %v2426 = vunpack.c.h.b16 %v2347
    %v2427 = vunpack.c.l.b16 %v2348
    %v2428 = vunpack.c.h.b16 %v2348
    %v2429 = vunpack.c.l.b16 %v2349
    %v2430 = vunpack.c.h.b16 %v2349
    %v2431 = vunpack.c.l.b16 %v2350
    %v2432 = vunpack.c.h.b16 %v2350
    %v2433 = vunpack.c.l.b16 %v2351
    %v2434 = vunpack.c.h.b16 %v2351
    %v2435 = vunpack.c.l.b16 %v2352
    %v2436 = vunpack.c.h.b16 %v2352
    %v2437 = vunpack.c.l.b16 %v2353
    %v2438 = vunpack.c.h.b16 %v2353
    %v2439 = vunpack.c.l.b16 %v2354
    %v2440 = vunpack.c.h.b16 %v2354
    %v2441 = vunpack.c.l.b16 %v2355
    %v2442 = vunpack.c.h.b16 %v2355
    %v2443 = vunpack.c.l.b16 %v2356
    %v2444 = vunpack.c.h.b16 %v2356
    %v2445 = vunpack.c.l.b16 %v2357
    %v2446 = vunpack.c.h.b16 %v2357
    %v2447 = vunpack.c.l.b16 %v2358
    %v2448 = vunpack.c.h.b16 %v2358
    %v2449 = vunpack.c.l.b16 %v2359
    %v2450 = vunpack.c.h.b16 %v2359
    %v2451 = vunpack.c.l.b16 %v2360
    %v2452 = vunpack.c.h.b16 %v2360
    %v2453 = vunpack.c.l.b16 %v2361
    %v2454 = vunpack.c.h.b16 %v2361
    %v2455 = vunpack.c.l.b16 %v2362
    %v2456 = vunpack.c.h.b16 %v2362
    %v2457 = vunpack.c.l.b16 %v2363
    %v2458 = vunpack.c.h.b16 %v2363
    %v2459 = vunpack.c.l.b16 %v2364
    %v2460 = vunpack.c.h.b16 %v2364
    %v2461 = vpack.c.b16 %v2399, %v2397
    %v2462 = vpack.c.b16 %v2400, %v2398
    %v2463 = vpack.c.b16 %v2403, %v2401
    %v2464 = vpack.c.b16 %v2404, %v2402
    %v2465 = vpack.c.b16 %v2407, %v2405
    %v2466 = vpack.c.b16 %v2408, %v2406
    %v2467 = vpack.c.b16 %v2411, %v2409
    %v2468 = vpack.c.b16 %v2412, %v2410
    %v2469 = vpack.c.b16 %v2415, %v2413
    %v2470 = vpack.c.b16 %v2416, %v2414
    %v2471 = vpack.c.b16 %v2419, %v2417
    %v2472 = vpack.c.b16 %v2420, %v2418
    %v2473 = vpack.c.b16 %v2423, %v2421
    %v2474 = vpack.c.b16 %v2424, %v2422
    %v2475 = vpack.c.b16 %v2427, %v2425
    %v2476 = vpack.c.b16 %v2428, %v2426
    %v2477 = vpack.c.b16 %v2431, %v2429
    %v2478 = vpack.c.b16 %v2432, %v2430
    %v2479 = vpack.c.b16 %v2435, %v2433
    %v2480 = vpack.c.b16 %v2436, %v2434
    %v2481 = vpack.c.b16 %v2439, %v2437
    %v2482 = vpack.c.b16 %v2440, %v2438
    %v2483 = vpack.c.b16 %v2443, %v2441
    %v2484 = vpack.c.b16 %v2444, %v2442
    %v2485 = vpack.c.b16 %v2447, %v2445
    %v2486 = vpack.c.b16 %v2448, %v2446
    %v2487 = vpack.c.b16 %v2451, %v2449
    %v2488 = vpack.c.b16 %v2452, %v2450
    %v2489 = vpack.c.b16 %v2455, %v2453
    %v2490 = vpack.c.b16 %v2456, %v2454
    %v2491 = vpack.c.b16 %v2459, %v2457
    %v2492 = vpack.c.b16 %v2460, %v2458
    %2525 = vmatpush.bf16.msra.mxu0 %v2475
    %2526 = vmatpush.bf16.msra.mxu0 %v2473
    %2527 = vmatpush.bf16.msra.mxu0 %v2471
    %2528 = vmatpush.bf16.msra.mxu0 %v2469
    %2529 = vmatpush.bf16.msra.mxu0 %v2467
    %2530 = vmatpush.bf16.msra.mxu0 %v2465
    %2531 = vmatpush.bf16.msra.mxu0 %v2463
    %2532 = vmatpush.bf16.msra.mxu0 %v2461
    %2533 = vmatmul.bf16.gmra.mxu0 %v2331
    %v2534 = vpop.f32.mrf.mxu0
    %v2535 = vadd.f32 0.0, %v2534
    %v2536 = vpop.f32.mrf.mxu0
    %2537 = vdwg.mxu0
    %2538 = vmatpush.bf16.msra.mxu0 %v2491
    %2539 = vmatpush.bf16.msra.mxu0 %v2489
    %2540 = vmatpush.bf16.msra.mxu0 %v2487
    %2541 = vmatpush.bf16.msra.mxu0 %v2485
    %2542 = vmatpush.bf16.msra.mxu0 %v2483
    %2543 = vmatpush.bf16.msra.mxu0 %v2481
    %2544 = vmatpush.bf16.msra.mxu0 %v2479
    %2545 = vmatpush.bf16.msra.mxu0 %v2477
    %2546 = vmatmul.bf16.gmra.mxu0 %v2332
    %v2547 = vpop.f32.mrf.mxu0
    %v2548 = vadd.f32 %v2535, %v2547
    %v2549 = vpop.f32.mrf.mxu0
    %2550 = vdwg.mxu0
    %2551 = vmatpush.bf16.msra.mxu0 %v2476
    %2552 = vmatpush.bf16.msra.mxu0 %v2474
    %2553 = vmatpush.bf16.msra.mxu0 %v2472
    %2554 = vmatpush.bf16.msra.mxu0 %v2470
    %2555 = vmatpush.bf16.msra.mxu0 %v2468
    %2556 = vmatpush.bf16.msra.mxu0 %v2466
    %2557 = vmatpush.bf16.msra.mxu0 %v2464
    %2558 = vmatpush.bf16.msra.mxu0 %v2462
    %2559 = vmatmul.bf16.gmra.mxu0 %v2331
    %v2560 = vpop.f32.mrf.mxu0
    %v2561 = vadd.f32 0.0, %v2560
    %v2562 = vpop.f32.mrf.mxu0
    %2563 = vdwg.mxu0
    %2564 = vmatpush.bf16.msra.mxu0 %v2492
    %2565 = vmatpush.bf16.msra.mxu0 %v2490
    %2566 = vmatpush.bf16.msra.mxu0 %v2488
    %2567 = vmatpush.bf16.msra.mxu0 %v2486
    %2568 = vmatpush.bf16.msra.mxu0 %v2484
    %2569 = vmatpush.bf16.msra.mxu0 %v2482
    %2570 = vmatpush.bf16.msra.mxu0 %v2480
    %2571 = vmatpush.bf16.msra.mxu0 %v2478
    %2572 = vmatmul.bf16.gmra.mxu0 %v2332
    %v2573 = vpop.f32.mrf.mxu0
    %v2574 = vadd.f32 %v2561, %v2573
    %v2575 = vpop.f32.mrf.mxu0
    %2576 = vdwg.mxu0
    %v2577 = vadd.f32 %v2329, %v2548
    %v2578 = vadd.f32 %v2330, %v2574
    %v2579 = vtanh.pop %v2577
    %v2580 = vtanh.pop %v2578
    %s2581 = scalar_lea.vmem [#allocation4], 16
    %2582 = vst [vmem:[%s2581] sm:$0xff] %v2579
    %s2583 = scalar_lea.vmem [#allocation4], 96
    %2584 = vst [vmem:[%s2583 + $0x8] sm:$0xff] %v2580
    %v2585 = vld [vmem:[%s162] sm:$0xff]
    %v2586 = vld [vmem:[%s162 + $0x8] sm:$0xff]
    %v2587 = vpack.c.bf16 %v2579, %v2579
    %v2588 = vpack.c.bf16 %v2580, %v2580
    %v2589 = vld [vmem:[%s5] sm:$0xff]
    %v2590 = vld [vmem:[%s5 + $0x8] sm:$0xff]
    %v2591 = vld [vmem:[%s5 + $0x10] sm:$0xff]
    %v2592 = vld [vmem:[%s5 + $0x18] sm:$0xff]
    %v2593 = vld [vmem:[%s5 + $0x20] sm:$0xff]
    %v2594 = vld [vmem:[%s5 + $0x28] sm:$0xff]
    %v2595 = vld [vmem:[%s5 + $0x30] sm:$0xff]
    %v2596 = vld [vmem:[%s5 + $0x38] sm:$0xff]
    %v2597 = vld [vmem:[%s5 + $0x40] sm:$0xff]
    %v2598 = vld [vmem:[%s5 + $0x48] sm:$0xff]
    %v2599 = vld [vmem:[%s5 + $0x50] sm:$0xff]
    %v2600 = vld [vmem:[%s5 + $0x58] sm:$0xff]
    %v2601 = vld [vmem:[%s5 + $0x60] sm:$0xff]
    %v2602 = vld [vmem:[%s5 + $0x68] sm:$0xff]
    %v2603 = vld [vmem:[%s5 + $0x70] sm:$0xff]
    %v2604 = vld [vmem:[%s5 + $0x78] sm:$0xff]
    %v2605 = vld [vmem:[%s5 + $0x80] sm:$0xff]
    %v2606 = vld [vmem:[%s5 + $0x88] sm:$0xff]
    %v2607 = vld [vmem:[%s5 + $0x90] sm:$0xff]
    %v2608 = vld [vmem:[%s5 + $0x98] sm:$0xff]
    %v2609 = vld [vmem:[%s5 + $0xa0] sm:$0xff]
    %v2610 = vld [vmem:[%s5 + $0xa8] sm:$0xff]
    %v2611 = vld [vmem:[%s5 + $0xb0] sm:$0xff]
    %v2612 = vld [vmem:[%s5 + $0xb8] sm:$0xff]
    %v2613 = vld [vmem:[%s5 + $0xc0] sm:$0xff]
    %v2614 = vld [vmem:[%s5 + $0xc8] sm:$0xff]
    %v2615 = vld [vmem:[%s5 + $0xd0] sm:$0xff]
    %v2616 = vld [vmem:[%s5 + $0xd8] sm:$0xff]
    %v2617 = vld [vmem:[%s5 + $0xe0] sm:$0xff]
    %v2618 = vld [vmem:[%s5 + $0xe8] sm:$0xff]
    %v2619 = vld [vmem:[%s5 + $0xf0] sm:$0xff]
    %v2620 = vld [vmem:[%s5 + $0xf8] sm:$0xff]
    %v2653 = vunpack.c.l.b16 %v2589
    %v2654 = vunpack.c.h.b16 %v2589
    %v2655 = vunpack.c.l.b16 %v2590
    %v2656 = vunpack.c.h.b16 %v2590
    %v2657 = vunpack.c.l.b16 %v2591
    %v2658 = vunpack.c.h.b16 %v2591
    %v2659 = vunpack.c.l.b16 %v2592
    %v2660 = vunpack.c.h.b16 %v2592
    %v2661 = vunpack.c.l.b16 %v2593
    %v2662 = vunpack.c.h.b16 %v2593
    %v2663 = vunpack.c.l.b16 %v2594
    %v2664 = vunpack.c.h.b16 %v2594
    %v2665 = vunpack.c.l.b16 %v2595
    %v2666 = vunpack.c.h.b16 %v2595
    %v2667 = vunpack.c.l.b16 %v2596
    %v2668 = vunpack.c.h.b16 %v2596
    %v2669 = vunpack.c.l.b16 %v2597
    %v2670 = vunpack.c.h.b16 %v2597
    %v2671 = vunpack.c.l.b16 %v2598
    %v2672 = vunpack.c.h.b16 %v2598
    %v2673 = vunpack.c.l.b16 %v2599
    %v2674 = vunpack.c.h.b16 %v2599
    %v2675 = vunpack.c.l.b16 %v2600
    %v2676 = vunpack.c.h.b16 %v2600
    %v2677 = vunpack.c.l.b16 %v2601
    %v2678 = vunpack.c.h.b16 %v2601
    %v2679 = vunpack.c.l.b16 %v2602
    %v2680 = vunpack.c.h.b16 %v2602
    %v2681 = vunpack.c.l.b16 %v2603
    %v2682 = vunpack.c.h.b16 %v2603
    %v2683 = vunpack.c.l.b16 %v2604
    %v2684 = vunpack.c.h.b16 %v2604
    %v2685 = vunpack.c.l.b16 %v2605
    %v2686 = vunpack.c.h.b16 %v2605
    %v2687 = vunpack.c.l.b16 %v2606
    %v2688 = vunpack.c.h.b16 %v2606
    %v2689 = vunpack.c.l.b16 %v2607
    %v2690 = vunpack.c.h.b16 %v2607
    %v2691 = vunpack.c.l.b16 %v2608
    %v2692 = vunpack.c.h.b16 %v2608
    %v2693 = vunpack.c.l.b16 %v2609
    %v2694 = vunpack.c.h.b16 %v2609
    %v2695 = vunpack.c.l.b16 %v2610
    %v2696 = vunpack.c.h.b16 %v2610
    %v2697 = vunpack.c.l.b16 %v2611
    %v2698 = vunpack.c.h.b16 %v2611
    %v2699 = vunpack.c.l.b16 %v2612
    %v2700 = vunpack.c.h.b16 %v2612
    %v2701 = vunpack.c.l.b16 %v2613
    %v2702 = vunpack.c.h.b16 %v2613
    %v2703 = vunpack.c.l.b16 %v2614
    %v2704 = vunpack.c.h.b16 %v2614
    %v2705 = vunpack.c.l.b16 %v2615
    %v2706 = vunpack.c.h.b16 %v2615
    %v2707 = vunpack.c.l.b16 %v2616
    %v2708 = vunpack.c.h.b16 %v2616
    %v2709 = vunpack.c.l.b16 %v2617
    %v2710 = vunpack.c.h.b16 %v2617
    %v2711 = vunpack.c.l.b16 %v2618
    %v2712 = vunpack.c.h.b16 %v2618
    %v2713 = vunpack.c.l.b16 %v2619
    %v2714 = vunpack.c.h.b16 %v2619
    %v2715 = vunpack.c.l.b16 %v2620
    %v2716 = vunpack.c.h.b16 %v2620
    %v2717 = vpack.c.b16 %v2655, %v2653
    %v2718 = vpack.c.b16 %v2656, %v2654
    %v2719 = vpack.c.b16 %v2659, %v2657
    %v2720 = vpack.c.b16 %v2660, %v2658
    %v2721 = vpack.c.b16 %v2663, %v2661
    %v2722 = vpack.c.b16 %v2664, %v2662
    %v2723 = vpack.c.b16 %v2667, %v2665
    %v2724 = vpack.c.b16 %v2668, %v2666
    %v2725 = vpack.c.b16 %v2671, %v2669
    %v2726 = vpack.c.b16 %v2672, %v2670
    %v2727 = vpack.c.b16 %v2675, %v2673
    %v2728 = vpack.c.b16 %v2676, %v2674
    %v2729 = vpack.c.b16 %v2679, %v2677
    %v2730 = vpack.c.b16 %v2680, %v2678
    %v2731 = vpack.c.b16 %v2683, %v2681
    %v2732 = vpack.c.b16 %v2684, %v2682
    %v2733 = vpack.c.b16 %v2687, %v2685
    %v2734 = vpack.c.b16 %v2688, %v2686
    %v2735 = vpack.c.b16 %v2691, %v2689
    %v2736 = vpack.c.b16 %v2692, %v2690
    %v2737 = vpack.c.b16 %v2695, %v2693
    %v2738 = vpack.c.b16 %v2696, %v2694
    %v2739 = vpack.c.b16 %v2699, %v2697
    %v2740 = vpack.c.b16 %v2700, %v2698
    %v2741 = vpack.c.b16 %v2703, %v2701
    %v2742 = vpack.c.b16 %v2704, %v2702
    %v2743 = vpack.c.b16 %v2707, %v2705
    %v2744 = vpack.c.b16 %v2708, %v2706
    %v2745 = vpack.c.b16 %v2711, %v2709
    %v2746 = vpack.c.b16 %v2712, %v2710
    %v2747 = vpack.c.b16 %v2715, %v2713
    %v2748 = vpack.c.b16 %v2716, %v2714
    %2781 = vmatpush.bf16.msra.mxu0 %v2731
    %2782 = vmatpush.bf16.msra.mxu0 %v2729
    %2783 = vmatpush.bf16.msra.mxu0 %v2727
    %2784 = vmatpush.bf16.msra.mxu0 %v2725
    %2785 = vmatpush.bf16.msra.mxu0 %v2723
    %2786 = vmatpush.bf16.msra.mxu0 %v2721
    %2787 = vmatpush.bf16.msra.mxu0 %v2719
    %2788 = vmatpush.bf16.msra.mxu0 %v2717
    %2789 = vmatmul.bf16.gmra.mxu0 %v2587
    %v2790 = vpop.f32.mrf.mxu0
    %v2791 = vadd.f32 0.0, %v2790
    %v2792 = vpop.f32.mrf.mxu0
    %2793 = vdwg.mxu0
    %2794 = vmatpush.bf16.msra.mxu0 %v2747
    %2795 = vmatpush.bf16.msra.mxu0 %v2745
    %2796 = vmatpush.bf16.msra.mxu0 %v2743
    %2797 = vmatpush.bf16.msra.mxu0 %v2741
    %2798 = vmatpush.bf16.msra.mxu0 %v2739
    %2799 = vmatpush.bf16.msra.mxu0 %v2737
    %2800 = vmatpush.bf16.msra.mxu0 %v2735
    %2801 = vmatpush.bf16.msra.mxu0 %v2733
    %2802 = vmatmul.bf16.gmra.mxu0 %v2588
    %v2803 = vpop.f32.mrf.mxu0
    %v2804 = vadd.f32 %v2791, %v2803
    %v2805 = vpop.f32.mrf.mxu0
    %2806 = vdwg.mxu0
    %2807 = vmatpush.bf16.msra.mxu0 %v2732
    %2808 = vmatpush.bf16.msra.mxu0 %v2730
    %2809 = vmatpush.bf16.msra.mxu0 %v2728
    %2810 = vmatpush.bf16.msra.mxu0 %v2726
    %2811 = vmatpush.bf16.msra.mxu0 %v2724
    %2812 = vmatpush.bf16.msra.mxu0 %v2722
    %2813 = vmatpush.bf16.msra.mxu0 %v2720
    %2814 = vmatpush.bf16.msra.mxu0 %v2718
    %2815 = vmatmul.bf16.gmra.mxu0 %v2587
    %v2816 = vpop.f32.mrf.mxu0
    %v2817 = vadd.f32 0.0, %v2816
    %v2818 = vpop.f32.mrf.mxu0
    %2819 = vdwg.mxu0
    %2820 = vmatpush.bf16.msra.mxu0 %v2748
    %2821 = vmatpush.bf16.msra.mxu0 %v2746
    %2822 = vmatpush.bf16.msra.mxu0 %v2744
    %2823 = vmatpush.bf16.msra.mxu0 %v2742
    %2824 = vmatpush.bf16.msra.mxu0 %v2740
    %2825 = vmatpush.bf16.msra.mxu0 %v2738
    %2826 = vmatpush.bf16.msra.mxu0 %v2736
    %2827 = vmatpush.bf16.msra.mxu0 %v2734
    %2828 = vmatmul.bf16.gmra.mxu0 %v2588
    %v2829 = vpop.f32.mrf.mxu0
    %v2830 = vadd.f32 %v2817, %v2829
    %v2831 = vpop.f32.mrf.mxu0
    %2832 = vdwg.mxu0
    %v2833 = vadd.f32 %v2585, %v2804
    %v2834 = vadd.f32 %v2586, %v2830
    %v2835 = vtanh.pop %v2833
    %v2836 = vtanh.pop %v2834
    %s2837 = scalar_lea.vmem [#allocation4], 32
    %2838 = vst [vmem:[%s2837] sm:$0xff] %v2835
    %s2839 = scalar_lea.vmem [#allocation4], 80
    %2840 = vst [vmem:[%s2839 + $0x8] sm:$0xff] %v2836
    %v2841 = vld [vmem:[%s164] sm:$0xff]
    %v2842 = vld [vmem:[%s164 + $0x8] sm:$0xff]
    %v2843 = vpack.c.bf16 %v2835, %v2835
    %v2844 = vpack.c.bf16 %v2836, %v2836
    %v2845 = vld [vmem:[%s5] sm:$0xff]
    %v2846 = vld [vmem:[%s5 + $0x8] sm:$0xff]
    %v2847 = vld [vmem:[%s5 + $0x10] sm:$0xff]
    %v2848 = vld [vmem:[%s5 + $0x18] sm:$0xff]
    %v2849 = vld [vmem:[%s5 + $0x20] sm:$0xff]
    %v2850 = vld [vmem:[%s5 + $0x28] sm:$0xff]
    %v2851 = vld [vmem:[%s5 + $0x30] sm:$0xff]
    %v2852 = vld [vmem:[%s5 + $0x38] sm:$0xff]
    %v2853 = vld [vmem:[%s5 + $0x40] sm:$0xff]
    %v2854 = vld [vmem:[%s5 + $0x48] sm:$0xff]
    %v2855 = vld [vmem:[%s5 + $0x50] sm:$0xff]
    %v2856 = vld [vmem:[%s5 + $0x58] sm:$0xff]
    %v2857 = vld [vmem:[%s5 + $0x60] sm:$0xff]
    %v2858 = vld [vmem:[%s5 + $0x68] sm:$0xff]
    %v2859 = vld [vmem:[%s5 + $0x70] sm:$0xff]
    %v2860 = vld [vmem:[%s5 + $0x78] sm:$0xff]
    %v2861 = vld [vmem:[%s5 + $0x80] sm:$0xff]
    %v2862 = vld [vmem:[%s5 + $0x88] sm:$0xff]
    %v2863 = vld [vmem:[%s5 + $0x90] sm:$0xff]
    %v2864 = vld [vmem:[%s5 + $0x98] sm:$0xff]
    %v2865 = vld [vmem:[%s5 + $0xa0] sm:$0xff]
    %v2866 = vld [vmem:[%s5 + $0xa8] sm:$0xff]
    %v2867 = vld [vmem:[%s5 + $0xb0] sm:$0xff]
    %v2868 = vld [vmem:[%s5 + $0xb8] sm:$0xff]
    %v2869 = vld [vmem:[%s5 + $0xc0] sm:$0xff]
    %v2870 = vld [vmem:[%s5 + $0xc8] sm:$0xff]
    %v2871 = vld [vmem:[%s5 + $0xd0] sm:$0xff]
    %v2872 = vld [vmem:[%s5 + $0xd8] sm:$0xff]
    %v2873 = vld [vmem:[%s5 + $0xe0] sm:$0xff]
    %v2874 = vld [vmem:[%s5 + $0xe8] sm:$0xff]
    %v2875 = vld [vmem:[%s5 + $0xf0] sm:$0xff]
    %v2876 = vld [vmem:[%s5 + $0xf8] sm:$0xff]
    %v2909 = vunpack.c.l.b16 %v2845
    %v2910 = vunpack.c.h.b16 %v2845
    %v2911 = vunpack.c.l.b16 %v2846
    %v2912 = vunpack.c.h.b16 %v2846
    %v2913 = vunpack.c.l.b16 %v2847
    %v2914 = vunpack.c.h.b16 %v2847
    %v2915 = vunpack.c.l.b16 %v2848
    %v2916 = vunpack.c.h.b16 %v2848
    %v2917 = vunpack.c.l.b16 %v2849
    %v2918 = vunpack.c.h.b16 %v2849
    %v2919 = vunpack.c.l.b16 %v2850
    %v2920 = vunpack.c.h.b16 %v2850
    %v2921 = vunpack.c.l.b16 %v2851
    %v2922 = vunpack.c.h.b16 %v2851
    %v2923 = vunpack.c.l.b16 %v2852
    %v2924 = vunpack.c.h.b16 %v2852
    %v2925 = vunpack.c.l.b16 %v2853
    %v2926 = vunpack.c.h.b16 %v2853
    %v2927 = vunpack.c.l.b16 %v2854
    %v2928 = vunpack.c.h.b16 %v2854
    %v2929 = vunpack.c.l.b16 %v2855
    %v2930 = vunpack.c.h.b16 %v2855
    %v2931 = vunpack.c.l.b16 %v2856
    %v2932 = vunpack.c.h.b16 %v2856
    %v2933 = vunpack.c.l.b16 %v2857
    %v2934 = vunpack.c.h.b16 %v2857
    %v2935 = vunpack.c.l.b16 %v2858
    %v2936 = vunpack.c.h.b16 %v2858
    %v2937 = vunpack.c.l.b16 %v2859
    %v2938 = vunpack.c.h.b16 %v2859
    %v2939 = vunpack.c.l.b16 %v2860
    %v2940 = vunpack.c.h.b16 %v2860
    %v2941 = vunpack.c.l.b16 %v2861
    %v2942 = vunpack.c.h.b16 %v2861
    %v2943 = vunpack.c.l.b16 %v2862
    %v2944 = vunpack.c.h.b16 %v2862
    %v2945 = vunpack.c.l.b16 %v2863
    %v2946 = vunpack.c.h.b16 %v2863
    %v2947 = vunpack.c.l.b16 %v2864
    %v2948 = vunpack.c.h.b16 %v2864
    %v2949 = vunpack.c.l.b16 %v2865
    %v2950 = vunpack.c.h.b16 %v2865
    %v2951 = vunpack.c.l.b16 %v2866
    %v2952 = vunpack.c.h.b16 %v2866
    %v2953 = vunpack.c.l.b16 %v2867
    %v2954 = vunpack.c.h.b16 %v2867
    %v2955 = vunpack.c.l.b16 %v2868
    %v2956 = vunpack.c.h.b16 %v2868
    %v2957 = vunpack.c.l.b16 %v2869
    %v2958 = vunpack.c.h.b16 %v2869
    %v2959 = vunpack.c.l.b16 %v2870
    %v2960 = vunpack.c.h.b16 %v2870
    %v2961 = vunpack.c.l.b16 %v2871
    %v2962 = vunpack.c.h.b16 %v2871
    %v2963 = vunpack.c.l.b16 %v2872
    %v2964 = vunpack.c.h.b16 %v2872
    %v2965 = vunpack.c.l.b16 %v2873
    %v2966 = vunpack.c.h.b16 %v2873
    %v2967 = vunpack.c.l.b16 %v2874
    %v2968 = vunpack.c.h.b16 %v2874
    %v2969 = vunpack.c.l.b16 %v2875
    %v2970 = vunpack.c.h.b16 %v2875
    %v2971 = vunpack.c.l.b16 %v2876
    %v2972 = vunpack.c.h.b16 %v2876
    %v2973 = vpack.c.b16 %v2911, %v2909
    %v2974 = vpack.c.b16 %v2912, %v2910
    %v2975 = vpack.c.b16 %v2915, %v2913
    %v2976 = vpack.c.b16 %v2916, %v2914
    %v2977 = vpack.c.b16 %v2919, %v2917
    %v2978 = vpack.c.b16 %v2920, %v2918
    %v2979 = vpack.c.b16 %v2923, %v2921
    %v2980 = vpack.c.b16 %v2924, %v2922
    %v2981 = vpack.c.b16 %v2927, %v2925
    %v2982 = vpack.c.b16 %v2928, %v2926
    %v2983 = vpack.c.b16 %v2931, %v2929
    %v2984 = vpack.c.b16 %v2932, %v2930
    %v2985 = vpack.c.b16 %v2935, %v2933
    %v2986 = vpack.c.b16 %v2936, %v2934
    %v2987 = vpack.c.b16 %v2939, %v2937
    %v2988 = vpack.c.b16 %v2940, %v2938
    %v2989 = vpack.c.b16 %v2943, %v2941
    %v2990 = vpack.c.b16 %v2944, %v2942
    %v2991 = vpack.c.b16 %v2947, %v2945
    %v2992 = vpack.c.b16 %v2948, %v2946
    %v2993 = vpack.c.b16 %v2951, %v2949
    %v2994 = vpack.c.b16 %v2952, %v2950
    %v2995 = vpack.c.b16 %v2955, %v2953
    %v2996 = vpack.c.b16 %v2956, %v2954
    %v2997 = vpack.c.b16 %v2959, %v2957
    %v2998 = vpack.c.b16 %v2960, %v2958
    %v2999 = vpack.c.b16 %v2963, %v2961
    %v3000 = vpack.c.b16 %v2964, %v2962
    %v3001 = vpack.c.b16 %v2967, %v2965
    %v3002 = vpack.c.b16 %v2968, %v2966
    %v3003 = vpack.c.b16 %v2971, %v2969
    %v3004 = vpack.c.b16 %v2972, %v2970
    %3037 = vmatpush.bf16.msra.mxu0 %v2987
    %3038 = vmatpush.bf16.msra.mxu0 %v2985
    %3039 = vmatpush.bf16.msra.mxu0 %v2983
    %3040 = vmatpush.bf16.msra.mxu0 %v2981
    %3041 = vmatpush.bf16.msra.mxu0 %v2979
    %3042 = vmatpush.bf16.msra.mxu0 %v2977
    %3043 = vmatpush.bf16.msra.mxu0 %v2975
    %3044 = vmatpush.bf16.msra.mxu0 %v2973
    %3045 = vmatmul.bf16.gmra.mxu0 %v2843
    %v3046 = vpop.f32.mrf.mxu0
    %v3047 = vadd.f32 0.0, %v3046
    %v3048 = vpop.f32.mrf.mxu0
    %3049 = vdwg.mxu0
    %3050 = vmatpush.bf16.msra.mxu0 %v3003
    %3051 = vmatpush.bf16.msra.mxu0 %v3001
    %3052 = vmatpush.bf16.msra.mxu0 %v2999
    %3053 = vmatpush.bf16.msra.mxu0 %v2997
    %3054 = vmatpush.bf16.msra.mxu0 %v2995
    %3055 = vmatpush.bf16.msra.mxu0 %v2993
    %3056 = vmatpush.bf16.msra.mxu0 %v2991
    %3057 = vmatpush.bf16.msra.mxu0 %v2989
    %3058 = vmatmul.bf16.gmra.mxu0 %v2844
    %v3059 = vpop.f32.mrf.mxu0
    %v3060 = vadd.f32 %v3047, %v3059
    %v3061 = vpop.f32.mrf.mxu0
    %3062 = vdwg.mxu0
    %3063 = vmatpush.bf16.msra.mxu0 %v2988
    %3064 = vmatpush.bf16.msra.mxu0 %v2986
    %3065 = vmatpush.bf16.msra.mxu0 %v2984
    %3066 = vmatpush.bf16.msra.mxu0 %v2982
    %3067 = vmatpush.bf16.msra.mxu0 %v2980
    %3068 = vmatpush.bf16.msra.mxu0 %v2978
    %3069 = vmatpush.bf16.msra.mxu0 %v2976
    %3070 = vmatpush.bf16.msra.mxu0 %v2974
    %3071 = vmatmul.bf16.gmra.mxu0 %v2843
    %v3072 = vpop.f32.mrf.mxu0
    %v3073 = vadd.f32 0.0, %v3072
    %v3074 = vpop.f32.mrf.mxu0
    %3075 = vdwg.mxu0
    %3076 = vmatpush.bf16.msra.mxu0 %v3004
    %3077 = vmatpush.bf16.msra.mxu0 %v3002
    %3078 = vmatpush.bf16.msra.mxu0 %v3000
    %3079 = vmatpush.bf16.msra.mxu0 %v2998
    %3080 = vmatpush.bf16.msra.mxu0 %v2996
    %3081 = vmatpush.bf16.msra.mxu0 %v2994
    %3082 = vmatpush.bf16.msra.mxu0 %v2992
    %3083 = vmatpush.bf16.msra.mxu0 %v2990
    %3084 = vmatmul.bf16.gmra.mxu0 %v2844
    %v3085 = vpop.f32.mrf.mxu0
    %v3086 = vadd.f32 %v3073, %v3085
    %v3087 = vpop.f32.mrf.mxu0
    %3088 = vdwg.mxu0
    %v3089 = vadd.f32 %v2841, %v3060
    %v3090 = vadd.f32 %v2842, %v3086
    %v3091 = vtanh.pop %v3089
    %v3092 = vtanh.pop %v3090
    %s3093 = scalar_lea.vmem [#allocation4], 48
    %3094 = vst [vmem:[%s3093] sm:$0xff] %v3091
    %s3095 = scalar_lea.vmem [#allocation4], 64
    %3096 = vst [vmem:[%s3095 + $0x8] sm:$0xff] %v3092
    %v3097 = vld [vmem:[%s166] sm:$0xff]
    %v3098 = vld [vmem:[%s166 + $0x8] sm:$0xff]
    %v3099 = vpack.c.bf16 %v3091, %v3091
    %v3100 = vpack.c.bf16 %v3092, %v3092
    %v3101 = vld [vmem:[%s5] sm:$0xff]
    %v3102 = vld [vmem:[%s5 + $0x8] sm:$0xff]
    %v3103 = vld [vmem:[%s5 + $0x10] sm:$0xff]
    %v3104 = vld [vmem:[%s5 + $0x18] sm:$0xff]
    %v3105 = vld [vmem:[%s5 + $0x20] sm:$0xff]
    %v3106 = vld [vmem:[%s5 + $0x28] sm:$0xff]
    %v3107 = vld [vmem:[%s5 + $0x30] sm:$0xff]
    %v3108 = vld [vmem:[%s5 + $0x38] sm:$0xff]
    %v3109 = vld [vmem:[%s5 + $0x40] sm:$0xff]
    %v3110 = vld [vmem:[%s5 + $0x48] sm:$0xff]
    %v3111 = vld [vmem:[%s5 + $0x50] sm:$0xff]
    %v3112 = vld [vmem:[%s5 + $0x58] sm:$0xff]
    %v3113 = vld [vmem:[%s5 + $0x60] sm:$0xff]
    %v3114 = vld [vmem:[%s5 + $0x68] sm:$0xff]
    %v3115 = vld [vmem:[%s5 + $0x70] sm:$0xff]
    %v3116 = vld [vmem:[%s5 + $0x78] sm:$0xff]
    %v3117 = vld [vmem:[%s5 + $0x80] sm:$0xff]
    %v3118 = vld [vmem:[%s5 + $0x88] sm:$0xff]
    %v3119 = vld [vmem:[%s5 + $0x90] sm:$0xff]
    %v3120 = vld [vmem:[%s5 + $0x98] sm:$0xff]
    %v3121 = vld [vmem:[%s5 + $0xa0] sm:$0xff]
    %v3122 = vld [vmem:[%s5 + $0xa8] sm:$0xff]
    %v3123 = vld [vmem:[%s5 + $0xb0] sm:$0xff]
    %v3124 = vld [vmem:[%s5 + $0xb8] sm:$0xff]
    %v3125 = vld [vmem:[%s5 + $0xc0] sm:$0xff]
    %v3126 = vld [vmem:[%s5 + $0xc8] sm:$0xff]
    %v3127 = vld [vmem:[%s5 + $0xd0] sm:$0xff]
    %v3128 = vld [vmem:[%s5 + $0xd8] sm:$0xff]
    %v3129 = vld [vmem:[%s5 + $0xe0] sm:$0xff]
    %v3130 = vld [vmem:[%s5 + $0xe8] sm:$0xff]
    %v3131 = vld [vmem:[%s5 + $0xf0] sm:$0xff]
    %v3132 = vld [vmem:[%s5 + $0xf8] sm:$0xff]
    %v3165 = vunpack.c.l.b16 %v3101
    %v3166 = vunpack.c.h.b16 %v3101
    %v3167 = vunpack.c.l.b16 %v3102
    %v3168 = vunpack.c.h.b16 %v3102
    %v3169 = vunpack.c.l.b16 %v3103
    %v3170 = vunpack.c.h.b16 %v3103
    %v3171 = vunpack.c.l.b16 %v3104
    %v3172 = vunpack.c.h.b16 %v3104
    %v3173 = vunpack.c.l.b16 %v3105
    %v3174 = vunpack.c.h.b16 %v3105
    %v3175 = vunpack.c.l.b16 %v3106
    %v3176 = vunpack.c.h.b16 %v3106
    %v3177 = vunpack.c.l.b16 %v3107
    %v3178 = vunpack.c.h.b16 %v3107
    %v3179 = vunpack.c.l.b16 %v3108
    %v3180 = vunpack.c.h.b16 %v3108
    %v3181 = vunpack.c.l.b16 %v3109
    %v3182 = vunpack.c.h.b16 %v3109
    %v3183 = vunpack.c.l.b16 %v3110
    %v3184 = vunpack.c.h.b16 %v3110
    %v3185 = vunpack.c.l.b16 %v3111
    %v3186 = vunpack.c.h.b16 %v3111
    %v3187 = vunpack.c.l.b16 %v3112
    %v3188 = vunpack.c.h.b16 %v3112
    %v3189 = vunpack.c.l.b16 %v3113
    %v3190 = vunpack.c.h.b16 %v3113
    %v3191 = vunpack.c.l.b16 %v3114
    %v3192 = vunpack.c.h.b16 %v3114
    %v3193 = vunpack.c.l.b16 %v3115
    %v3194 = vunpack.c.h.b16 %v3115
    %v3195 = vunpack.c.l.b16 %v3116
    %v3196 = vunpack.c.h.b16 %v3116
    %v3197 = vunpack.c.l.b16 %v3117
    %v3198 = vunpack.c.h.b16 %v3117
    %v3199 = vunpack.c.l.b16 %v3118
    %v3200 = vunpack.c.h.b16 %v3118
    %v3201 = vunpack.c.l.b16 %v3119
    %v3202 = vunpack.c.h.b16 %v3119
    %v3203 = vunpack.c.l.b16 %v3120
    %v3204 = vunpack.c.h.b16 %v3120
    %v3205 = vunpack.c.l.b16 %v3121
    %v3206 = vunpack.c.h.b16 %v3121
    %v3207 = vunpack.c.l.b16 %v3122
    %v3208 = vunpack.c.h.b16 %v3122
    %v3209 = vunpack.c.l.b16 %v3123
    %v3210 = vunpack.c.h.b16 %v3123
    %v3211 = vunpack.c.l.b16 %v3124
    %v3212 = vunpack.c.h.b16 %v3124
    %v3213 = vunpack.c.l.b16 %v3125
    %v3214 = vunpack.c.h.b16 %v3125
    %v3215 = vunpack.c.l.b16 %v3126
    %v3216 = vunpack.c.h.b16 %v3126
    %v3217 = vunpack.c.l.b16 %v3127
    %v3218 = vunpack.c.h.b16 %v3127
    %v3219 = vunpack.c.l.b16 %v3128
    %v3220 = vunpack.c.h.b16 %v3128
    %v3221 = vunpack.c.l.b16 %v3129
    %v3222 = vunpack.c.h.b16 %v3129
    %v3223 = vunpack.c.l.b16 %v3130
    %v3224 = vunpack.c.h.b16 %v3130
    %v3225 = vunpack.c.l.b16 %v3131
    %v3226 = vunpack.c.h.b16 %v3131
    %v3227 = vunpack.c.l.b16 %v3132
    %v3228 = vunpack.c.h.b16 %v3132
    %v3229 = vpack.c.b16 %v3167, %v3165
    %v3230 = vpack.c.b16 %v3168, %v3166
    %v3231 = vpack.c.b16 %v3171, %v3169
    %v3232 = vpack.c.b16 %v3172, %v3170
    %v3233 = vpack.c.b16 %v3175, %v3173
    %v3234 = vpack.c.b16 %v3176, %v3174
    %v3235 = vpack.c.b16 %v3179, %v3177
    %v3236 = vpack.c.b16 %v3180, %v3178
    %v3237 = vpack.c.b16 %v3183, %v3181
    %v3238 = vpack.c.b16 %v3184, %v3182
    %v3239 = vpack.c.b16 %v3187, %v3185
    %v3240 = vpack.c.b16 %v3188, %v3186
    %v3241 = vpack.c.b16 %v3191, %v3189
    %v3242 = vpack.c.b16 %v3192, %v3190
    %v3243 = vpack.c.b16 %v3195, %v3193
    %v3244 = vpack.c.b16 %v3196, %v3194
    %v3245 = vpack.c.b16 %v3199, %v3197
    %v3246 = vpack.c.b16 %v3200, %v3198
    %v3247 = vpack.c.b16 %v3203, %v3201
    %v3248 = vpack.c.b16 %v3204, %v3202
    %v3249 = vpack.c.b16 %v3207, %v3205
    %v3250 = vpack.c.b16 %v3208, %v3206
    %v3251 = vpack.c.b16 %v3211, %v3209
    %v3252 = vpack.c.b16 %v3212, %v3210
    %v3253 = vpack.c.b16 %v3215, %v3213
    %v3254 = vpack.c.b16 %v3216, %v3214
    %v3255 = vpack.c.b16 %v3219, %v3217
    %v3256 = vpack.c.b16 %v3220, %v3218
    %v3257 = vpack.c.b16 %v3223, %v3221
    %v3258 = vpack.c.b16 %v3224, %v3222
    %v3259 = vpack.c.b16 %v3227, %v3225
    %v3260 = vpack.c.b16 %v3228, %v3226
    %3293 = vmatpush.bf16.msra.mxu0 %v3243
    %3294 = vmatpush.bf16.msra.mxu0 %v3241
    %3295 = vmatpush.bf16.msra.mxu0 %v3239
    %3296 = vmatpush.bf16.msra.mxu0 %v3237
    %3297 = vmatpush.bf16.msra.mxu0 %v3235
    %3298 = vmatpush.bf16.msra.mxu0 %v3233
    %3299 = vmatpush.bf16.msra.mxu0 %v3231
    %3300 = vmatpush.bf16.msra.mxu0 %v3229
    %3301 = vmatmul.bf16.gmra.mxu0 %v3099
    %v3302 = vpop.f32.mrf.mxu0
    %v3303 = vadd.f32 0.0, %v3302
    %v3304 = vpop.f32.mrf.mxu0
    %3305 = vdwg.mxu0
    %3306 = vmatpush.bf16.msra.mxu0 %v3259
    %3307 = vmatpush.bf16.msra.mxu0 %v3257
    %3308 = vmatpush.bf16.msra.mxu0 %v3255
    %3309 = vmatpush.bf16.msra.mxu0 %v3253
    %3310 = vmatpush.bf16.msra.mxu0 %v3251
    %3311 = vmatpush.bf16.msra.mxu0 %v3249
    %3312 = vmatpush.bf16.msra.mxu0 %v3247
    %3313 = vmatpush.bf16.msra.mxu0 %v3245
    %3314 = vmatmul.bf16.gmra.mxu0 %v3100
    %v3315 = vpop.f32.mrf.mxu0
    %v3316 = vadd.f32 %v3303, %v3315
    %v3317 = vpop.f32.mrf.mxu0
    %3318 = vdwg.mxu0
    %3319 = vmatpush.bf16.msra.mxu0 %v3244
    %3320 = vmatpush.bf16.msra.mxu0 %v3242
    %3321 = vmatpush.bf16.msra.mxu0 %v3240
    %3322 = vmatpush.bf16.msra.mxu0 %v3238
    %3323 = vmatpush.bf16.msra.mxu0 %v3236
    %3324 = vmatpush.bf16.msra.mxu0 %v3234
    %3325 = vmatpush.bf16.msra.mxu0 %v3232
    %3326 = vmatpush.bf16.msra.mxu0 %v3230
    %3327 = vmatmul.bf16.gmra.mxu0 %v3099
    %v3328 = vpop.f32.mrf.mxu0
    %v3329 = vadd.f32 0.0, %v3328
    %v3330 = vpop.f32.mrf.mxu0
    %3331 = vdwg.mxu0
    %3332 = vmatpush.bf16.msra.mxu0 %v3260
    %3333 = vmatpush.bf16.msra.mxu0 %v3258
    %3334 = vmatpush.bf16.msra.mxu0 %v3256
    %3335 = vmatpush.bf16.msra.mxu0 %v3254
    %3336 = vmatpush.bf16.msra.mxu0 %v3252
    %3337 = vmatpush.bf16.msra.mxu0 %v3250
    %3338 = vmatpush.bf16.msra.mxu0 %v3248
    %3339 = vmatpush.bf16.msra.mxu0 %v3246
    %3340 = vmatmul.bf16.gmra.mxu0 %v3100
    %v3341 = vpop.f32.mrf.mxu0
    %v3342 = vadd.f32 %v3329, %v3341
    %v3343 = vpop.f32.mrf.mxu0
    %3344 = vdwg.mxu0
    %v3345 = vadd.f32 %v3097, %v3316
    %v3346 = vadd.f32 %v3098, %v3342
    %v3347 = vtanh.pop %v3345
    %v3348 = vtanh.pop %v3346
    %3349 = vst [vmem:[%s3095] sm:$0xff] %v3347
    %3350 = vst [vmem:[%s3093 + $0x8] sm:$0xff] %v3348
    %v3351 = vld [vmem:[%s168] sm:$0xff]
    %v3352 = vld [vmem:[%s168 + $0x8] sm:$0xff]
    %v3353 = vpack.c.bf16 %v3347, %v3347
    %v3354 = vpack.c.bf16 %v3348, %v3348
    %v3355 = vld [vmem:[%s5] sm:$0xff]
    %v3356 = vld [vmem:[%s5 + $0x8] sm:$0xff]
    %v3357 = vld [vmem:[%s5 + $0x10] sm:$0xff]
    %v3358 = vld [vmem:[%s5 + $0x18] sm:$0xff]
    %v3359 = vld [vmem:[%s5 + $0x20] sm:$0xff]
    %v3360 = vld [vmem:[%s5 + $0x28] sm:$0xff]
    %v3361 = vld [vmem:[%s5 + $0x30] sm:$0xff]
    %v3362 = vld [vmem:[%s5 + $0x38] sm:$0xff]
    %v3363 = vld [vmem:[%s5 + $0x40] sm:$0xff]
    %v3364 = vld [vmem:[%s5 + $0x48] sm:$0xff]
    %v3365 = vld [vmem:[%s5 + $0x50] sm:$0xff]
    %v3366 = vld [vmem:[%s5 + $0x58] sm:$0xff]
    %v3367 = vld [vmem:[%s5 + $0x60] sm:$0xff]
    %v3368 = vld [vmem:[%s5 + $0x68] sm:$0xff]
    %v3369 = vld [vmem:[%s5 + $0x70] sm:$0xff]
    %v3370 = vld [vmem:[%s5 + $0x78] sm:$0xff]
    %v3371 = vld [vmem:[%s5 + $0x80] sm:$0xff]
    %v3372 = vld [vmem:[%s5 + $0x88] sm:$0xff]
    %v3373 = vld [vmem:[%s5 + $0x90] sm:$0xff]
    %v3374 = vld [vmem:[%s5 + $0x98] sm:$0xff]
    %v3375 = vld [vmem:[%s5 + $0xa0] sm:$0xff]
    %v3376 = vld [vmem:[%s5 + $0xa8] sm:$0xff]
    %v3377 = vld [vmem:[%s5 + $0xb0] sm:$0xff]
    %v3378 = vld [vmem:[%s5 + $0xb8] sm:$0xff]
    %v3379 = vld [vmem:[%s5 + $0xc0] sm:$0xff]
    %v3380 = vld [vmem:[%s5 + $0xc8] sm:$0xff]
    %v3381 = vld [vmem:[%s5 + $0xd0] sm:$0xff]
    %v3382 = vld [vmem:[%s5 + $0xd8] sm:$0xff]
    %v3383 = vld [vmem:[%s5 + $0xe0] sm:$0xff]
    %v3384 = vld [vmem:[%s5 + $0xe8] sm:$0xff]
    %v3385 = vld [vmem:[%s5 + $0xf0] sm:$0xff]
    %v3386 = vld [vmem:[%s5 + $0xf8] sm:$0xff]
    %v3419 = vunpack.c.l.b16 %v3355
    %v3420 = vunpack.c.h.b16 %v3355
    %v3421 = vunpack.c.l.b16 %v3356
    %v3422 = vunpack.c.h.b16 %v3356
    %v3423 = vunpack.c.l.b16 %v3357
    %v3424 = vunpack.c.h.b16 %v3357
    %v3425 = vunpack.c.l.b16 %v3358
    %v3426 = vunpack.c.h.b16 %v3358
    %v3427 = vunpack.c.l.b16 %v3359
    %v3428 = vunpack.c.h.b16 %v3359
    %v3429 = vunpack.c.l.b16 %v3360
    %v3430 = vunpack.c.h.b16 %v3360
    %v3431 = vunpack.c.l.b16 %v3361
    %v3432 = vunpack.c.h.b16 %v3361
    %v3433 = vunpack.c.l.b16 %v3362
    %v3434 = vunpack.c.h.b16 %v3362
    %v3435 = vunpack.c.l.b16 %v3363
    %v3436 = vunpack.c.h.b16 %v3363
    %v3437 = vunpack.c.l.b16 %v3364
    %v3438 = vunpack.c.h.b16 %v3364
    %v3439 = vunpack.c.l.b16 %v3365
    %v3440 = vunpack.c.h.b16 %v3365
    %v3441 = vunpack.c.l.b16 %v3366
    %v3442 = vunpack.c.h.b16 %v3366
    %v3443 = vunpack.c.l.b16 %v3367
    %v3444 = vunpack.c.h.b16 %v3367
    %v3445 = vunpack.c.l.b16 %v3368
    %v3446 = vunpack.c.h.b16 %v3368
    %v3447 = vunpack.c.l.b16 %v3369
    %v3448 = vunpack.c.h.b16 %v3369
    %v3449 = vunpack.c.l.b16 %v3370
    %v3450 = vunpack.c.h.b16 %v3370
    %v3451 = vunpack.c.l.b16 %v3371
    %v3452 = vunpack.c.h.b16 %v3371
    %v3453 = vunpack.c.l.b16 %v3372
    %v3454 = vunpack.c.h.b16 %v3372
    %v3455 = vunpack.c.l.b16 %v3373
    %v3456 = vunpack.c.h.b16 %v3373
    %v3457 = vunpack.c.l.b16 %v3374
    %v3458 = vunpack.c.h.b16 %v3374
    %v3459 = vunpack.c.l.b16 %v3375
    %v3460 = vunpack.c.h.b16 %v3375
    %v3461 = vunpack.c.l.b16 %v3376
    %v3462 = vunpack.c.h.b16 %v3376
    %v3463 = vunpack.c.l.b16 %v3377
    %v3464 = vunpack.c.h.b16 %v3377
    %v3465 = vunpack.c.l.b16 %v3378
    %v3466 = vunpack.c.h.b16 %v3378
    %v3467 = vunpack.c.l.b16 %v3379
    %v3468 = vunpack.c.h.b16 %v3379
    %v3469 = vunpack.c.l.b16 %v3380
    %v3470 = vunpack.c.h.b16 %v3380
    %v3471 = vunpack.c.l.b16 %v3381
    %v3472 = vunpack.c.h.b16 %v3381
    %v3473 = vunpack.c.l.b16 %v3382
    %v3474 = vunpack.c.h.b16 %v3382
    %v3475 = vunpack.c.l.b16 %v3383
    %v3476 = vunpack.c.h.b16 %v3383
    %v3477 = vunpack.c.l.b16 %v3384
    %v3478 = vunpack.c.h.b16 %v3384
    %v3479 = vunpack.c.l.b16 %v3385
    %v3480 = vunpack.c.h.b16 %v3385
    %v3481 = vunpack.c.l.b16 %v3386
    %v3482 = vunpack.c.h.b16 %v3386
    %v3483 = vpack.c.b16 %v3421, %v3419
    %v3484 = vpack.c.b16 %v3422, %v3420
    %v3485 = vpack.c.b16 %v3425, %v3423
    %v3486 = vpack.c.b16 %v3426, %v3424
    %v3487 = vpack.c.b16 %v3429, %v3427
    %v3488 = vpack.c.b16 %v3430, %v3428
    %v3489 = vpack.c.b16 %v3433, %v3431
    %v3490 = vpack.c.b16 %v3434, %v3432
    %v3491 = vpack.c.b16 %v3437, %v3435
    %v3492 = vpack.c.b16 %v3438, %v3436
    %v3493 = vpack.c.b16 %v3441, %v3439
    %v3494 = vpack.c.b16 %v3442, %v3440
    %v3495 = vpack.c.b16 %v3445, %v3443
    %v3496 = vpack.c.b16 %v3446, %v3444
    %v3497 = vpack.c.b16 %v3449, %v3447
    %v3498 = vpack.c.b16 %v3450, %v3448
    %v3499 = vpack.c.b16 %v3453, %v3451
    %v3500 = vpack.c.b16 %v3454, %v3452
    %v3501 = vpack.c.b16 %v3457, %v3455
    %v3502 = vpack.c.b16 %v3458, %v3456
    %v3503 = vpack.c.b16 %v3461, %v3459
    %v3504 = vpack.c.b16 %v3462, %v3460
    %v3505 = vpack.c.b16 %v3465, %v3463
    %v3506 = vpack.c.b16 %v3466, %v3464
    %v3507 = vpack.c.b16 %v3469, %v3467
    %v3508 = vpack.c.b16 %v3470, %v3468
    %v3509 = vpack.c.b16 %v3473, %v3471
    %v3510 = vpack.c.b16 %v3474, %v3472
    %v3511 = vpack.c.b16 %v3477, %v3475
    %v3512 = vpack.c.b16 %v3478, %v3476
    %v3513 = vpack.c.b16 %v3481, %v3479
    %v3514 = vpack.c.b16 %v3482, %v3480
    %3547 = vmatpush.bf16.msra.mxu0 %v3497
    %3548 = vmatpush.bf16.msra.mxu0 %v3495
    %3549 = vmatpush.bf16.msra.mxu0 %v3493
    %3550 = vmatpush.bf16.msra.mxu0 %v3491
    %3551 = vmatpush.bf16.msra.mxu0 %v3489
    %3552 = vmatpush.bf16.msra.mxu0 %v3487
    %3553 = vmatpush.bf16.msra.mxu0 %v3485
    %3554 = vmatpush.bf16.msra.mxu0 %v3483
    %3555 = vmatmul.bf16.gmra.mxu0 %v3353
    %v3556 = vpop.f32.mrf.mxu0
    %v3557 = vadd.f32 0.0, %v3556
    %v3558 = vpop.f32.mrf.mxu0
    %3559 = vdwg.mxu0
    %3560 = vmatpush.bf16.msra.mxu0 %v3513
    %3561 = vmatpush.bf16.msra.mxu0 %v3511
    %3562 = vmatpush.bf16.msra.mxu0 %v3509
    %3563 = vmatpush.bf16.msra.mxu0 %v3507
    %3564 = vmatpush.bf16.msra.mxu0 %v3505
    %3565 = vmatpush.bf16.msra.mxu0 %v3503
    %3566 = vmatpush.bf16.msra.mxu0 %v3501
    %3567 = vmatpush.bf16.msra.mxu0 %v3499
    %3568 = vmatmul.bf16.gmra.mxu0 %v3354
    %v3569 = vpop.f32.mrf.mxu0
    %v3570 = vadd.f32 %v3557, %v3569
    %v3571 = vpop.f32.mrf.mxu0
    %3572 = vdwg.mxu0
    %3573 = vmatpush.bf16.msra.mxu0 %v3498
    %3574 = vmatpush.bf16.msra.mxu0 %v3496
    %3575 = vmatpush.bf16.msra.mxu0 %v3494
    %3576 = vmatpush.bf16.msra.mxu0 %v3492
    %3577 = vmatpush.bf16.msra.mxu0 %v3490
    %3578 = vmatpush.bf16.msra.mxu0 %v3488
    %3579 = vmatpush.bf16.msra.mxu0 %v3486
    %3580 = vmatpush.bf16.msra.mxu0 %v3484
    %3581 = vmatmul.bf16.gmra.mxu0 %v3353
    %v3582 = vpop.f32.mrf.mxu0
    %v3583 = vadd.f32 0.0, %v3582
    %v3584 = vpop.f32.mrf.mxu0
    %3585 = vdwg.mxu0
    %3586 = vmatpush.bf16.msra.mxu0 %v3514
    %3587 = vmatpush.bf16.msra.mxu0 %v3512
    %3588 = vmatpush.bf16.msra.mxu0 %v3510
    %3589 = vmatpush.bf16.msra.mxu0 %v3508
    %3590 = vmatpush.bf16.msra.mxu0 %v3506
    %3591 = vmatpush.bf16.msra.mxu0 %v3504
    %3592 = vmatpush.bf16.msra.mxu0 %v3502
    %3593 = vmatpush.bf16.msra.mxu0 %v3500
    %3594 = vmatmul.bf16.gmra.mxu0 %v3354
    %v3595 = vpop.f32.mrf.mxu0
    %v3596 = vadd.f32 %v3583, %v3595
    %v3597 = vpop.f32.mrf.mxu0
    %3598 = vdwg.mxu0
    %v3599 = vadd.f32 %v3351, %v3570
    %v3600 = vadd.f32 %v3352, %v3596
    %v3601 = vtanh.pop %v3599
    %v3602 = vtanh.pop %v3600
    %3603 = vst [vmem:[%s2839] sm:$0xff] %v3601
    %3604 = vst [vmem:[%s2837 + $0x8] sm:$0xff] %v3602
    %v3605 = vld [vmem:[%s170] sm:$0xff]
    %v3606 = vld [vmem:[%s170 + $0x8] sm:$0xff]
    %v3607 = vpack.c.bf16 %v3601, %v3601
    %v3608 = vpack.c.bf16 %v3602, %v3602
    %v3609 = vld [vmem:[%s5] sm:$0xff]
    %v3610 = vld [vmem:[%s5 + $0x8] sm:$0xff]
    %v3611 = vld [vmem:[%s5 + $0x10] sm:$0xff]
    %v3612 = vld [vmem:[%s5 + $0x18] sm:$0xff]
    %v3613 = vld [vmem:[%s5 + $0x20] sm:$0xff]
    %v3614 = vld [vmem:[%s5 + $0x28] sm:$0xff]
    %v3615 = vld [vmem:[%s5 + $0x30] sm:$0xff]
    %v3616 = vld [vmem:[%s5 + $0x38] sm:$0xff]
    %v3617 = vld [vmem:[%s5 + $0x40] sm:$0xff]
    %v3618 = vld [vmem:[%s5 + $0x48] sm:$0xff]
    %v3619 = vld [vmem:[%s5 + $0x50] sm:$0xff]
    %v3620 = vld [vmem:[%s5 + $0x58] sm:$0xff]
    %v3621 = vld [vmem:[%s5 + $0x60] sm:$0xff]
    %v3622 = vld [vmem:[%s5 + $0x68] sm:$0xff]
    %v3623 = vld [vmem:[%s5 + $0x70] sm:$0xff]
    %v3624 = vld [vmem:[%s5 + $0x78] sm:$0xff]
    %v3625 = vld [vmem:[%s5 + $0x80] sm:$0xff]
    %v3626 = vld [vmem:[%s5 + $0x88] sm:$0xff]
    %v3627 = vld [vmem:[%s5 + $0x90] sm:$0xff]
    %v3628 = vld [vmem:[%s5 + $0x98] sm:$0xff]
    %v3629 = vld [vmem:[%s5 + $0xa0] sm:$0xff]
    %v3630 = vld [vmem:[%s5 + $0xa8] sm:$0xff]
    %v3631 = vld [vmem:[%s5 + $0xb0] sm:$0xff]
    %v3632 = vld [vmem:[%s5 + $0xb8] sm:$0xff]
    %v3633 = vld [vmem:[%s5 + $0xc0] sm:$0xff]
    %v3634 = vld [vmem:[%s5 + $0xc8] sm:$0xff]
    %v3635 = vld [vmem:[%s5 + $0xd0] sm:$0xff]
    %v3636 = vld [vmem:[%s5 + $0xd8] sm:$0xff]
    %v3637 = vld [vmem:[%s5 + $0xe0] sm:$0xff]
    %v3638 = vld [vmem:[%s5 + $0xe8] sm:$0xff]
    %v3639 = vld [vmem:[%s5 + $0xf0] sm:$0xff]
    %v3640 = vld [vmem:[%s5 + $0xf8] sm:$0xff]
    %v3673 = vunpack.c.l.b16 %v3609
    %v3674 = vunpack.c.h.b16 %v3609
    %v3675 = vunpack.c.l.b16 %v3610
    %v3676 = vunpack.c.h.b16 %v3610
    %v3677 = vunpack.c.l.b16 %v3611
    %v3678 = vunpack.c.h.b16 %v3611
    %v3679 = vunpack.c.l.b16 %v3612
    %v3680 = vunpack.c.h.b16 %v3612
    %v3681 = vunpack.c.l.b16 %v3613
    %v3682 = vunpack.c.h.b16 %v3613
    %v3683 = vunpack.c.l.b16 %v3614
    %v3684 = vunpack.c.h.b16 %v3614
    %v3685 = vunpack.c.l.b16 %v3615
    %v3686 = vunpack.c.h.b16 %v3615
    %v3687 = vunpack.c.l.b16 %v3616
    %v3688 = vunpack.c.h.b16 %v3616
    %v3689 = vunpack.c.l.b16 %v3617
    %v3690 = vunpack.c.h.b16 %v3617
    %v3691 = vunpack.c.l.b16 %v3618
    %v3692 = vunpack.c.h.b16 %v3618
    %v3693 = vunpack.c.l.b16 %v3619
    %v3694 = vunpack.c.h.b16 %v3619
    %v3695 = vunpack.c.l.b16 %v3620
    %v3696 = vunpack.c.h.b16 %v3620
    %v3697 = vunpack.c.l.b16 %v3621
    %v3698 = vunpack.c.h.b16 %v3621
    %v3699 = vunpack.c.l.b16 %v3622
    %v3700 = vunpack.c.h.b16 %v3622
    %v3701 = vunpack.c.l.b16 %v3623
    %v3702 = vunpack.c.h.b16 %v3623
    %v3703 = vunpack.c.l.b16 %v3624
    %v3704 = vunpack.c.h.b16 %v3624
    %v3705 = vunpack.c.l.b16 %v3625
    %v3706 = vunpack.c.h.b16 %v3625
    %v3707 = vunpack.c.l.b16 %v3626
    %v3708 = vunpack.c.h.b16 %v3626
    %v3709 = vunpack.c.l.b16 %v3627
    %v3710 = vunpack.c.h.b16 %v3627
    %v3711 = vunpack.c.l.b16 %v3628
    %v3712 = vunpack.c.h.b16 %v3628
    %v3713 = vunpack.c.l.b16 %v3629
    %v3714 = vunpack.c.h.b16 %v3629
    %v3715 = vunpack.c.l.b16 %v3630
    %v3716 = vunpack.c.h.b16 %v3630
    %v3717 = vunpack.c.l.b16 %v3631
    %v3718 = vunpack.c.h.b16 %v3631
    %v3719 = vunpack.c.l.b16 %v3632
    %v3720 = vunpack.c.h.b16 %v3632
    %v3721 = vunpack.c.l.b16 %v3633
    %v3722 = vunpack.c.h.b16 %v3633
    %v3723 = vunpack.c.l.b16 %v3634
    %v3724 = vunpack.c.h.b16 %v3634
    %v3725 = vunpack.c.l.b16 %v3635
    %v3726 = vunpack.c.h.b16 %v3635
    %v3727 = vunpack.c.l.b16 %v3636
    %v3728 = vunpack.c.h.b16 %v3636
    %v3729 = vunpack.c.l.b16 %v3637
    %v3730 = vunpack.c.h.b16 %v3637
    %v3731 = vunpack.c.l.b16 %v3638
    %v3732 = vunpack.c.h.b16 %v3638
    %v3733 = vunpack.c.l.b16 %v3639
    %v3734 = vunpack.c.h.b16 %v3639
    %v3735 = vunpack.c.l.b16 %v3640
    %v3736 = vunpack.c.h.b16 %v3640
    %v3737 = vpack.c.b16 %v3675, %v3673
    %v3738 = vpack.c.b16 %v3676, %v3674
    %v3739 = vpack.c.b16 %v3679, %v3677
    %v3740 = vpack.c.b16 %v3680, %v3678
    %v3741 = vpack.c.b16 %v3683, %v3681
    %v3742 = vpack.c.b16 %v3684, %v3682
    %v3743 = vpack.c.b16 %v3687, %v3685
    %v3744 = vpack.c.b16 %v3688, %v3686
    %v3745 = vpack.c.b16 %v3691, %v3689
    %v3746 = vpack.c.b16 %v3692, %v3690
    %v3747 = vpack.c.b16 %v3695, %v3693
    %v3748 = vpack.c.b16 %v3696, %v3694
    %v3749 = vpack.c.b16 %v3699, %v3697
    %v3750 = vpack.c.b16 %v3700, %v3698
    %v3751 = vpack.c.b16 %v3703, %v3701
    %v3752 = vpack.c.b16 %v3704, %v3702
    %v3753 = vpack.c.b16 %v3707, %v3705
    %v3754 = vpack.c.b16 %v3708, %v3706
    %v3755 = vpack.c.b16 %v3711, %v3709
    %v3756 = vpack.c.b16 %v3712, %v3710
    %v3757 = vpack.c.b16 %v3715, %v3713
    %v3758 = vpack.c.b16 %v3716, %v3714
    %v3759 = vpack.c.b16 %v3719, %v3717
    %v3760 = vpack.c.b16 %v3720, %v3718
    %v3761 = vpack.c.b16 %v3723, %v3721
    %v3762 = vpack.c.b16 %v3724, %v3722
    %v3763 = vpack.c.b16 %v3727, %v3725
    %v3764 = vpack.c.b16 %v3728, %v3726
    %v3765 = vpack.c.b16 %v3731, %v3729
    %v3766 = vpack.c.b16 %v3732, %v3730
    %v3767 = vpack.c.b16 %v3735, %v3733
    %v3768 = vpack.c.b16 %v3736, %v3734
    %3801 = vmatpush.bf16.msra.mxu0 %v3751
    %3802 = vmatpush.bf16.msra.mxu0 %v3749
    %3803 = vmatpush.bf16.msra.mxu0 %v3747
    %3804 = vmatpush.bf16.msra.mxu0 %v3745
    %3805 = vmatpush.bf16.msra.mxu0 %v3743
    %3806 = vmatpush.bf16.msra.mxu0 %v3741
    %3807 = vmatpush.bf16.msra.mxu0 %v3739
    %3808 = vmatpush.bf16.msra.mxu0 %v3737
    %3809 = vmatmul.bf16.gmra.mxu0 %v3607
    %v3810 = vpop.f32.mrf.mxu0
    %v3811 = vadd.f32 0.0, %v3810
    %v3812 = vpop.f32.mrf.mxu0
    %3813 = vdwg.mxu0
    %3814 = vmatpush.bf16.msra.mxu0 %v3767
    %3815 = vmatpush.bf16.msra.mxu0 %v3765
    %3816 = vmatpush.bf16.msra.mxu0 %v3763
    %3817 = vmatpush.bf16.msra.mxu0 %v3761
    %3818 = vmatpush.bf16.msra.mxu0 %v3759
    %3819 = vmatpush.bf16.msra.mxu0 %v3757
    %3820 = vmatpush.bf16.msra.mxu0 %v3755
    %3821 = vmatpush.bf16.msra.mxu0 %v3753
    %3822 = vmatmul.bf16.gmra.mxu0 %v3608
    %v3823 = vpop.f32.mrf.mxu0
    %v3824 = vadd.f32 %v3811, %v3823
    %v3825 = vpop.f32.mrf.mxu0
    %3826 = vdwg.mxu0
    %3827 = vmatpush.bf16.msra.mxu0 %v3752
    %3828 = vmatpush.bf16.msra.mxu0 %v3750
    %3829 = vmatpush.bf16.msra.mxu0 %v3748
    %3830 = vmatpush.bf16.msra.mxu0 %v3746
    %3831 = vmatpush.bf16.msra.mxu0 %v3744
    %3832 = vmatpush.bf16.msra.mxu0 %v3742
    %3833 = vmatpush.bf16.msra.mxu0 %v3740
    %3834 = vmatpush.bf16.msra.mxu0 %v3738
    %3835 = vmatmul.bf16.gmra.mxu0 %v3607
    %v3836 = vpop.f32.mrf.mxu0
    %v3837 = vadd.f32 0.0, %v3836
    %v3838 = vpop.f32.mrf.mxu0
    %3839 = vdwg.mxu0
    %3840 = vmatpush.bf16.msra.mxu0 %v3768
    %3841 = vmatpush.bf16.msra.mxu0 %v3766
    %3842 = vmatpush.bf16.msra.mxu0 %v3764
    %3843 = vmatpush.bf16.msra.mxu0 %v3762
    %3844 = vmatpush.bf16.msra.mxu0 %v3760
    %3845 = vmatpush.bf16.msra.mxu0 %v3758
    %3846 = vmatpush.bf16.msra.mxu0 %v3756
    %3847 = vmatpush.bf16.msra.mxu0 %v3754
    %3848 = vmatmul.bf16.gmra.mxu0 %v3608
    %v3849 = vpop.f32.mrf.mxu0
    %v3850 = vadd.f32 %v3837, %v3849
    %v3851 = vpop.f32.mrf.mxu0
    %3852 = vdwg.mxu0
    %v3853 = vadd.f32 %v3605, %v3824
    %v3854 = vadd.f32 %v3606, %v3850
    %v3855 = vtanh.pop %v3853
    %v3856 = vtanh.pop %v3854
    %3857 = vst [vmem:[%s2583] sm:$0xff] %v3855
    %3858 = vst [vmem:[%s2581 + $0x8] sm:$0xff] %v3856
    %v3859 = vld [vmem:[%s172] sm:$0xff]
    %v3860 = vld [vmem:[%s172 + $0x8] sm:$0xff]
    %v3861 = vpack.c.bf16 %v3855, %v3855
    %v3862 = vpack.c.bf16 %v3856, %v3856
    %v3863 = vld [vmem:[%s5] sm:$0xff]
    %v3864 = vld [vmem:[%s5 + $0x8] sm:$0xff]
    %v3865 = vld [vmem:[%s5 + $0x10] sm:$0xff]
    %v3866 = vld [vmem:[%s5 + $0x18] sm:$0xff]
    %v3867 = vld [vmem:[%s5 + $0x20] sm:$0xff]
    %v3868 = vld [vmem:[%s5 + $0x28] sm:$0xff]
    %v3869 = vld [vmem:[%s5 + $0x30] sm:$0xff]
    %v3870 = vld [vmem:[%s5 + $0x38] sm:$0xff]
    %v3871 = vld [vmem:[%s5 + $0x40] sm:$0xff]
    %v3872 = vld [vmem:[%s5 + $0x48] sm:$0xff]
    %v3873 = vld [vmem:[%s5 + $0x50] sm:$0xff]
    %v3874 = vld [vmem:[%s5 + $0x58] sm:$0xff]
    %v3875 = vld [vmem:[%s5 + $0x60] sm:$0xff]
    %v3876 = vld [vmem:[%s5 + $0x68] sm:$0xff]
    %v3877 = vld [vmem:[%s5 + $0x70] sm:$0xff]
    %v3878 = vld [vmem:[%s5 + $0x78] sm:$0xff]
    %v3879 = vld [vmem:[%s5 + $0x80] sm:$0xff]
    %v3880 = vld [vmem:[%s5 + $0x88] sm:$0xff]
    %v3881 = vld [vmem:[%s5 + $0x90] sm:$0xff]
    %v3882 = vld [vmem:[%s5 + $0x98] sm:$0xff]
    %v3883 = vld [vmem:[%s5 + $0xa0] sm:$0xff]
    %v3884 = vld [vmem:[%s5 + $0xa8] sm:$0xff]
    %v3885 = vld [vmem:[%s5 + $0xb0] sm:$0xff]
    %v3886 = vld [vmem:[%s5 + $0xb8] sm:$0xff]
    %v3887 = vld [vmem:[%s5 + $0xc0] sm:$0xff]
    %v3888 = vld [vmem:[%s5 + $0xc8] sm:$0xff]
    %v3889 = vld [vmem:[%s5 + $0xd0] sm:$0xff]
    %v3890 = vld [vmem:[%s5 + $0xd8] sm:$0xff]
    %v3891 = vld [vmem:[%s5 + $0xe0] sm:$0xff]
    %v3892 = vld [vmem:[%s5 + $0xe8] sm:$0xff]
    %v3893 = vld [vmem:[%s5 + $0xf0] sm:$0xff]
    %v3894 = vld [vmem:[%s5 + $0xf8] sm:$0xff]
    %v3927 = vunpack.c.l.b16 %v3863
    %v3928 = vunpack.c.h.b16 %v3863
    %v3929 = vunpack.c.l.b16 %v3864
    %v3930 = vunpack.c.h.b16 %v3864
    %v3931 = vunpack.c.l.b16 %v3865
    %v3932 = vunpack.c.h.b16 %v3865
    %v3933 = vunpack.c.l.b16 %v3866
    %v3934 = vunpack.c.h.b16 %v3866
    %v3935 = vunpack.c.l.b16 %v3867
    %v3936 = vunpack.c.h.b16 %v3867
    %v3937 = vunpack.c.l.b16 %v3868
    %v3938 = vunpack.c.h.b16 %v3868
    %v3939 = vunpack.c.l.b16 %v3869
    %v3940 = vunpack.c.h.b16 %v3869
    %v3941 = vunpack.c.l.b16 %v3870
    %v3942 = vunpack.c.h.b16 %v3870
    %v3943 = vunpack.c.l.b16 %v3871
    %v3944 = vunpack.c.h.b16 %v3871
    %v3945 = vunpack.c.l.b16 %v3872
    %v3946 = vunpack.c.h.b16 %v3872
    %v3947 = vunpack.c.l.b16 %v3873
    %v3948 = vunpack.c.h.b16 %v3873
    %v3949 = vunpack.c.l.b16 %v3874
    %v3950 = vunpack.c.h.b16 %v3874
    %v3951 = vunpack.c.l.b16 %v3875
    %v3952 = vunpack.c.h.b16 %v3875
    %v3953 = vunpack.c.l.b16 %v3876
    %v3954 = vunpack.c.h.b16 %v3876
    %v3955 = vunpack.c.l.b16 %v3877
    %v3956 = vunpack.c.h.b16 %v3877
    %v3957 = vunpack.c.l.b16 %v3878
    %v3958 = vunpack.c.h.b16 %v3878
    %v3959 = vunpack.c.l.b16 %v3879
    %v3960 = vunpack.c.h.b16 %v3879
    %v3961 = vunpack.c.l.b16 %v3880
    %v3962 = vunpack.c.h.b16 %v3880
    %v3963 = vunpack.c.l.b16 %v3881
    %v3964 = vunpack.c.h.b16 %v3881
    %v3965 = vunpack.c.l.b16 %v3882
    %v3966 = vunpack.c.h.b16 %v3882
    %v3967 = vunpack.c.l.b16 %v3883
    %v3968 = vunpack.c.h.b16 %v3883
    %v3969 = vunpack.c.l.b16 %v3884
    %v3970 = vunpack.c.h.b16 %v3884
    %v3971 = vunpack.c.l.b16 %v3885
    %v3972 = vunpack.c.h.b16 %v3885
    %v3973 = vunpack.c.l.b16 %v3886
    %v3974 = vunpack.c.h.b16 %v3886
    %v3975 = vunpack.c.l.b16 %v3887
    %v3976 = vunpack.c.h.b16 %v3887
    %v3977 = vunpack.c.l.b16 %v3888
    %v3978 = vunpack.c.h.b16 %v3888
    %v3979 = vunpack.c.l.b16 %v3889
    %v3980 = vunpack.c.h.b16 %v3889
    %v3981 = vunpack.c.l.b16 %v3890
    %v3982 = vunpack.c.h.b16 %v3890
    %v3983 = vunpack.c.l.b16 %v3891
    %v3984 = vunpack.c.h.b16 %v3891
    %v3985 = vunpack.c.l.b16 %v3892
    %v3986 = vunpack.c.h.b16 %v3892
    %v3987 = vunpack.c.l.b16 %v3893
    %v3988 = vunpack.c.h.b16 %v3893
    %v3989 = vunpack.c.l.b16 %v3894
    %v3990 = vunpack.c.h.b16 %v3894
    %v3991 = vpack.c.b16 %v3929, %v3927
    %v3992 = vpack.c.b16 %v3930, %v3928
    %v3993 = vpack.c.b16 %v3933, %v3931
    %v3994 = vpack.c.b16 %v3934, %v3932
    %v3995 = vpack.c.b16 %v3937, %v3935
    %v3996 = vpack.c.b16 %v3938, %v3936
    %v3997 = vpack.c.b16 %v3941, %v3939
    %v3998 = vpack.c.b16 %v3942, %v3940
    %v3999 = vpack.c.b16 %v3945, %v3943
    %v4000 = vpack.c.b16 %v3946, %v3944
    %v4001 = vpack.c.b16 %v3949, %v3947
    %v4002 = vpack.c.b16 %v3950, %v3948
    %v4003 = vpack.c.b16 %v3953, %v3951
    %v4004 = vpack.c.b16 %v3954, %v3952
    %v4005 = vpack.c.b16 %v3957, %v3955
    %v4006 = vpack.c.b16 %v3958, %v3956
    %v4007 = vpack.c.b16 %v3961, %v3959
    %v4008 = vpack.c.b16 %v3962, %v3960
    %v4009 = vpack.c.b16 %v3965, %v3963
    %v4010 = vpack.c.b16 %v3966, %v3964
    %v4011 = vpack.c.b16 %v3969, %v3967
    %v4012 = vpack.c.b16 %v3970, %v3968
    %v4013 = vpack.c.b16 %v3973, %v3971
    %v4014 = vpack.c.b16 %v3974, %v3972
    %v4015 = vpack.c.b16 %v3977, %v3975
    %v4016 = vpack.c.b16 %v3978, %v3976
    %v4017 = vpack.c.b16 %v3981, %v3979
    %v4018 = vpack.c.b16 %v3982, %v3980
    %v4019 = vpack.c.b16 %v3985, %v3983
    %v4020 = vpack.c.b16 %v3986, %v3984
    %v4021 = vpack.c.b16 %v3989, %v3987
    %v4022 = vpack.c.b16 %v3990, %v3988
    %4055 = vmatpush.bf16.msra.mxu0 %v4005
    %4056 = vmatpush.bf16.msra.mxu0 %v4003
    %4057 = vmatpush.bf16.msra.mxu0 %v4001
    %4058 = vmatpush.bf16.msra.mxu0 %v3999
    %4059 = vmatpush.bf16.msra.mxu0 %v3997
    %4060 = vmatpush.bf16.msra.mxu0 %v3995
    %4061 = vmatpush.bf16.msra.mxu0 %v3993
    %4062 = vmatpush.bf16.msra.mxu0 %v3991
    %4063 = vmatmul.bf16.gmra.mxu0 %v3861
    %v4064 = vpop.f32.mrf.mxu0
    %v4065 = vadd.f32 0.0, %v4064
    %v4066 = vpop.f32.mrf.mxu0
    %4067 = vdwg.mxu0
    %4068 = vmatpush.bf16.msra.mxu0 %v4021
    %4069 = vmatpush.bf16.msra.mxu0 %v4019
    %4070 = vmatpush.bf16.msra.mxu0 %v4017
    %4071 = vmatpush.bf16.msra.mxu0 %v4015
    %4072 = vmatpush.bf16.msra.mxu0 %v4013
    %4073 = vmatpush.bf16.msra.mxu0 %v4011
    %4074 = vmatpush.bf16.msra.mxu0 %v4009
    %4075 = vmatpush.bf16.msra.mxu0 %v4007
    %4076 = vmatmul.bf16.gmra.mxu0 %v3862
    %v4077 = vpop.f32.mrf.mxu0
    %v4078 = vadd.f32 %v4065, %v4077
    %v4079 = vpop.f32.mrf.mxu0
    %4080 = vdwg.mxu0
    %4081 = vmatpush.bf16.msra.mxu0 %v4006
    %4082 = vmatpush.bf16.msra.mxu0 %v4004
    %4083 = vmatpush.bf16.msra.mxu0 %v4002
    %4084 = vmatpush.bf16.msra.mxu0 %v4000
    %4085 = vmatpush.bf16.msra.mxu0 %v3998
    %4086 = vmatpush.bf16.msra.mxu0 %v3996
    %4087 = vmatpush.bf16.msra.mxu0 %v3994
    %4088 = vmatpush.bf16.msra.mxu0 %v3992
    %4089 = vmatmul.bf16.gmra.mxu0 %v3861
    %v4090 = vpop.f32.mrf.mxu0
    %v4091 = vadd.f32 0.0, %v4090
    %v4092 = vpop.f32.mrf.mxu0
    %4093 = vdwg.mxu0
    %4094 = vmatpush.bf16.msra.mxu0 %v4022
    %4095 = vmatpush.bf16.msra.mxu0 %v4020
    %4096 = vmatpush.bf16.msra.mxu0 %v4018
    %4097 = vmatpush.bf16.msra.mxu0 %v4016
    %4098 = vmatpush.bf16.msra.mxu0 %v4014
    %4099 = vmatpush.bf16.msra.mxu0 %v4012
    %4100 = vmatpush.bf16.msra.mxu0 %v4010
    %4101 = vmatpush.bf16.msra.mxu0 %v4008
    %4102 = vmatmul.bf16.gmra.mxu0 %v3862
    %v4103 = vpop.f32.mrf.mxu0
    %v4104 = vadd.f32 %v4091, %v4103
    %v4105 = vpop.f32.mrf.mxu0
    %4106 = vdwg.mxu0
    %v4107 = vadd.f32 %v3859, %v4078
    %v4108 = vadd.f32 %v3860, %v4104
    %v4109 = vtanh.pop %v4107
    %v4110 = vtanh.pop %v4108
    %4111 = vst [vmem:[%s2327] sm:$0xff] %v4109
    %4112 = vst [vmem:[#allocation4 + $0x8] sm:$0xff] %v4110
    %s4113 = scalar_lea.vmem [#allocation6], 16
    %4114 = vst [vmem:[%s4113] sm:$0xff] %v4109
    %s4115 = scalar_lea.vmem [#allocation6], 24
    %4116 = vst [vmem:[%s4115] sm:$0xff] %v4110
    %v4117 = vld [vmem:[#allocation4] sm:$0xff]
    %v4118 = vld [vmem:[#allocation4 + $0x8] sm:$0xff]
    %v4119 = vld [vmem:[#allocation4 + $0x10] sm:$0xff]
    %v4120 = vld [vmem:[#allocation4 + $0x18] sm:$0xff]
    %v4121 = vld [vmem:[#allocation4 + $0x20] sm:$0xff]
    %v4122 = vld [vmem:[#allocation4 + $0x28] sm:$0xff]
    %v4123 = vld [vmem:[#allocation4 + $0x30] sm:$0xff]
    %v4124 = vld [vmem:[#allocation4 + $0x38] sm:$0xff]
    %v4125 = vld [vmem:[#allocation4 + $0x40] sm:$0xff]
    %v4126 = vld [vmem:[#allocation4 + $0x48] sm:$0xff]
    %v4127 = vld [vmem:[#allocation4 + $0x50] sm:$0xff]
    %v4128 = vld [vmem:[#allocation4 + $0x58] sm:$0xff]
    %v4129 = vld [vmem:[#allocation4 + $0x60] sm:$0xff]
    %v4130 = vld [vmem:[#allocation4 + $0x68] sm:$0xff]
    %v4131 = vld [vmem:[#allocation4 + $0x70] sm:$0xff]
    %v4132 = vld [vmem:[#allocation4 + $0x78] sm:$0xff]
    %v4133 = vpack.c.bf16 %v4119, %v4117
    %v4134 = vpack.c.bf16 %v4120, %v4118
    %v4135 = vpack.c.bf16 %v4123, %v4121
    %v4136 = vpack.c.bf16 %v4124, %v4122
    %v4137 = vpack.c.bf16 %v4127, %v4125
    %v4138 = vpack.c.bf16 %v4128, %v4126
    %v4139 = vpack.c.bf16 %v4131, %v4129
    %v4140 = vpack.c.bf16 %v4132, %v4130
    %v4141 = vld [vmem:[%s7] sm:$0xf]
    %v4142 = vld [vmem:[%s7 + $0x4] sm:$0xf]
    %v4143 = vld [vmem:[%s7 + $0x8] sm:$0xf]
    %v4144 = vld [vmem:[%s7 + $0xc] sm:$0xf]
    %v4145 = vld [vmem:[%s7 + $0x10] sm:$0xf]
    %v4146 = vld [vmem:[%s7 + $0x14] sm:$0xf]
    %v4147 = vld [vmem:[%s7 + $0x18] sm:$0xf]
    %v4148 = vld [vmem:[%s7 + $0x1c] sm:$0xf]
    %v4149 = vld [vmem:[%s7 + $0x20] sm:$0xf]
    %v4150 = vld [vmem:[%s7 + $0x24] sm:$0xf]
    %v4151 = vld [vmem:[%s7 + $0x28] sm:$0xf]
    %v4152 = vld [vmem:[%s7 + $0x2c] sm:$0xf]
    %v4153 = vld [vmem:[%s7 + $0x30] sm:$0xf]
    %v4154 = vld [vmem:[%s7 + $0x34] sm:$0xf]
    %v4155 = vld [vmem:[%s7 + $0x38] sm:$0xf]
    %v4156 = vld [vmem:[%s7 + $0x3c] sm:$0xf]
    %v4157 = vld [vmem:[%s7 + $0x40] sm:$0xf]
    %v4158 = vld [vmem:[%s7 + $0x44] sm:$0xf]
    %v4159 = vld [vmem:[%s7 + $0x48] sm:$0xf]
    %v4160 = vld [vmem:[%s7 + $0x4c] sm:$0xf]
    %v4161 = vld [vmem:[%s7 + $0x50] sm:$0xf]
    %v4162 = vld [vmem:[%s7 + $0x54] sm:$0xf]
    %v4163 = vld [vmem:[%s7 + $0x58] sm:$0xf]
    %v4164 = vld [vmem:[%s7 + $0x5c] sm:$0xf]
    %v4165 = vld [vmem:[%s7 + $0x60] sm:$0xf]
    %v4166 = vld [vmem:[%s7 + $0x64] sm:$0xf]
    %v4167 = vld [vmem:[%s7 + $0x68] sm:$0xf]
    %v4168 = vld [vmem:[%s7 + $0x6c] sm:$0xf]
    %v4169 = vld [vmem:[%s7 + $0x70] sm:$0xf]
    %v4170 = vld [vmem:[%s7 + $0x74] sm:$0xf]
    %v4171 = vld [vmem:[%s7 + $0x78] sm:$0xf]
    %v4172 = vld [vmem:[%s7 + $0x7c] sm:$0xf]
    %v4173 = vld [vmem:[%s8] sm:$0x1]
    %v4175 = vperm.slane %v4173, 0
    %v4209 = vunpack.c.l.b16 %v4141
    %v4210 = vunpack.c.l.b16 %v4142
    %v4211 = vunpack.c.l.b16 %v4143
    %v4212 = vunpack.c.l.b16 %v4144
    %v4213 = vunpack.c.l.b16 %v4145
    %v4214 = vunpack.c.l.b16 %v4146
    %v4215 = vunpack.c.l.b16 %v4147
    %v4216 = vunpack.c.l.b16 %v4148
    %v4217 = vunpack.c.l.b16 %v4149
    %v4218 = vunpack.c.l.b16 %v4150
    %v4219 = vunpack.c.l.b16 %v4151
    %v4220 = vunpack.c.l.b16 %v4152
    %v4221 = vunpack.c.l.b16 %v4153
    %v4222 = vunpack.c.l.b16 %v4154
    %v4223 = vunpack.c.l.b16 %v4155
    %v4224 = vunpack.c.l.b16 %v4156
    %v4225 = vunpack.c.l.b16 %v4157
    %v4226 = vunpack.c.l.b16 %v4158
    %v4227 = vunpack.c.l.b16 %v4159
    %v4228 = vunpack.c.l.b16 %v4160
    %v4229 = vunpack.c.l.b16 %v4161
    %v4230 = vunpack.c.l.b16 %v4162
    %v4231 = vunpack.c.l.b16 %v4163
    %v4232 = vunpack.c.l.b16 %v4164
    %v4233 = vunpack.c.l.b16 %v4165
    %v4234 = vunpack.c.l.b16 %v4166
    %v4235 = vunpack.c.l.b16 %v4167
    %v4236 = vunpack.c.l.b16 %v4168
    %v4237 = vunpack.c.l.b16 %v4169
    %v4238 = vunpack.c.l.b16 %v4170
    %v4239 = vunpack.c.l.b16 %v4171
    %v4240 = vunpack.c.l.b16 %v4172
    %v4241 = vpack.c.b16 %v4210, %v4209
    %v4242 = vpack.c.b16 %v4212, %v4211
    %v4243 = vpack.c.b16 %v4214, %v4213
    %v4244 = vpack.c.b16 %v4216, %v4215
    %v4245 = vpack.c.b16 %v4218, %v4217
    %v4246 = vpack.c.b16 %v4220, %v4219
    %v4247 = vpack.c.b16 %v4222, %v4221
    %v4248 = vpack.c.b16 %v4224, %v4223
    %v4249 = vpack.c.b16 %v4226, %v4225
    %v4250 = vpack.c.b16 %v4228, %v4227
    %v4251 = vpack.c.b16 %v4230, %v4229
    %v4252 = vpack.c.b16 %v4232, %v4231
    %v4253 = vpack.c.b16 %v4234, %v4233
    %v4254 = vpack.c.b16 %v4236, %v4235
    %v4255 = vpack.c.b16 %v4238, %v4237
    %v4256 = vpack.c.b16 %v4240, %v4239
    %4273 = vmatpush.bf16.msra.mxu0 %v4248
    %4274 = vmatpush.bf16.msra.mxu0 %v4247
    %4275 = vmatpush.bf16.msra.mxu0 %v4246
    %4276 = vmatpush.bf16.msra.mxu0 %v4245
    %4277 = vmatpush.bf16.msra.mxu0 %v4244
    %4278 = vmatpush.bf16.msra.mxu0 %v4243
    %4279 = vmatpush.bf16.msra.mxu0 %v4242
    %4280 = vmatpush.bf16.msra.mxu0 %v4241
    %4281 = vmatmul.bf16.gmra.mxu0 %v4133
    %v4282 = vpop.f32.mrf.mxu0
    %v4283 = vadd.f32 %v4175, %v4282
    %v4284 = vpop.f32.mrf.mxu0
    %v4285 = vadd.f32 %v4175, %v4284
    %4286 = vmatmul.bf16.gmra.mxu0 %v4135
    %v4287 = vpop.f32.mrf.mxu0
    %v4288 = vadd.f32 %v4175, %v4287
    %v4289 = vpop.f32.mrf.mxu0
    %v4290 = vadd.f32 %v4175, %v4289
    %4291 = vmatmul.bf16.gmra.mxu0 %v4137
    %v4292 = vpop.f32.mrf.mxu0
    %v4293 = vadd.f32 %v4175, %v4292
    %v4294 = vpop.f32.mrf.mxu0
    %v4295 = vadd.f32 %v4175, %v4294
    %4296 = vmatmul.bf16.gmra.mxu0 %v4139
    %v4297 = vpop.f32.mrf.mxu0
    %v4298 = vadd.f32 %v4175, %v4297
    %v4299 = vpop.f32.mrf.mxu0
    %v4300 = vadd.f32 %v4175, %v4299
    %4301 = vdwg.mxu0
    %4302 = vmatpush.bf16.msra.mxu0 %v4256
    %4303 = vmatpush.bf16.msra.mxu0 %v4255
    %4304 = vmatpush.bf16.msra.mxu0 %v4254
    %4305 = vmatpush.bf16.msra.mxu0 %v4253
    %4306 = vmatpush.bf16.msra.mxu0 %v4252
    %4307 = vmatpush.bf16.msra.mxu0 %v4251
    %4308 = vmatpush.bf16.msra.mxu0 %v4250
    %4309 = vmatpush.bf16.msra.mxu0 %v4249
    %4310 = vmatmul.bf16.gmra.mxu0 %v4134
    %v4311 = vpop.f32.mrf.mxu0
    %v4312 = vadd.f32 %v4283, %v4311
    %v4313 = vpop.f32.mrf.mxu0
    %v4314 = vadd.f32 %v4285, %v4313
    %4315 = vmatmul.bf16.gmra.mxu0 %v4136
    %v4316 = vpop.f32.mrf.mxu0
    %v4317 = vadd.f32 %v4288, %v4316
    %v4318 = vpop.f32.mrf.mxu0
    %v4319 = vadd.f32 %v4290, %v4318
    %4320 = vmatmul.bf16.gmra.mxu0 %v4138
    %v4321 = vpop.f32.mrf.mxu0
    %v4322 = vadd.f32 %v4293, %v4321
    %v4323 = vpop.f32.mrf.mxu0
    %v4324 = vadd.f32 %v4295, %v4323
    %4325 = vmatmul.bf16.gmra.mxu0 %v4140
    %v4326 = vpop.f32.mrf.mxu0
    %v4327 = vadd.f32 %v4298, %v4326
    %v4328 = vpop.f32.mrf.mxu0
    %v4329 = vadd.f32 %v4300, %v4328
    %4330 = vdwg.mxu0
    %v4331 = vmax.f32 %v4312, 0.0
    %v4332 = vmax.f32 %v4314, 0.0
    %v4333 = vmax.f32 %v4317, 0.0
    %v4334 = vmax.f32 %v4319, 0.0
    %v4335 = vmax.f32 %v4322, 0.0
    %v4336 = vmax.f32 %v4324, 0.0
    %v4337 = vmax.f32 %v4327, 0.0
    %v4338 = vmax.f32 %v4329, 0.0
    %v4339 = vpack.c.bf16 %v4332, %v4331
    %v4340 = vpack.c.bf16 %v4334, %v4333
    %v4341 = vpack.c.bf16 %v4336, %v4335
    %v4342 = vpack.c.bf16 %v4338, %v4337
    %v4343 = vld [vmem:[%s9] sm:$0xf]
    %v4344 = vld [vmem:[%s9 + $0x4] sm:$0xf]
    %v4345 = vld [vmem:[%s9 + $0x8] sm:$0xf]
    %v4346 = vld [vmem:[%s9 + $0xc] sm:$0xf]
    %v4347 = vld [vmem:[%s9 + $0x10] sm:$0xf]
    %v4348 = vld [vmem:[%s9 + $0x14] sm:$0xf]
    %v4349 = vld [vmem:[%s9 + $0x18] sm:$0xf]
    %v4350 = vld [vmem:[%s9 + $0x1c] sm:$0xf]
    %v4351 = vld [vmem:[%s9 + $0x20] sm:$0xf]
    %v4352 = vld [vmem:[%s9 + $0x24] sm:$0xf]
    %v4353 = vld [vmem:[%s9 + $0x28] sm:$0xf]
    %v4354 = vld [vmem:[%s9 + $0x2c] sm:$0xf]
    %v4355 = vld [vmem:[%s9 + $0x30] sm:$0xf]
    %v4356 = vld [vmem:[%s9 + $0x34] sm:$0xf]
    %v4357 = vld [vmem:[%s9 + $0x38] sm:$0xf]
    %v4358 = vld [vmem:[%s9 + $0x3c] sm:$0xf]
    %v4359 = vld [vmem:[%s10] sm:$0x1]
    %v4361 = vperm.slane %v4359, 0
    %v4379 = vunpack.c.l.b16 %v4343
    %v4380 = vunpack.c.l.b16 %v4344
    %v4381 = vunpack.c.l.b16 %v4345
    %v4382 = vunpack.c.l.b16 %v4346
    %v4383 = vunpack.c.l.b16 %v4347
    %v4384 = vunpack.c.l.b16 %v4348
    %v4385 = vunpack.c.l.b16 %v4349
    %v4386 = vunpack.c.l.b16 %v4350
    %v4387 = vunpack.c.l.b16 %v4351
    %v4388 = vunpack.c.l.b16 %v4352
    %v4389 = vunpack.c.l.b16 %v4353
    %v4390 = vunpack.c.l.b16 %v4354
    %v4391 = vunpack.c.l.b16 %v4355
    %v4392 = vunpack.c.l.b16 %v4356
    %v4393 = vunpack.c.l.b16 %v4357
    %v4394 = vunpack.c.l.b16 %v4358
    %v4395 = vpack.c.b16 %v4380, %v4379
    %v4396 = vpack.c.b16 %v4382, %v4381
    %v4397 = vpack.c.b16 %v4384, %v4383
    %v4398 = vpack.c.b16 %v4386, %v4385
    %v4399 = vpack.c.b16 %v4388, %v4387
    %v4400 = vpack.c.b16 %v4390, %v4389
    %v4401 = vpack.c.b16 %v4392, %v4391
    %v4402 = vpack.c.b16 %v4394, %v4393
    %4411 = vmatpush.bf16.msra.mxu0 %v4402
    %4412 = vmatpush.bf16.msra.mxu0 %v4401
    %4413 = vmatpush.bf16.msra.mxu0 %v4400
    %4414 = vmatpush.bf16.msra.mxu0 %v4399
    %4415 = vmatpush.bf16.msra.mxu0 %v4398
    %4416 = vmatpush.bf16.msra.mxu0 %v4397
    %4417 = vmatpush.bf16.msra.mxu0 %v4396
    %4418 = vmatpush.bf16.msra.mxu0 %v4395
    %4419 = vmatmul.bf16.gmra.mxu0 %v4339
    %v4420 = vpop.f32.mrf.mxu0
    %v4421 = vadd.f32 %v4361, %v4420
    %v4422 = vpop.f32.mrf.mxu0
    %v4423 = vadd.f32 %v4361, %v4422
    %4424 = vmatmul.bf16.gmra.mxu0 %v4340
    %v4425 = vpop.f32.mrf.mxu0
    %v4426 = vadd.f32 %v4361, %v4425
    %v4427 = vpop.f32.mrf.mxu0
    %v4428 = vadd.f32 %v4361, %v4427
    %4429 = vmatmul.bf16.gmra.mxu0 %v4341
    %v4430 = vpop.f32.mrf.mxu0
    %v4431 = vadd.f32 %v4361, %v4430
    %v4432 = vpop.f32.mrf.mxu0
    %v4433 = vadd.f32 %v4361, %v4432
    %4434 = vmatmul.bf16.gmra.mxu0 %v4342
    %v4435 = vpop.f32.mrf.mxu0
    %v4436 = vadd.f32 %v4361, %v4435
    %v4437 = vpop.f32.mrf.mxu0
    %v4438 = vadd.f32 %v4361, %v4437
    %4439 = vdwg.mxu0
    %v4440 = vmax.f32 %v4421, 0.0
    %v4441 = vmax.f32 %v4423, 0.0
    %v4442 = vmax.f32 %v4426, 0.0
    %v4443 = vmax.f32 %v4428, 0.0
    %v4444 = vmax.f32 %v4431, 0.0
    %v4445 = vmax.f32 %v4433, 0.0
    %v4446 = vmax.f32 %v4436, 0.0
    %v4447 = vmax.f32 %v4438, 0.0
    %v4448 = vpack.c.bf16 %v4441, %v4440
    %v4449 = vpack.c.bf16 %v4443, %v4442
    %v4450 = vpack.c.bf16 %v4445, %v4444
    %v4451 = vpack.c.bf16 %v4447, %v4446
    %v4452 = vld [vmem:[%s11] sm:$0xf]
    %v4453 = vld [vmem:[%s11 + $0x4] sm:$0xf]
    %v4454 = vld [vmem:[%s11 + $0x8] sm:$0xf]
    %v4455 = vld [vmem:[%s11 + $0xc] sm:$0xf]
    %v4456 = vld [vmem:[%s11 + $0x10] sm:$0xf]
    %v4457 = vld [vmem:[%s11 + $0x14] sm:$0xf]
    %v4458 = vld [vmem:[%s11 + $0x18] sm:$0xf]
    %v4459 = vld [vmem:[%s11 + $0x1c] sm:$0xf]
    %v4460 = vld [vmem:[%s11 + $0x20] sm:$0xf]
    %v4461 = vld [vmem:[%s11 + $0x24] sm:$0xf]
    %v4462 = vld [vmem:[%s11 + $0x28] sm:$0xf]
    %v4463 = vld [vmem:[%s11 + $0x2c] sm:$0xf]
    %v4464 = vld [vmem:[%s11 + $0x30] sm:$0xf]
    %v4465 = vld [vmem:[%s11 + $0x34] sm:$0xf]
    %v4466 = vld [vmem:[%s11 + $0x38] sm:$0xf]
    %v4467 = vld [vmem:[%s11 + $0x3c] sm:$0xf]
    %v4468 = vld [vmem:[%s12] sm:$0x1]
    %v4470 = vperm.slane %v4468, 0
    %v4488 = vunpack.c.l.b16 %v4452
    %v4489 = vunpack.c.l.b16 %v4453
    %v4490 = vunpack.c.l.b16 %v4454
    %v4491 = vunpack.c.l.b16 %v4455
    %v4492 = vunpack.c.l.b16 %v4456
    %v4493 = vunpack.c.l.b16 %v4457
    %v4494 = vunpack.c.l.b16 %v4458
    %v4495 = vunpack.c.l.b16 %v4459
    %v4496 = vunpack.c.l.b16 %v4460
    %v4497 = vunpack.c.l.b16 %v4461
    %v4498 = vunpack.c.l.b16 %v4462
    %v4499 = vunpack.c.l.b16 %v4463
    %v4500 = vunpack.c.l.b16 %v4464
    %v4501 = vunpack.c.l.b16 %v4465
    %v4502 = vunpack.c.l.b16 %v4466
    %v4503 = vunpack.c.l.b16 %v4467
    %v4504 = vpack.c.b16 %v4489, %v4488
    %v4505 = vpack.c.b16 %v4491, %v4490
    %v4506 = vpack.c.b16 %v4493, %v4492
    %v4507 = vpack.c.b16 %v4495, %v4494
    %v4508 = vpack.c.b16 %v4497, %v4496
    %v4509 = vpack.c.b16 %v4499, %v4498
    %v4510 = vpack.c.b16 %v4501, %v4500
    %v4511 = vpack.c.b16 %v4503, %v4502
    %4520 = vmatpush.bf16.msra.mxu0 %v4511
    %4521 = vmatpush.bf16.msra.mxu0 %v4510
    %4522 = vmatpush.bf16.msra.mxu0 %v4509
    %4523 = vmatpush.bf16.msra.mxu0 %v4508
    %4524 = vmatpush.bf16.msra.mxu0 %v4507
    %4525 = vmatpush.bf16.msra.mxu0 %v4506
    %4526 = vmatpush.bf16.msra.mxu0 %v4505
    %4527 = vmatpush.bf16.msra.mxu0 %v4504
    %4528 = vmatmul.bf16.gmra.mxu0 %v4448
    %v4529 = vpop.f32.mrf.mxu0
    %v4530 = vadd.f32 %v4470, %v4529
    %v4531 = vpop.f32.mrf.mxu0
    %v4532 = vadd.f32 %v4470, %v4531
    %4533 = vmatmul.bf16.gmra.mxu0 %v4449
    %v4534 = vpop.f32.mrf.mxu0
    %v4535 = vadd.f32 %v4470, %v4534
    %v4536 = vpop.f32.mrf.mxu0
    %v4537 = vadd.f32 %v4470, %v4536
    %4538 = vmatmul.bf16.gmra.mxu0 %v4450
    %v4539 = vpop.f32.mrf.mxu0
    %v4540 = vadd.f32 %v4470, %v4539
    %v4541 = vpop.f32.mrf.mxu0
    %v4542 = vadd.f32 %v4470, %v4541
    %4543 = vmatmul.bf16.gmra.mxu0 %v4451
    %v4544 = vpop.f32.mrf.mxu0
    %v4545 = vadd.f32 %v4470, %v4544
    %v4546 = vpop.f32.mrf.mxu0
    %v4547 = vadd.f32 %v4470, %v4546
    %4548 = vdwg.mxu0
    %4549 = vst [vmem:[%s15] sm:$0xff] %v4530
    %4550 = vst [vmem:[%s15 + $0x8] sm:$0xff] %v4532
    %4551 = vst [vmem:[%s15 + $0x10] sm:$0xff] %v4535
    %4552 = vst [vmem:[%s15 + $0x18] sm:$0xff] %v4537
    %4553 = vst [vmem:[%s15 + $0x20] sm:$0xff] %v4540
    %4554 = vst [vmem:[%s15 + $0x28] sm:$0xff] %v4542
    %4555 = vst [vmem:[%s15 + $0x30] sm:$0xff] %v4545
    %4556 = vst [vmem:[%s15 + $0x38] sm:$0xff] %v4547
    // Predicated region
    $region54: #{rnn_with_finish_and_mem_forward.1} parent=1 // pred_check
      _
    $region55: #{rnn_with_finish_and_mem_forward.1} parent=1 // pred_check_branch
      %4558 = sbr.rel (0) target = $region57
    $region56: #{rnn_with_finish_and_mem_forward.1} parent=1 // pred_region
      %4560 = vsyncadd [#allocation5], 0
      %s4561 = sshll.u32 [#allocation4], 4
      %s4562 = int_to_ptr.vmem [resolvable:$true] %s4561
      %s4563 = sshll.u32 %s13, 4
      %s4564 = int_to_ptr.hbm [resolvable:$true] %s4563
      %4569 = dma.vmem_to_hbm [thread:$0]  %s4562, 2048, %s4564, [#allocation5], 256, 256, 16
    $region57: #{rnn_with_finish_and_mem_forward.1} parent=1 // pred_fallthru
      _
    // Predicated region
    $region58: #{rnn_with_finish_and_mem_forward.1} parent=1 // pred_check
      _
    $region59: #{rnn_with_finish_and_mem_forward.1} parent=1 // pred_check_branch
      %4571 = sbr.rel (0) target = $region61
    $region60: #{rnn_with_finish_and_mem_forward.1} parent=1 // pred_region
      %4573 = vsyncadd [#allocation7], 0
      %s4574 = sshll.u32 [#allocation6], 4
      %s4575 = int_to_ptr.vmem [resolvable:$true] %s4574
      %s4576 = sshll.u32 %s14, 4
      %s4577 = int_to_ptr.hbm [resolvable:$true] %s4576
      %4582 = dma.vmem_to_hbm [thread:$0]  %s4575, 512, %s4577, [#allocation7], 128, 128, 8
    $region61: #{rnn_with_finish_and_mem_forward.1} parent=1 // pred_fallthru
      _
    // Predicated region
    $region62: #{rnn_with_finish_and_mem_forward.1} parent=1 // pred_check
      _
    $region63: #{rnn_with_finish_and_mem_forward.1} parent=1 // pred_check_branch
      %4584 = sbr.rel (0) target = $region65
    $region64: #{rnn_with_finish_and_mem_forward.1} parent=1 // pred_region
      _
    $region65: #{rnn_with_finish_and_mem_forward.1} parent=1 // pred_fallthru
      _
    // Predicated region
    $region66: #{rnn_with_finish_and_mem_forward.1} parent=1 // pred_check
      _
    $region67: #{rnn_with_finish_and_mem_forward.1} parent=1 // pred_check_branch
      %4586 = sbr.rel (0) target = $region69
    $region68: #{rnn_with_finish_and_mem_forward.1} parent=1 // pred_region
      %4588 = dma.done [#allocation5], 2048
    $region69: #{rnn_with_finish_and_mem_forward.1} parent=1 // pred_fallthru
      _
    // Predicated region
    $region70: #{rnn_with_finish_and_mem_forward.1} parent=1 // pred_check
      _
    $region71: #{rnn_with_finish_and_mem_forward.1} parent=1 // pred_check_branch
      %4590 = sbr.rel (0) target = $region73
    $region72: #{rnn_with_finish_and_mem_forward.1} parent=1 // pred_region
      %4592 = dma.done [#allocation7], 512
    $region73: #{rnn_with_finish_and_mem_forward.1} parent=1 // pred_fallthru
      _
    // Predicated region
    $region74: #{rnn_with_finish_and_mem_forward.1} parent=1 // pred_check
      _
    $region75: #{rnn_with_finish_and_mem_forward.1} parent=1 // pred_check_branch
      %4594 = sbr.rel (0) target = $region77
    $region76: #{rnn_with_finish_and_mem_forward.1} parent=1 // pred_region
      _
    $region77: #{rnn_with_finish_and_mem_forward.1} parent=1 // pred_fallthru
      _
    %4595 = vsyncpa [#allocation5], 1
    %4596 = vsyncpa [#allocation7], 1

</llo_original>
